<compile_context>
chip_gen: v7x
topology: tpu7x:2x2x1
jax: 0.10.0
libtpu: 0.0.40
codegen_flags: <defaults>
</compile_context>

<pallas_src>
import functools

import jax
import jax.numpy as jnp
import numpy as np
from jax import lax
from jax.experimental import pallas as pl
from jax.experimental.pallas import tpu as pltpu

LEAKY_SLOPE = 0.2
BN_EPS = 1e-5


# ----------------------------------------------------------------------------
# Fused whole-network kernel
# ----------------------------------------------------------------------------
def _fused_disc_kernel(*refs, cfg, n_batch):
    """refs = (x_ref, <per-layer refs...>, o_ref)

      x_ref : [N, L0] f32           lane-flattened input (c_in0 == 1)
      per layer (in order):
        w_eff : [l_in*c_in, l_out*c_out] bf16  (conv folded into one operator)
        if use_bn: r [l_out*c_out, c_out] f32, e [c_out, l_out*c_out] f32,
                   gamma [1, c_out] f32, beta [1, c_out] f32
        else:      bias_flat [1, l_out*c_out] f32
      o_ref : [N, l_f*c_f] f32
    cfg: static tuple of (l_out, c_out, use_bn, act) per layer.
    """
    x_ref = refs[0]
    o_ref = refs[-1]
    params = refs[1:-1]

    acts = x_ref[...]                                     # [N, lc] f32, lane-dense
    p = 0
    for (l_out, c_out, use_bn, act) in cfg:
        w_eff = params[p][...]                            # bf16 [lc_in, lc_out]
        p += 1
        # One lane-dense MXU matmul = whole strided conv for the whole batch.
        y = jnp.dot(acts.astype(jnp.bfloat16), w_eff,
                    preferred_element_type=jnp.float32)   # [N, lc_out] f32

        if use_bn:
            r_mat = params[p][...]                        # [lc_out, c_out] 0/1
            e_mat = params[p + 1][...]                    # [c_out, lc_out] 0/1
            gamma = params[p + 2][...]                    # [1, c_out]
            beta = params[p + 3][...]                     # [1, c_out]
            p += 4
            # PyTorch training-mode BatchNorm1d: biased stats over (N, L).
            # Conv bias is exactly absorbed by the mean subtraction (never added).
            inv_cnt = 1.0 / float(n_batch * l_out)
            sum_y = jnp.sum(y, axis=0, keepdims=True)             # [1, lc_out]
            sum_y2 = jnp.sum(y * y, axis=0, keepdims=True)
            s1 = jnp.dot(sum_y, r_mat, preferred_element_type=jnp.float32)   # [1, c]
            s2 = jnp.dot(sum_y2, r_mat, preferred_element_type=jnp.float32)
            mean = s1 * inv_cnt
            var = jnp.maximum(s2 * inv_cnt - mean * mean, 0.0)    # clamp cancellation
            scale = gamma * lax.rsqrt(var + BN_EPS)               # [1, c]
            shift = beta - mean * scale
            # Expand per-channel scale/shift back to the lane-flattened layout.
            scale_f = jnp.dot(scale, e_mat, preferred_element_type=jnp.float32)
            shift_f = jnp.dot(shift, e_mat, preferred_element_type=jnp.float32)
            y = y * scale_f + shift_f
        else:
            bias_flat = params[p][...]                    # [1, lc_out]
            p += 1
            y = y + bias_flat

        if act == "leaky":
            y = jnp.maximum(y, LEAKY_SLOPE * y)
        elif act == "sigmoid":
            y = jax.nn.sigmoid(y)
        acts = y

    o_ref[...] = acts.astype(o_ref.dtype)


# ----------------------------------------------------------------------------
# Host-side precompute: fold each conv into a dense lane-flattened operator.
# ----------------------------------------------------------------------------
def _conv_out_len(l_in, k, stride, pad):
    return (l_in + 2 * pad - k) // stride + 1


def _build_operators(params, l0):
    """Returns (kernel_inputs, cfg). Flattened layout is l-major, c-minor."""
    inputs, cfg = [], []
    l_in, c_in = l0, 1
    for lp in params:
        w = np.asarray(lp["w"], np.float32)               # [c_out, c_in, k]
        c_out, _, k = w.shape
        s, pad = lp["stride"], lp["padding"]
        l_out = _conv_out_len(l_in, k, s, pad)

        # W_eff[l*c_in + ci, m*c_out + co] = w[co, ci, t] where t = s*m + t - pad hits l.
        w_eff = np.zeros((l_in * c_in, l_out * c_out), np.float32)
        for m in range(l_out):
            for t in range(k):
                j = s * m + t - pad
                if 0 <= j < l_in:
                    w_eff[j * c_in:(j + 1) * c_in,
                          m * c_out:(m + 1) * c_out] = w[:, :, t].T
        # bf16 MXU operand (accumulation stays f32 inside the kernel).
        inputs.append(jnp.asarray(w_eff, jnp.bfloat16))

        if lp["use_bn"]:
            r = np.zeros((l_out * c_out, c_out), np.float32)
            r[np.arange(l_out * c_out), np.arange(l_out * c_out) % c_out] = 1.0
            inputs.append(jnp.asarray(r))                          # reduce  [lc, c]
            inputs.append(jnp.asarray(np.ascontiguousarray(r.T)))  # expand  [c, lc]
            inputs.append(jnp.asarray(lp["gamma"], jnp.float32).reshape(1, c_out))
            inputs.append(jnp.asarray(lp["beta"], jnp.float32).reshape(1, c_out))
        else:
            b_flat = np.tile(np.asarray(lp["b"], np.float32).reshape(1, c_out),
                             (1, l_out))                           # [1, lc_out]
            inputs.append(jnp.asarray(b_flat))

        cfg.append((l_out, c_out, lp["use_bn"], lp["act"]))
        l_in, c_in = l_out, c_out
    return inputs, cfg


def discriminator_forward(x, params):
    """x: [N, 1, L] float32 -> flattened sigmoid outputs (like x.view(-1))."""
    n_batch, c0, l0 = x.shape
    assert c0 == 1
    x_flat = x.reshape(n_batch, l0).astype(jnp.float32)   # drop the size-1 channel dim

    op_inputs, cfg = _build_operators(params, l0)
    l_f, c_f = cfg[-1][0], cfg[-1][1]
    assert c_f == 1, "flat-output ordering relies on a single output channel"

    inputs = [x_flat] + op_inputs

    # Advisory cost estimate for XLA's scheduler.
    flops, transcendentals = 0, 0
    l_in, c_in = l0, 1
    for (l_out, c_out, use_bn, act) in cfg:
        flops += 2 * n_batch * (l_in * c_in) * (l_out * c_out)
        if use_bn:
            flops += 2 * 2 * (l_out * c_out) * c_out       # s1/s2 reduce matmuls
            flops += 2 * 2 * c_out * (l_out * c_out)       # scale/shift expand
            transcendentals += c_out                        # rsqrt
        if act == "sigmoid":
            transcendentals += n_batch * l_out * c_out
        l_in, c_in = l_out, c_out
    bytes_accessed = sum(int(a.size) * a.dtype.itemsize for a in inputs)
    bytes_accessed += n_batch * l_f * c_f * 4

    vmem = pltpu.MemorySpace.VMEM
    kernel = functools.partial(_fused_disc_kernel, cfg=tuple(cfg), n_batch=n_batch)
    out = pl.pallas_call(
        kernel,
        out_shape=jax.ShapeDtypeStruct((n_batch, l_f * c_f), jnp.float32),
        in_specs=[pl.BlockSpec(memory_space=vmem)] * len(inputs),
        out_specs=pl.BlockSpec(memory_space=vmem),
        compiler_params=pltpu.CompilerParams(vmem_limit_bytes=32 * 1024 * 1024),
        cost_estimate=pl.CostEstimate(flops=flops,
                                      transcendentals=transcendentals,
                                      bytes_accessed=bytes_accessed),
    )(*inputs)
    # x.view(-1, 1).squeeze(1): c_f == 1, so row order == PyTorch flatten.
    return out.reshape(-1)


# ----------------------------------------------------------------------------
# Parameter construction (deterministic, synthetic)
# ----------------------------------------------------------------------------
def make_params(key, filters):
    f = filters
    cfg = [
        (1,       f,       7, 2, 1, False, "leaky"),
        (f,       f * 2,   5, 2, 1, True,  "leaky"),
        (f * 2,   f * 4,   4, 2, 1, True,  "leaky"),
        (f * 4,   f * 8,   3, 2, 1, True,  "leaky"),
        (f * 8,   f * 16,  3, 2, 1, True,  "leaky"),
        (f * 16,  f * 32,  3, 2, 1, True,  "leaky"),
        (f * 32,  f * 64,  3, 2, 1, True,  "leaky"),
        (f * 64,  1,       3, 2, 1, False, "sigmoid"),
    ]
    params = []
    for (cin, cout, k, s, p, bn, act) in cfg:
        key, kw, kb, kg, kbeta = jax.random.split(key, 5)
        w = 0.05 * jax.random.normal(kw, (cout, cin, k), jnp.float32)
        b = 0.05 * jax.random.normal(kb, (cout,), jnp.float32)
        g = 1.0 + 0.05 * jax.random.normal(kg, (cout,), jnp.float32)
        beta = 0.05 * jax.random.normal(kbeta, (cout,), jnp.float32)
        params.append(dict(w=w, b=b, gamma=g, beta=beta,
                           stride=s, padding=p, use_bn=bn, act=act))
    return params


# ----------------------------------------------------------------------------
# Pure-JAX f32 reference (lax.conv) for correctness check
# ----------------------------------------------------------------------------
def reference_forward(x, params):
    for lp in params:
        y = lax.conv_general_dilated(
            x, lp["w"], window_strides=(lp["stride"],),
            padding=[(lp["padding"], lp["padding"])],
            dimension_numbers=("NCH", "OIH", "NCH"))
        y = y + lp["b"][None, :, None]
        if lp["use_bn"]:
            mean = jnp.mean(y, axis=(0, 2), keepdims=True)
            var = jnp.mean((y - mean) ** 2, axis=(0, 2), keepdims=True)
            y = (y - mean) / jnp.sqrt(var + BN_EPS)
            y = y * lp["gamma"][None, :, None] + lp["beta"][None, :, None]
        if lp["act"] == "leaky":
            y = jnp.where(y >= 0, y, LEAKY_SLOPE * y)
        elif lp["act"] == "sigmoid":
            y = jax.nn.sigmoid(y)
        x = y
    return x.reshape(-1)


if __name__ == "__main__":
    filters = 2
    batch = 2
    length = 256          # survives the 8 stride-2 convs -> L_final = 1

    key = jax.random.PRNGKey(0)
    key, kx = jax.random.split(key)
    x = jax.random.normal(kx, (batch, 1, length), jnp.float32)

    params = make_params(key, filters)

    out = jax.block_until_ready(discriminator_forward(x, params))
    ref = jax.block_until_ready(reference_forward(x, params))
    # bf16 MXU operands (per the perf review) vs. the f32 reference: sigmoid
    # outputs typically agree to ~1e-2, so use a 2e-2 tolerance.
    np.testing.assert_allclose(np.asarray(out), np.asarray(ref),
                               rtol=2e-2, atol=2e-2)

    print("KERNEL_OK")
</pallas_src>

<mosaic_0001>
module attributes {stable_mosaic.version = 11 : i64} {
  func.func @_fused_disc_kernel(%arg0: memref<2x256xf32, #tpu.memory_space<vmem>>, %arg1: memref<256x252xbf16, #tpu.memory_space<vmem>>, %arg2: memref<1x252xf32, #tpu.memory_space<vmem>>, %arg3: memref<252x248xbf16, #tpu.memory_space<vmem>>, %arg4: memref<248x4xf32, #tpu.memory_space<vmem>>, %arg5: memref<4x248xf32, #tpu.memory_space<vmem>>, %arg6: memref<1x4xf32, #tpu.memory_space<vmem>>, %arg7: memref<1x4xf32, #tpu.memory_space<vmem>>, %arg8: memref<248x248xbf16, #tpu.memory_space<vmem>>, %arg9: memref<248x8xf32, #tpu.memory_space<vmem>>, %arg10: memref<8x248xf32, #tpu.memory_space<vmem>>, %arg11: memref<1x8xf32, #tpu.memory_space<vmem>>, %arg12: memref<1x8xf32, #tpu.memory_space<vmem>>, %arg13: memref<248x256xbf16, #tpu.memory_space<vmem>>, %arg14: memref<256x16xf32, #tpu.memory_space<vmem>>, %arg15: memref<16x256xf32, #tpu.memory_space<vmem>>, %arg16: memref<1x16xf32, #tpu.memory_space<vmem>>, %arg17: memref<1x16xf32, #tpu.memory_space<vmem>>, %arg18: memref<256x256xbf16, #tpu.memory_space<vmem>>, %arg19: memref<256x32xf32, #tpu.memory_space<vmem>>, %arg20: memref<32x256xf32, #tpu.memory_space<vmem>>, %arg21: memref<1x32xf32, #tpu.memory_space<vmem>>, %arg22: memref<1x32xf32, #tpu.memory_space<vmem>>, %arg23: memref<256x256xbf16, #tpu.memory_space<vmem>>, %arg24: memref<256x64xf32, #tpu.memory_space<vmem>>, %arg25: memref<64x256xf32, #tpu.memory_space<vmem>>, %arg26: memref<1x64xf32, #tpu.memory_space<vmem>>, %arg27: memref<1x64xf32, #tpu.memory_space<vmem>>, %arg28: memref<256x256xbf16, #tpu.memory_space<vmem>>, %arg29: memref<256x128xf32, #tpu.memory_space<vmem>>, %arg30: memref<128x256xf32, #tpu.memory_space<vmem>>, %arg31: memref<1x128xf32, #tpu.memory_space<vmem>>, %arg32: memref<1x128xf32, #tpu.memory_space<vmem>>, %arg33: memref<256x1xbf16, #tpu.memory_space<vmem>>, %arg34: memref<1x1xf32, #tpu.memory_space<vmem>>, %arg35: memref<2x1xf32, #tpu.memory_space<vmem>>) attributes {dimension_semantics = [], scalar_prefetch = 0 : i64, scratch_operands = 0 : i64, tpu.core_type = #tpu.core_type<tc>} {
    %c0 = arith.constant 0 : index
    %c0_0 = arith.constant 0 : index
    %0 = vector.load %arg0[%c0, %c0_0] : memref<2x256xf32, #tpu.memory_space<vmem>>, vector<2x256xf32>
    %c0_1 = arith.constant 0 : index
    %c0_2 = arith.constant 0 : index
    %1 = vector.load %arg1[%c0_1, %c0_2] : memref<256x252xbf16, #tpu.memory_space<vmem>>, vector<256x252xbf16>
    %2 = arith.truncf %0 : vector<2x256xf32> to vector<2x256xbf16>
    %cst = arith.constant dense<0.000000e+00> : vector<2x252xf32>
    %3 = tpu.matmul %2, %1, %cst {dimension_numbers = #tpu.dot_dimension_numbers<[1], [0], [0], [1], [0, 0, 1, 1], [], []>} : vector<2x256xbf16>, vector<256x252xbf16>, vector<2x252xf32> -> vector<2x252xf32>
    %c0_3 = arith.constant 0 : index
    %c0_4 = arith.constant 0 : index
    %4 = vector.load %arg2[%c0_3, %c0_4] : memref<1x252xf32, #tpu.memory_space<vmem>>, vector<1x252xf32>
    %5 = vector.broadcast %4 : vector<1x252xf32> to vector<2x252xf32>
    %6 = arith.addf %3, %5 : vector<2x252xf32>
    %cst_5 = arith.constant 2.000000e-01 : f32
    %7 = vector.broadcast %cst_5 : f32 to vector<2x252xf32>
    %8 = arith.mulf %7, %6 : vector<2x252xf32>
    %9 = arith.maximumf %6, %8 : vector<2x252xf32>
    %c0_6 = arith.constant 0 : index
    %c0_7 = arith.constant 0 : index
    %10 = vector.load %arg3[%c0_6, %c0_7] : memref<252x248xbf16, #tpu.memory_space<vmem>>, vector<252x248xbf16>
    %11 = arith.truncf %9 : vector<2x252xf32> to vector<2x252xbf16>
    %cst_8 = arith.constant dense<0.000000e+00> : vector<2x248xf32>
    %12 = tpu.matmul %11, %10, %cst_8 {dimension_numbers = #tpu.dot_dimension_numbers<[1], [0], [0], [1], [0, 0, 1, 1], [], []>} : vector<2x252xbf16>, vector<252x248xbf16>, vector<2x248xf32> -> vector<2x248xf32>
    %c0_9 = arith.constant 0 : index
    %c0_10 = arith.constant 0 : index
    %13 = vector.load %arg4[%c0_9, %c0_10] : memref<248x4xf32, #tpu.memory_space<vmem>>, vector<248x4xf32>
    %c0_11 = arith.constant 0 : index
    %c0_12 = arith.constant 0 : index
    %14 = vector.load %arg5[%c0_11, %c0_12] : memref<4x248xf32, #tpu.memory_space<vmem>>, vector<4x248xf32>
    %c0_13 = arith.constant 0 : index
    %c0_14 = arith.constant 0 : index
    %15 = vector.load %arg6[%c0_13, %c0_14] : memref<1x4xf32, #tpu.memory_space<vmem>>, vector<1x4xf32>
    %c0_15 = arith.constant 0 : index
    %c0_16 = arith.constant 0 : index
    %16 = vector.load %arg7[%c0_15, %c0_16] : memref<1x4xf32, #tpu.memory_space<vmem>>, vector<1x4xf32>
    %cst_17 = arith.constant dense<0.000000e+00> : vector<248xf32>
    %17 = vector.multi_reduction <add>, %12, %cst_17 [0] : vector<2x248xf32> to vector<248xf32>
    %18 = vector.shape_cast %17 : vector<248xf32> to vector<1x248xf32>
    %19 = arith.mulf %12, %12 : vector<2x248xf32>
    %cst_18 = arith.constant dense<0.000000e+00> : vector<248xf32>
    %20 = vector.multi_reduction <add>, %19, %cst_18 [0] : vector<2x248xf32> to vector<248xf32>
    %21 = vector.shape_cast %20 : vector<248xf32> to vector<1x248xf32>
    %cst_19 = arith.constant dense<0.000000e+00> : vector<1x4xf32>
    %22 = tpu.matmul %18, %13, %cst_19 {dimension_numbers = #tpu.dot_dimension_numbers<[1], [0], [0], [1], [0, 0, 1, 1], [], []>} : vector<1x248xf32>, vector<248x4xf32>, vector<1x4xf32> -> vector<1x4xf32>
    %cst_20 = arith.constant dense<0.000000e+00> : vector<1x4xf32>
    %23 = tpu.matmul %21, %13, %cst_20 {dimension_numbers = #tpu.dot_dimension_numbers<[1], [0], [0], [1], [0, 0, 1, 1], [], []>} : vector<1x248xf32>, vector<248x4xf32>, vector<1x4xf32> -> vector<1x4xf32>
    %cst_21 = arith.constant 0.00806451589 : f32
    %24 = vector.broadcast %cst_21 : f32 to vector<1x4xf32>
    %25 = arith.mulf %22, %24 : vector<1x4xf32>
    %cst_22 = arith.constant 0.00806451589 : f32
    %26 = vector.broadcast %cst_22 : f32 to vector<1x4xf32>
    %27 = arith.mulf %23, %26 : vector<1x4xf32>
    %28 = arith.mulf %25, %25 : vector<1x4xf32>
    %29 = arith.subf %27, %28 : vector<1x4xf32>
    %cst_23 = arith.constant 0.000000e+00 : f32
    %30 = vector.broadcast %cst_23 : f32 to vector<1x4xf32>
    %31 = arith.maximumf %29, %30 : vector<1x4xf32>
    %cst_24 = arith.constant 9.99999974E-6 : f32
    %32 = vector.broadcast %cst_24 : f32 to vector<1x4xf32>
    %33 = arith.addf %31, %32 : vector<1x4xf32>
    %34 = math.rsqrt %33 : vector<1x4xf32>
    %35 = arith.mulf %15, %34 : vector<1x4xf32>
    %36 = arith.mulf %25, %35 : vector<1x4xf32>
    %37 = arith.subf %16, %36 : vector<1x4xf32>
    %cst_25 = arith.constant dense<0.000000e+00> : vector<1x248xf32>
    %38 = tpu.matmul %35, %14, %cst_25 {dimension_numbers = #tpu.dot_dimension_numbers<[1], [0], [0], [1], [0, 0, 1, 1], [], []>} : vector<1x4xf32>, vector<4x248xf32>, vector<1x248xf32> -> vector<1x248xf32>
    %cst_26 = arith.constant dense<0.000000e+00> : vector<1x248xf32>
    %39 = tpu.matmul %37, %14, %cst_26 {dimension_numbers = #tpu.dot_dimension_numbers<[1], [0], [0], [1], [0, 0, 1, 1], [], []>} : vector<1x4xf32>, vector<4x248xf32>, vector<1x248xf32> -> vector<1x248xf32>
    %40 = vector.broadcast %38 : vector<1x248xf32> to vector<2x248xf32>
    %41 = arith.mulf %12, %40 : vector<2x248xf32>
    %42 = vector.broadcast %39 : vector<1x248xf32> to vector<2x248xf32>
    %43 = arith.addf %41, %42 : vector<2x248xf32>
    %cst_27 = arith.constant 2.000000e-01 : f32
    %44 = vector.broadcast %cst_27 : f32 to vector<2x248xf32>
    %45 = arith.mulf %44, %43 : vector<2x248xf32>
    %46 = arith.maximumf %43, %45 : vector<2x248xf32>
    %c0_28 = arith.constant 0 : index
    %c0_29 = arith.constant 0 : index
    %47 = vector.load %arg8[%c0_28, %c0_29] : memref<248x248xbf16, #tpu.memory_space<vmem>>, vector<248x248xbf16>
    %48 = arith.truncf %46 : vector<2x248xf32> to vector<2x248xbf16>
    %cst_30 = arith.constant dense<0.000000e+00> : vector<2x248xf32>
    %49 = tpu.matmul %48, %47, %cst_30 {dimension_numbers = #tpu.dot_dimension_numbers<[1], [0], [0], [1], [0, 0, 1, 1], [], []>} : vector<2x248xbf16>, vector<248x248xbf16>, vector<2x248xf32> -> vector<2x248xf32>
    %c0_31 = arith.constant 0 : index
    %c0_32 = arith.constant 0 : index
    %50 = vector.load %arg9[%c0_31, %c0_32] : memref<248x8xf32, #tpu.memory_space<vmem>>, vector<248x8xf32>
    %c0_33 = arith.constant 0 : index
    %c0_34 = arith.constant 0 : index
    %51 = vector.load %arg10[%c0_33, %c0_34] : memref<8x248xf32, #tpu.memory_space<vmem>>, vector<8x248xf32>
    %c0_35 = arith.constant 0 : index
    %c0_36 = arith.constant 0 : index
    %52 = vector.load %arg11[%c0_35, %c0_36] : memref<1x8xf32, #tpu.memory_space<vmem>>, vector<1x8xf32>
    %c0_37 = arith.constant 0 : index
    %c0_38 = arith.constant 0 : index
    %53 = vector.load %arg12[%c0_37, %c0_38] : memref<1x8xf32, #tpu.memory_space<vmem>>, vector<1x8xf32>
    %cst_39 = arith.constant dense<0.000000e+00> : vector<248xf32>
    %54 = vector.multi_reduction <add>, %49, %cst_39 [0] : vector<2x248xf32> to vector<248xf32>
    %55 = vector.shape_cast %54 : vector<248xf32> to vector<1x248xf32>
    %56 = arith.mulf %49, %49 : vector<2x248xf32>
    %cst_40 = arith.constant dense<0.000000e+00> : vector<248xf32>
    %57 = vector.multi_reduction <add>, %56, %cst_40 [0] : vector<2x248xf32> to vector<248xf32>
    %58 = vector.shape_cast %57 : vector<248xf32> to vector<1x248xf32>
    %cst_41 = arith.constant dense<0.000000e+00> : vector<1x8xf32>
    %59 = tpu.matmul %55, %50, %cst_41 {dimension_numbers = #tpu.dot_dimension_numbers<[1], [0], [0], [1], [0, 0, 1, 1], [], []>} : vector<1x248xf32>, vector<248x8xf32>, vector<1x8xf32> -> vector<1x8xf32>
    %cst_42 = arith.constant dense<0.000000e+00> : vector<1x8xf32>
    %60 = tpu.matmul %58, %50, %cst_42 {dimension_numbers = #tpu.dot_dimension_numbers<[1], [0], [0], [1], [0, 0, 1, 1], [], []>} : vector<1x248xf32>, vector<248x8xf32>, vector<1x8xf32> -> vector<1x8xf32>
    %cst_43 = arith.constant 0.0161290318 : f32
    %61 = vector.broadcast %cst_43 : f32 to vector<1x8xf32>
    %62 = arith.mulf %59, %61 : vector<1x8xf32>
    %cst_44 = arith.constant 0.0161290318 : f32
    %63 = vector.broadcast %cst_44 : f32 to vector<1x8xf32>
    %64 = arith.mulf %60, %63 : vector<1x8xf32>
    %65 = arith.mulf %62, %62 : vector<1x8xf32>
    %66 = arith.subf %64, %65 : vector<1x8xf32>
    %cst_45 = arith.constant 0.000000e+00 : f32
    %67 = vector.broadcast %cst_45 : f32 to vector<1x8xf32>
    %68 = arith.maximumf %66, %67 : vector<1x8xf32>
    %cst_46 = arith.constant 9.99999974E-6 : f32
    %69 = vector.broadcast %cst_46 : f32 to vector<1x8xf32>
    %70 = arith.addf %68, %69 : vector<1x8xf32>
    %71 = math.rsqrt %70 : vector<1x8xf32>
    %72 = arith.mulf %52, %71 : vector<1x8xf32>
    %73 = arith.mulf %62, %72 : vector<1x8xf32>
    %74 = arith.subf %53, %73 : vector<1x8xf32>
    %cst_47 = arith.constant dense<0.000000e+00> : vector<1x248xf32>
    %75 = tpu.matmul %72, %51, %cst_47 {dimension_numbers = #tpu.dot_dimension_numbers<[1], [0], [0], [1], [0, 0, 1, 1], [], []>} : vector<1x8xf32>, vector<8x248xf32>, vector<1x248xf32> -> vector<1x248xf32>
    %cst_48 = arith.constant dense<0.000000e+00> : vector<1x248xf32>
    %76 = tpu.matmul %74, %51, %cst_48 {dimension_numbers = #tpu.dot_dimension_numbers<[1], [0], [0], [1], [0, 0, 1, 1], [], []>} : vector<1x8xf32>, vector<8x248xf32>, vector<1x248xf32> -> vector<1x248xf32>
    %77 = vector.broadcast %75 : vector<1x248xf32> to vector<2x248xf32>
    %78 = arith.mulf %49, %77 : vector<2x248xf32>
    %79 = vector.broadcast %76 : vector<1x248xf32> to vector<2x248xf32>
    %80 = arith.addf %78, %79 : vector<2x248xf32>
    %cst_49 = arith.constant 2.000000e-01 : f32
    %81 = vector.broadcast %cst_49 : f32 to vector<2x248xf32>
    %82 = arith.mulf %81, %80 : vector<2x248xf32>
    %83 = arith.maximumf %80, %82 : vector<2x248xf32>
    %c0_50 = arith.constant 0 : index
    %c0_51 = arith.constant 0 : index
    %84 = vector.load %arg13[%c0_50, %c0_51] : memref<248x256xbf16, #tpu.memory_space<vmem>>, vector<248x256xbf16>
    %85 = arith.truncf %83 : vector<2x248xf32> to vector<2x248xbf16>
    %cst_52 = arith.constant dense<0.000000e+00> : vector<2x256xf32>
    %86 = tpu.matmul %85, %84, %cst_52 {dimension_numbers = #tpu.dot_dimension_numbers<[1], [0], [0], [1], [0, 0, 1, 1], [], []>} : vector<2x248xbf16>, vector<248x256xbf16>, vector<2x256xf32> -> vector<2x256xf32>
    %c0_53 = arith.constant 0 : index
    %c0_54 = arith.constant 0 : index
    %87 = vector.load %arg14[%c0_53, %c0_54] : memref<256x16xf32, #tpu.memory_space<vmem>>, vector<256x16xf32>
    %c0_55 = arith.constant 0 : index
    %c0_56 = arith.constant 0 : index
    %88 = vector.load %arg15[%c0_55, %c0_56] : memref<16x256xf32, #tpu.memory_space<vmem>>, vector<16x256xf32>
    %c0_57 = arith.constant 0 : index
    %c0_58 = arith.constant 0 : index
    %89 = vector.load %arg16[%c0_57, %c0_58] : memref<1x16xf32, #tpu.memory_space<vmem>>, vector<1x16xf32>
    %c0_59 = arith.constant 0 : index
    %c0_60 = arith.constant 0 : index
    %90 = vector.load %arg17[%c0_59, %c0_60] : memref<1x16xf32, #tpu.memory_space<vmem>>, vector<1x16xf32>
    %cst_61 = arith.constant dense<0.000000e+00> : vector<256xf32>
    %91 = vector.multi_reduction <add>, %86, %cst_61 [0] : vector<2x256xf32> to vector<256xf32>
    %92 = vector.shape_cast %91 : vector<256xf32> to vector<1x256xf32>
    %93 = arith.mulf %86, %86 : vector<2x256xf32>
    %cst_62 = arith.constant dense<0.000000e+00> : vector<256xf32>
    %94 = vector.multi_reduction <add>, %93, %cst_62 [0] : vector<2x256xf32> to vector<256xf32>
    %95 = vector.shape_cast %94 : vector<256xf32> to vector<1x256xf32>
    %cst_63 = arith.constant dense<0.000000e+00> : vector<1x16xf32>
    %96 = tpu.matmul %92, %87, %cst_63 {dimension_numbers = #tpu.dot_dimension_numbers<[1], [0], [0], [1], [0, 0, 1, 1], [], []>} : vector<1x256xf32>, vector<256x16xf32>, vector<1x16xf32> -> vector<1x16xf32>
    %cst_64 = arith.constant dense<0.000000e+00> : vector<1x16xf32>
    %97 = tpu.matmul %95, %87, %cst_64 {dimension_numbers = #tpu.dot_dimension_numbers<[1], [0], [0], [1], [0, 0, 1, 1], [], []>} : vector<1x256xf32>, vector<256x16xf32>, vector<1x16xf32> -> vector<1x16xf32>
    %cst_65 = arith.constant 3.125000e-02 : f32
    %98 = vector.broadcast %cst_65 : f32 to vector<1x16xf32>
    %99 = arith.mulf %96, %98 : vector<1x16xf32>
    %cst_66 = arith.constant 3.125000e-02 : f32
    %100 = vector.broadcast %cst_66 : f32 to vector<1x16xf32>
    %101 = arith.mulf %97, %100 : vector<1x16xf32>
    %102 = arith.mulf %99, %99 : vector<1x16xf32>
    %103 = arith.subf %101, %102 : vector<1x16xf32>
    %cst_67 = arith.constant 0.000000e+00 : f32
    %104 = vector.broadcast %cst_67 : f32 to vector<1x16xf32>
    %105 = arith.maximumf %103, %104 : vector<1x16xf32>
    %cst_68 = arith.constant 9.99999974E-6 : f32
    %106 = vector.broadcast %cst_68 : f32 to vector<1x16xf32>
    %107 = arith.addf %105, %106 : vector<1x16xf32>
    %108 = math.rsqrt %107 : vector<1x16xf32>
    %109 = arith.mulf %89, %108 : vector<1x16xf32>
    %110 = arith.mulf %99, %109 : vector<1x16xf32>
    %111 = arith.subf %90, %110 : vector<1x16xf32>
    %cst_69 = arith.constant dense<0.000000e+00> : vector<1x256xf32>
    %112 = tpu.matmul %109, %88, %cst_69 {dimension_numbers = #tpu.dot_dimension_numbers<[1], [0], [0], [1], [0, 0, 1, 1], [], []>} : vector<1x16xf32>, vector<16x256xf32>, vector<1x256xf32> -> vector<1x256xf32>
    %cst_70 = arith.constant dense<0.000000e+00> : vector<1x256xf32>
    %113 = tpu.matmul %111, %88, %cst_70 {dimension_numbers = #tpu.dot_dimension_numbers<[1], [0], [0], [1], [0, 0, 1, 1], [], []>} : vector<1x16xf32>, vector<16x256xf32>, vector<1x256xf32> -> vector<1x256xf32>
    %114 = vector.broadcast %112 : vector<1x256xf32> to vector<2x256xf32>
    %115 = arith.mulf %86, %114 : vector<2x256xf32>
    %116 = vector.broadcast %113 : vector<1x256xf32> to vector<2x256xf32>
    %117 = arith.addf %115, %116 : vector<2x256xf32>
    %cst_71 = arith.constant 2.000000e-01 : f32
    %118 = vector.broadcast %cst_71 : f32 to vector<2x256xf32>
    %119 = arith.mulf %118, %117 : vector<2x256xf32>
    %120 = arith.maximumf %117, %119 : vector<2x256xf32>
    %c0_72 = arith.constant 0 : index
    %c0_73 = arith.constant 0 : index
    %121 = vector.load %arg18[%c0_72, %c0_73] : memref<256x256xbf16, #tpu.memory_space<vmem>>, vector<256x256xbf16>
    %122 = arith.truncf %120 : vector<2x256xf32> to vector<2x256xbf16>
    %cst_74 = arith.constant dense<0.000000e+00> : vector<2x256xf32>
    %123 = tpu.matmul %122, %121, %cst_74 {dimension_numbers = #tpu.dot_dimension_numbers<[1], [0], [0], [1], [0, 0, 1, 1], [], []>} : vector<2x256xbf16>, vector<256x256xbf16>, vector<2x256xf32> -> vector<2x256xf32>
    %c0_75 = arith.constant 0 : index
    %c0_76 = arith.constant 0 : index
    %124 = vector.load %arg19[%c0_75, %c0_76] : memref<256x32xf32, #tpu.memory_space<vmem>>, vector<256x32xf32>
    %c0_77 = arith.constant 0 : index
    %c0_78 = arith.constant 0 : index
    %125 = vector.load %arg20[%c0_77, %c0_78] : memref<32x256xf32, #tpu.memory_space<vmem>>, vector<32x256xf32>
    %c0_79 = arith.constant 0 : index
    %c0_80 = arith.constant 0 : index
    %126 = vector.load %arg21[%c0_79, %c0_80] : memref<1x32xf32, #tpu.memory_space<vmem>>, vector<1x32xf32>
    %c0_81 = arith.constant 0 : index
    %c0_82 = arith.constant 0 : index
    %127 = vector.load %arg22[%c0_81, %c0_82] : memref<1x32xf32, #tpu.memory_space<vmem>>, vector<1x32xf32>
    %cst_83 = arith.constant dense<0.000000e+00> : vector<256xf32>
    %128 = vector.multi_reduction <add>, %123, %cst_83 [0] : vector<2x256xf32> to vector<256xf32>
    %129 = vector.shape_cast %128 : vector<256xf32> to vector<1x256xf32>
    %130 = arith.mulf %123, %123 : vector<2x256xf32>
    %cst_84 = arith.constant dense<0.000000e+00> : vector<256xf32>
    %131 = vector.multi_reduction <add>, %130, %cst_84 [0] : vector<2x256xf32> to vector<256xf32>
    %132 = vector.shape_cast %131 : vector<256xf32> to vector<1x256xf32>
    %cst_85 = arith.constant dense<0.000000e+00> : vector<1x32xf32>
    %133 = tpu.matmul %129, %124, %cst_85 {dimension_numbers = #tpu.dot_dimension_numbers<[1], [0], [0], [1], [0, 0, 1, 1], [], []>} : vector<1x256xf32>, vector<256x32xf32>, vector<1x32xf32> -> vector<1x32xf32>
    %cst_86 = arith.constant dense<0.000000e+00> : vector<1x32xf32>
    %134 = tpu.matmul %132, %124, %cst_86 {dimension_numbers = #tpu.dot_dimension_numbers<[1], [0], [0], [1], [0, 0, 1, 1], [], []>} : vector<1x256xf32>, vector<256x32xf32>, vector<1x32xf32> -> vector<1x32xf32>
    %cst_87 = arith.constant 6.250000e-02 : f32
    %135 = vector.broadcast %cst_87 : f32 to vector<1x32xf32>
    %136 = arith.mulf %133, %135 : vector<1x32xf32>
    %cst_88 = arith.constant 6.250000e-02 : f32
    %137 = vector.broadcast %cst_88 : f32 to vector<1x32xf32>
    %138 = arith.mulf %134, %137 : vector<1x32xf32>
    %139 = arith.mulf %136, %136 : vector<1x32xf32>
    %140 = arith.subf %138, %139 : vector<1x32xf32>
    %cst_89 = arith.constant 0.000000e+00 : f32
    %141 = vector.broadcast %cst_89 : f32 to vector<1x32xf32>
    %142 = arith.maximumf %140, %141 : vector<1x32xf32>
    %cst_90 = arith.constant 9.99999974E-6 : f32
    %143 = vector.broadcast %cst_90 : f32 to vector<1x32xf32>
    %144 = arith.addf %142, %143 : vector<1x32xf32>
    %145 = math.rsqrt %144 : vector<1x32xf32>
    %146 = arith.mulf %126, %145 : vector<1x32xf32>
    %147 = arith.mulf %136, %146 : vector<1x32xf32>
    %148 = arith.subf %127, %147 : vector<1x32xf32>
    %cst_91 = arith.constant dense<0.000000e+00> : vector<1x256xf32>
    %149 = tpu.matmul %146, %125, %cst_91 {dimension_numbers = #tpu.dot_dimension_numbers<[1], [0], [0], [1], [0, 0, 1, 1], [], []>} : vector<1x32xf32>, vector<32x256xf32>, vector<1x256xf32> -> vector<1x256xf32>
    %cst_92 = arith.constant dense<0.000000e+00> : vector<1x256xf32>
    %150 = tpu.matmul %148, %125, %cst_92 {dimension_numbers = #tpu.dot_dimension_numbers<[1], [0], [0], [1], [0, 0, 1, 1], [], []>} : vector<1x32xf32>, vector<32x256xf32>, vector<1x256xf32> -> vector<1x256xf32>
    %151 = vector.broadcast %149 : vector<1x256xf32> to vector<2x256xf32>
    %152 = arith.mulf %123, %151 : vector<2x256xf32>
    %153 = vector.broadcast %150 : vector<1x256xf32> to vector<2x256xf32>
    %154 = arith.addf %152, %153 : vector<2x256xf32>
    %cst_93 = arith.constant 2.000000e-01 : f32
    %155 = vector.broadcast %cst_93 : f32 to vector<2x256xf32>
    %156 = arith.mulf %155, %154 : vector<2x256xf32>
    %157 = arith.maximumf %154, %156 : vector<2x256xf32>
    %c0_94 = arith.constant 0 : index
    %c0_95 = arith.constant 0 : index
    %158 = vector.load %arg23[%c0_94, %c0_95] : memref<256x256xbf16, #tpu.memory_space<vmem>>, vector<256x256xbf16>
    %159 = arith.truncf %157 : vector<2x256xf32> to vector<2x256xbf16>
    %cst_96 = arith.constant dense<0.000000e+00> : vector<2x256xf32>
    %160 = tpu.matmul %159, %158, %cst_96 {dimension_numbers = #tpu.dot_dimension_numbers<[1], [0], [0], [1], [0, 0, 1, 1], [], []>} : vector<2x256xbf16>, vector<256x256xbf16>, vector<2x256xf32> -> vector<2x256xf32>
    %c0_97 = arith.constant 0 : index
    %c0_98 = arith.constant 0 : index
    %161 = vector.load %arg24[%c0_97, %c0_98] : memref<256x64xf32, #tpu.memory_space<vmem>>, vector<256x64xf32>
    %c0_99 = arith.constant 0 : index
    %c0_100 = arith.constant 0 : index
    %162 = vector.load %arg25[%c0_99, %c0_100] : memref<64x256xf32, #tpu.memory_space<vmem>>, vector<64x256xf32>
    %c0_101 = arith.constant 0 : index
    %c0_102 = arith.constant 0 : index
    %163 = vector.load %arg26[%c0_101, %c0_102] : memref<1x64xf32, #tpu.memory_space<vmem>>, vector<1x64xf32>
    %c0_103 = arith.constant 0 : index
    %c0_104 = arith.constant 0 : index
    %164 = vector.load %arg27[%c0_103, %c0_104] : memref<1x64xf32, #tpu.memory_space<vmem>>, vector<1x64xf32>
    %cst_105 = arith.constant dense<0.000000e+00> : vector<256xf32>
    %165 = vector.multi_reduction <add>, %160, %cst_105 [0] : vector<2x256xf32> to vector<256xf32>
    %166 = vector.shape_cast %165 : vector<256xf32> to vector<1x256xf32>
    %167 = arith.mulf %160, %160 : vector<2x256xf32>
    %cst_106 = arith.constant dense<0.000000e+00> : vector<256xf32>
    %168 = vector.multi_reduction <add>, %167, %cst_106 [0] : vector<2x256xf32> to vector<256xf32>
    %169 = vector.shape_cast %168 : vector<256xf32> to vector<1x256xf32>
    %cst_107 = arith.constant dense<0.000000e+00> : vector<1x64xf32>
    %170 = tpu.matmul %166, %161, %cst_107 {dimension_numbers = #tpu.dot_dimension_numbers<[1], [0], [0], [1], [0, 0, 1, 1], [], []>} : vector<1x256xf32>, vector<256x64xf32>, vector<1x64xf32> -> vector<1x64xf32>
    %cst_108 = arith.constant dense<0.000000e+00> : vector<1x64xf32>
    %171 = tpu.matmul %169, %161, %cst_108 {dimension_numbers = #tpu.dot_dimension_numbers<[1], [0], [0], [1], [0, 0, 1, 1], [], []>} : vector<1x256xf32>, vector<256x64xf32>, vector<1x64xf32> -> vector<1x64xf32>
    %cst_109 = arith.constant 1.250000e-01 : f32
    %172 = vector.broadcast %cst_109 : f32 to vector<1x64xf32>
    %173 = arith.mulf %170, %172 : vector<1x64xf32>
    %cst_110 = arith.constant 1.250000e-01 : f32
    %174 = vector.broadcast %cst_110 : f32 to vector<1x64xf32>
    %175 = arith.mulf %171, %174 : vector<1x64xf32>
    %176 = arith.mulf %173, %173 : vector<1x64xf32>
    %177 = arith.subf %175, %176 : vector<1x64xf32>
    %cst_111 = arith.constant 0.000000e+00 : f32
    %178 = vector.broadcast %cst_111 : f32 to vector<1x64xf32>
    %179 = arith.maximumf %177, %178 : vector<1x64xf32>
    %cst_112 = arith.constant 9.99999974E-6 : f32
    %180 = vector.broadcast %cst_112 : f32 to vector<1x64xf32>
    %181 = arith.addf %179, %180 : vector<1x64xf32>
    %182 = math.rsqrt %181 : vector<1x64xf32>
    %183 = arith.mulf %163, %182 : vector<1x64xf32>
    %184 = arith.mulf %173, %183 : vector<1x64xf32>
    %185 = arith.subf %164, %184 : vector<1x64xf32>
    %cst_113 = arith.constant dense<0.000000e+00> : vector<1x256xf32>
    %186 = tpu.matmul %183, %162, %cst_113 {dimension_numbers = #tpu.dot_dimension_numbers<[1], [0], [0], [1], [0, 0, 1, 1], [], []>} : vector<1x64xf32>, vector<64x256xf32>, vector<1x256xf32> -> vector<1x256xf32>
    %cst_114 = arith.constant dense<0.000000e+00> : vector<1x256xf32>
    %187 = tpu.matmul %185, %162, %cst_114 {dimension_numbers = #tpu.dot_dimension_numbers<[1], [0], [0], [1], [0, 0, 1, 1], [], []>} : vector<1x64xf32>, vector<64x256xf32>, vector<1x256xf32> -> vector<1x256xf32>
    %188 = vector.broadcast %186 : vector<1x256xf32> to vector<2x256xf32>
    %189 = arith.mulf %160, %188 : vector<2x256xf32>
    %190 = vector.broadcast %187 : vector<1x256xf32> to vector<2x256xf32>
    %191 = arith.addf %189, %190 : vector<2x256xf32>
    %cst_115 = arith.constant 2.000000e-01 : f32
    %192 = vector.broadcast %cst_115 : f32 to vector<2x256xf32>
    %193 = arith.mulf %192, %191 : vector<2x256xf32>
    %194 = arith.maximumf %191, %193 : vector<2x256xf32>
    %c0_116 = arith.constant 0 : index
    %c0_117 = arith.constant 0 : index
    %195 = vector.load %arg28[%c0_116, %c0_117] : memref<256x256xbf16, #tpu.memory_space<vmem>>, vector<256x256xbf16>
    %196 = arith.truncf %194 : vector<2x256xf32> to vector<2x256xbf16>
    %cst_118 = arith.constant dense<0.000000e+00> : vector<2x256xf32>
    %197 = tpu.matmul %196, %195, %cst_118 {dimension_numbers = #tpu.dot_dimension_numbers<[1], [0], [0], [1], [0, 0, 1, 1], [], []>} : vector<2x256xbf16>, vector<256x256xbf16>, vector<2x256xf32> -> vector<2x256xf32>
    %c0_119 = arith.constant 0 : index
    %c0_120 = arith.constant 0 : index
    %198 = vector.load %arg29[%c0_119, %c0_120] : memref<256x128xf32, #tpu.memory_space<vmem>>, vector<256x128xf32>
    %c0_121 = arith.constant 0 : index
    %c0_122 = arith.constant 0 : index
    %199 = vector.load %arg30[%c0_121, %c0_122] : memref<128x256xf32, #tpu.memory_space<vmem>>, vector<128x256xf32>
    %c0_123 = arith.constant 0 : index
    %c0_124 = arith.constant 0 : index
    %200 = vector.load %arg31[%c0_123, %c0_124] : memref<1x128xf32, #tpu.memory_space<vmem>>, vector<1x128xf32>
    %c0_125 = arith.constant 0 : index
    %c0_126 = arith.constant 0 : index
    %201 = vector.load %arg32[%c0_125, %c0_126] : memref<1x128xf32, #tpu.memory_space<vmem>>, vector<1x128xf32>
    %cst_127 = arith.constant dense<0.000000e+00> : vector<256xf32>
    %202 = vector.multi_reduction <add>, %197, %cst_127 [0] : vector<2x256xf32> to vector<256xf32>
    %203 = vector.shape_cast %202 : vector<256xf32> to vector<1x256xf32>
    %204 = arith.mulf %197, %197 : vector<2x256xf32>
    %cst_128 = arith.constant dense<0.000000e+00> : vector<256xf32>
    %205 = vector.multi_reduction <add>, %204, %cst_128 [0] : vector<2x256xf32> to vector<256xf32>
    %206 = vector.shape_cast %205 : vector<256xf32> to vector<1x256xf32>
    %cst_129 = arith.constant dense<0.000000e+00> : vector<1x128xf32>
    %207 = tpu.matmul %203, %198, %cst_129 {dimension_numbers = #tpu.dot_dimension_numbers<[1], [0], [0], [1], [0, 0, 1, 1], [], []>} : vector<1x256xf32>, vector<256x128xf32>, vector<1x128xf32> -> vector<1x128xf32>
    %cst_130 = arith.constant dense<0.000000e+00> : vector<1x128xf32>
    %208 = tpu.matmul %206, %198, %cst_130 {dimension_numbers = #tpu.dot_dimension_numbers<[1], [0], [0], [1], [0, 0, 1, 1], [], []>} : vector<1x256xf32>, vector<256x128xf32>, vector<1x128xf32> -> vector<1x128xf32>
    %cst_131 = arith.constant 2.500000e-01 : f32
    %209 = vector.broadcast %cst_131 : f32 to vector<1x128xf32>
    %210 = arith.mulf %207, %209 : vector<1x128xf32>
    %cst_132 = arith.constant 2.500000e-01 : f32
    %211 = vector.broadcast %cst_132 : f32 to vector<1x128xf32>
    %212 = arith.mulf %208, %211 : vector<1x128xf32>
    %213 = arith.mulf %210, %210 : vector<1x128xf32>
    %214 = arith.subf %212, %213 : vector<1x128xf32>
    %cst_133 = arith.constant 0.000000e+00 : f32
    %215 = vector.broadcast %cst_133 : f32 to vector<1x128xf32>
    %216 = arith.maximumf %214, %215 : vector<1x128xf32>
    %cst_134 = arith.constant 9.99999974E-6 : f32
    %217 = vector.broadcast %cst_134 : f32 to vector<1x128xf32>
    %218 = arith.addf %216, %217 : vector<1x128xf32>
    %219 = math.rsqrt %218 : vector<1x128xf32>
    %220 = arith.mulf %200, %219 : vector<1x128xf32>
    %221 = arith.mulf %210, %220 : vector<1x128xf32>
    %222 = arith.subf %201, %221 : vector<1x128xf32>
    %cst_135 = arith.constant dense<0.000000e+00> : vector<1x256xf32>
    %223 = tpu.matmul %220, %199, %cst_135 {dimension_numbers = #tpu.dot_dimension_numbers<[1], [0], [0], [1], [0, 0, 1, 1], [], []>} : vector<1x128xf32>, vector<128x256xf32>, vector<1x256xf32> -> vector<1x256xf32>
    %cst_136 = arith.constant dense<0.000000e+00> : vector<1x256xf32>
    %224 = tpu.matmul %222, %199, %cst_136 {dimension_numbers = #tpu.dot_dimension_numbers<[1], [0], [0], [1], [0, 0, 1, 1], [], []>} : vector<1x128xf32>, vector<128x256xf32>, vector<1x256xf32> -> vector<1x256xf32>
    %225 = vector.broadcast %223 : vector<1x256xf32> to vector<2x256xf32>
    %226 = arith.mulf %197, %225 : vector<2x256xf32>
    %227 = vector.broadcast %224 : vector<1x256xf32> to vector<2x256xf32>
    %228 = arith.addf %226, %227 : vector<2x256xf32>
    %cst_137 = arith.constant 2.000000e-01 : f32
    %229 = vector.broadcast %cst_137 : f32 to vector<2x256xf32>
    %230 = arith.mulf %229, %228 : vector<2x256xf32>
    %231 = arith.maximumf %228, %230 : vector<2x256xf32>
    %c0_138 = arith.constant 0 : index
    %c0_139 = arith.constant 0 : index
    %232 = vector.load %arg33[%c0_138, %c0_139] : memref<256x1xbf16, #tpu.memory_space<vmem>>, vector<256x1xbf16>
    %233 = arith.truncf %231 : vector<2x256xf32> to vector<2x256xbf16>
    %cst_140 = arith.constant dense<0.000000e+00> : vector<2x1xf32>
    %234 = tpu.matmul %233, %232, %cst_140 {dimension_numbers = #tpu.dot_dimension_numbers<[1], [0], [0], [1], [0, 0, 1, 1], [], []>} : vector<2x256xbf16>, vector<256x1xbf16>, vector<2x1xf32> -> vector<2x1xf32>
    %c0_141 = arith.constant 0 : index
    %c0_142 = arith.constant 0 : index
    %235 = vector.load %arg34[%c0_141, %c0_142] : memref<1x1xf32, #tpu.memory_space<vmem>>, vector<1x1xf32>
    %236 = vector.broadcast %235 : vector<1x1xf32> to vector<2x1xf32>
    %237 = arith.addf %234, %236 : vector<2x1xf32>
    %238 = arith.negf %237 : vector<2x1xf32>
    %239 = math.exp %238 : vector<2x1xf32>
    %cst_143 = arith.constant 1.000000e+00 : f32
    %240 = vector.broadcast %cst_143 : f32 to vector<2x1xf32>
    %241 = arith.addf %240, %239 : vector<2x1xf32>
    %242 = arith.divf %240, %241 : vector<2x1xf32>
    %c0_144 = arith.constant 0 : index
    %c0_145 = arith.constant 0 : index
    %243 = vector.load %arg35[%c0_144, %c0_145] : memref<2x1xf32, #tpu.memory_space<vmem>>, vector<2x1xf32>
    tpu.vector_store %arg35[%c0_144, %c0_145], %242 {strides = array<i32>} : memref<2x1xf32, #tpu.memory_space<vmem>>, vector<2x1xf32>,
    return
  }
}

</mosaic_0001>

<llo_original>
// kernel: tpu_custom_call.1
$region0: #{tpu_custom_call.1}
  #allocation0 [shape = 'u32[]', space=smem, size = 0x4, offset = 0x4, fixed_abs, tag = 'smem constant byte address 0x4 - core index']
  #allocation1 [shape = 'u32[144,128]{1,0:T(1,128)}', space=vmem, size = 0x12000, scoped, tag = 'internal scratch']
  #allocation2 [shape = 'f32[1,1]{1,0:T(1,128)S(1)}', space=vmem, size = 0x200, scoped, tag = 'scoped memory for tpu_custom_call.1']
  %s0 = inlined_call_operand.smem [shape: u32[36], index: -1, kind: input, shape index: {}]
  %s1 = sld [smem:[%s0]]
  %s2 = scalar_lea.smem %s0, 1
  %s3 = sld [smem:[%s2]]
  %s4 = scalar_lea.smem %s0, 2
  %s5 = sld [smem:[%s4]]
  %s6 = scalar_lea.smem %s0, 3
  %s7 = sld [smem:[%s6]]
  %s8 = scalar_lea.smem %s0, 4
  %s9 = sld [smem:[%s8]]
  %s10 = scalar_lea.smem %s0, 5
  %s11 = sld [smem:[%s10]]
  %s12 = scalar_lea.smem %s0, 6
  %s13 = sld [smem:[%s12]]
  %s14 = scalar_lea.smem %s0, 7
  %s15 = sld [smem:[%s14]]
  %s16 = scalar_lea.smem %s0, 8
  %s17 = sld [smem:[%s16]]
  %s18 = scalar_lea.smem %s0, 9
  %s19 = sld [smem:[%s18]]
  %s20 = scalar_lea.smem %s0, 10
  %s21 = sld [smem:[%s20]]
  %s22 = scalar_lea.smem %s0, 11
  %s23 = sld [smem:[%s22]]
  %s24 = scalar_lea.smem %s0, 12
  %s25 = sld [smem:[%s24]]
  %s26 = scalar_lea.smem %s0, 13
  %s27 = sld [smem:[%s26]]
  %s28 = scalar_lea.smem %s0, 14
  %s29 = sld [smem:[%s28]]
  %s30 = scalar_lea.smem %s0, 15
  %s31 = sld [smem:[%s30]]
  %s32 = scalar_lea.smem %s0, 16
  %s33 = sld [smem:[%s32]]
  %s34 = scalar_lea.smem %s0, 17
  %s35 = sld [smem:[%s34]]
  %s36 = scalar_lea.smem %s0, 18
  %s37 = sld [smem:[%s36]]
  %s38 = scalar_lea.smem %s0, 19
  %s39 = sld [smem:[%s38]]
  %s40 = scalar_lea.smem %s0, 20
  %s41 = sld [smem:[%s40]]
  %s42 = scalar_lea.smem %s0, 21
  %s43 = sld [smem:[%s42]]
  %s44 = scalar_lea.smem %s0, 22
  %s45 = sld [smem:[%s44]]
  %s46 = scalar_lea.smem %s0, 23
  %s47 = sld [smem:[%s46]]
  %s48 = scalar_lea.smem %s0, 24
  %s49 = sld [smem:[%s48]]
  %s50 = scalar_lea.smem %s0, 25
  %s51 = sld [smem:[%s50]]
  %s52 = scalar_lea.smem %s0, 26
  %s53 = sld [smem:[%s52]]
  %s54 = scalar_lea.smem %s0, 27
  %s55 = sld [smem:[%s54]]
  %s56 = scalar_lea.smem %s0, 28
  %s57 = sld [smem:[%s56]]
  %s58 = scalar_lea.smem %s0, 29
  %s59 = sld [smem:[%s58]]
  %s60 = scalar_lea.smem %s0, 30
  %s61 = sld [smem:[%s60]]
  %s62 = scalar_lea.smem %s0, 31
  %s63 = sld [smem:[%s62]]
  %s64 = scalar_lea.smem %s0, 32
  %s65 = sld [smem:[%s64]]
  %s66 = scalar_lea.smem %s0, 33
  %s67 = sld [smem:[%s66]]
  %s68 = scalar_lea.smem %s0, 34
  %s69 = sld [smem:[%s68]]
  %s70 = scalar_lea.smem %s0, 35
  %s71 = sld [smem:[%s70]]
  %s72 = sld [smem:[#allocation0]]
  $region190: #{tpu_custom_call.1} parent=0
    _
  %s74 = ssub.s32 1, %s72
  %s75 = scalar_select 0, %s74, %s72
  %v76 = vstv %s69
  %77 = vst [vmem:[#allocation2] sm:$0x1] %v76
  $region1: #{tpu_custom_call.1} parent=0
    #allocation3 [shape = 'u8[2048]{0}', space=vmem, size = 0x800, scoped, tag = 'input window, operand 0, single buffered']
    #allocation4 [shape = 's32[1]{0}', space=sflag, size = 0x4, scoped, tag = 'scoped memory for tpu_custom_call.1']
    #allocation5 [shape = 'u8[1024]{0}', space=vmem, size = 0x400, scoped, tag = 'input window, operand 2, single buffered']
    #allocation6 [shape = 's32[1]{0}', space=sflag, size = 0x4, scoped, tag = 'scoped memory for tpu_custom_call.1']
    #allocation7 [shape = 'u8[4096]{0}', space=vmem, size = 0x1000, scoped, tag = 'input window, operand 5, single buffered']
    #allocation8 [shape = 'u8[512]{0}', space=vmem, size = 0x400, scoped, tag = 'input window, operand 6, single buffered']
    #allocation9 [shape = 's32[1]{0}', space=sflag, size = 0x4, scoped, tag = 'scoped memory for tpu_custom_call.1']
    #allocation10 [shape = 'u8[512]{0}', space=vmem, size = 0x400, scoped, tag = 'input window, operand 7, single buffered']
    #allocation11 [shape = 'u8[8192]{0}', space=vmem, size = 0x2000, scoped, tag = 'input window, operand 10, single buffered']
    #allocation12 [shape = 's32[1]{0}', space=sflag, size = 0x4, scoped, tag = 'scoped memory for tpu_custom_call.1']
    #allocation13 [shape = 'u8[126976]{0}', space=vmem, size = 0x1f000, scoped, tag = 'input window, operand 13, single buffered']
    #allocation14 [shape = 'u8[16384]{0}', space=vmem, size = 0x4000, scoped, tag = 'input window, operand 15, single buffered']
    #allocation15 [shape = 's32[1]{0}', space=sflag, size = 0x4, scoped, tag = 'scoped memory for tpu_custom_call.1']
    #allocation16 [shape = 'u8[32768]{0}', space=vmem, size = 0x8000, scoped, tag = 'input window, operand 20, single buffered']
    #allocation17 [shape = 'u8[65536]{0}', space=vmem, size = 0x10000, scoped, tag = 'input window, operand 25, single buffered']
    #allocation18 [shape = 's32[1]{0}', space=sflag, size = 0x4, scoped, tag = 'scoped memory for tpu_custom_call.1']
    %78 = vsyncpa [#allocation4], 0
    %79 = vsyncpa [#allocation6], 0
    %80 = vsyncpa [#allocation9], 0
    %81 = vsyncpa [#allocation12], 0
    %82 = vsyncpa [#allocation15], 0
    %83 = vsyncpa [#allocation18], 0
    // Predicated region
    $region2: #{tpu_custom_call.1} parent=1 // pred_check
      _
    $region3: #{tpu_custom_call.1} parent=1 // pred_check_branch
      %85 = sbr.rel (0) target = $region5
    $region4: #{tpu_custom_call.1} parent=1 // pred_region
      %s87 = ssub.s32 64, 64
      %88 = vsyncadd [#allocation4], %s87
      %s90 = sshll.u32 [#allocation3], 4
      %s91 = int_to_ptr.vmem [resolvable:$true] %s90
      %93 = dma.hbm_to_vmem [thread:$0]  %s1, 64, %s91, [#allocation4]
    $region5: #{tpu_custom_call.1} parent=1 // pred_fallthru
      _
    // Predicated region
    $region6: #{tpu_custom_call.1} parent=1 // pred_check
      _
    $region7: #{tpu_custom_call.1} parent=1 // pred_check_branch
      %95 = sbr.rel (0) target = $region9
    $region8: #{tpu_custom_call.1} parent=1 // pred_region
      _
    $region9: #{tpu_custom_call.1} parent=1 // pred_fallthru
      _
    // Predicated region
    $region10: #{tpu_custom_call.1} parent=1 // pred_check
      _
    $region11: #{tpu_custom_call.1} parent=1 // pred_check_branch
      %97 = sbr.rel (0) target = $region13
    $region12: #{tpu_custom_call.1} parent=1 // pred_region
      %s99 = ssub.s32 32, 32
      %100 = vsyncadd [#allocation6], %s99
      %s102 = sshll.u32 [#allocation5], 4
      %s103 = int_to_ptr.vmem [resolvable:$true] %s102
      %105 = dma.hbm_to_vmem [thread:$0]  %s5, 32, %s103, [#allocation6]
    $region13: #{tpu_custom_call.1} parent=1 // pred_fallthru
      _
    // Predicated region
    $region14: #{tpu_custom_call.1} parent=1 // pred_check
      _
    $region15: #{tpu_custom_call.1} parent=1 // pred_check_branch
      %107 = sbr.rel (0) target = $region17
    $region16: #{tpu_custom_call.1} parent=1 // pred_region
      _
    $region17: #{tpu_custom_call.1} parent=1 // pred_fallthru
      _
    // Predicated region
    $region18: #{tpu_custom_call.1} parent=1 // pred_check
      _
    $region19: #{tpu_custom_call.1} parent=1 // pred_check_branch
      %109 = sbr.rel (0) target = $region21
    $region20: #{tpu_custom_call.1} parent=1 // pred_region
      _
    $region21: #{tpu_custom_call.1} parent=1 // pred_fallthru
      _
    // Predicated region
    $region22: #{tpu_custom_call.1} parent=1 // pred_check
      _
    $region23: #{tpu_custom_call.1} parent=1 // pred_check_branch
      %111 = sbr.rel (0) target = $region25
    $region24: #{tpu_custom_call.1} parent=1 // pred_region
      %s113 = ssub.s32 128, 128
      %114 = vsyncadd [#allocation6], %s113
      %s116 = sshll.u32 [#allocation7], 4
      %s117 = int_to_ptr.vmem [resolvable:$true] %s116
      %119 = dma.hbm_to_vmem [thread:$0]  %s11, 128, %s117, [#allocation6]
    $region25: #{tpu_custom_call.1} parent=1 // pred_fallthru
      _
    // Predicated region
    $region26: #{tpu_custom_call.1} parent=1 // pred_check
      _
    $region27: #{tpu_custom_call.1} parent=1 // pred_check_branch
      %121 = sbr.rel (0) target = $region29
    $region28: #{tpu_custom_call.1} parent=1 // pred_region
      %s123 = ssub.s32 16, 16
      %124 = vsyncadd [#allocation9], %s123
      %s126 = sshll.u32 [#allocation8], 4
      %s127 = int_to_ptr.vmem [resolvable:$true] %s126
      %129 = dma.hbm_to_vmem [thread:$0]  %s13, 16, %s127, [#allocation9]
    $region29: #{tpu_custom_call.1} parent=1 // pred_fallthru
      _
    // Predicated region
    $region30: #{tpu_custom_call.1} parent=1 // pred_check
      _
    $region31: #{tpu_custom_call.1} parent=1 // pred_check_branch
      %131 = sbr.rel (0) target = $region33
    $region32: #{tpu_custom_call.1} parent=1 // pred_region
      %s133 = ssub.s32 16, 16
      %134 = vsyncadd [#allocation9], %s133
      %s136 = sshll.u32 [#allocation10], 4
      %s137 = int_to_ptr.vmem [resolvable:$true] %s136
      %139 = dma.hbm_to_vmem [thread:$0]  %s15, 16, %s137, [#allocation9]
    $region33: #{tpu_custom_call.1} parent=1 // pred_fallthru
      _
    // Predicated region
    $region34: #{tpu_custom_call.1} parent=1 // pred_check
      _
    $region35: #{tpu_custom_call.1} parent=1 // pred_check_branch
      %141 = sbr.rel (0) target = $region37
    $region36: #{tpu_custom_call.1} parent=1 // pred_region
      _
    $region37: #{tpu_custom_call.1} parent=1 // pred_fallthru
      _
    // Predicated region
    $region38: #{tpu_custom_call.1} parent=1 // pred_check
      _
    $region39: #{tpu_custom_call.1} parent=1 // pred_check_branch
      %143 = sbr.rel (0) target = $region41
    $region40: #{tpu_custom_call.1} parent=1 // pred_region
      _
    $region41: #{tpu_custom_call.1} parent=1 // pred_fallthru
      _
    // Predicated region
    $region42: #{tpu_custom_call.1} parent=1 // pred_check
      _
    $region43: #{tpu_custom_call.1} parent=1 // pred_check_branch
      %145 = sbr.rel (0) target = $region45
    $region44: #{tpu_custom_call.1} parent=1 // pred_region
      %s147 = ssub.s32 256, 256
      %148 = vsyncadd [#allocation12], %s147
      %s150 = sshll.u32 [#allocation11], 4
      %s151 = int_to_ptr.vmem [resolvable:$true] %s150
      %153 = dma.hbm_to_vmem [thread:$0]  %s21, 256, %s151, [#allocation12]
    $region45: #{tpu_custom_call.1} parent=1 // pred_fallthru
      _
    // Predicated region
    $region46: #{tpu_custom_call.1} parent=1 // pred_check
      _
    $region47: #{tpu_custom_call.1} parent=1 // pred_check_branch
      %155 = sbr.rel (0) target = $region49
    $region48: #{tpu_custom_call.1} parent=1 // pred_region
      _
    $region49: #{tpu_custom_call.1} parent=1 // pred_fallthru
      _
    // Predicated region
    $region50: #{tpu_custom_call.1} parent=1 // pred_check
      _
    $region51: #{tpu_custom_call.1} parent=1 // pred_check_branch
      %157 = sbr.rel (0) target = $region53
    $region52: #{tpu_custom_call.1} parent=1 // pred_region
      _
    $region53: #{tpu_custom_call.1} parent=1 // pred_fallthru
      _
    // Predicated region
    $region54: #{tpu_custom_call.1} parent=1 // pred_check
      _
    $region55: #{tpu_custom_call.1} parent=1 // pred_check_branch
      %159 = sbr.rel (0) target = $region57
    $region56: #{tpu_custom_call.1} parent=1 // pred_region
      %s161 = ssub.s32 3968, 3968
      %162 = vsyncadd [#allocation12], %s161
      %s163 = sshll.u32 [#allocation13], 4
      %s164 = int_to_ptr.vmem [resolvable:$true] %s163
      %169 = dma.hbm_to_vmem [thread:$0]  %s27, 3968, %s164, [#allocation12], 128, 128, 8
    $region57: #{tpu_custom_call.1} parent=1 // pred_fallthru
      _
    // Predicated region
    $region58: #{tpu_custom_call.1} parent=1 // pred_check
      _
    $region59: #{tpu_custom_call.1} parent=1 // pred_check_branch
      %171 = sbr.rel (0) target = $region61
    $region60: #{tpu_custom_call.1} parent=1 // pred_region
      _
    $region61: #{tpu_custom_call.1} parent=1 // pred_fallthru
      _
    // Predicated region
    $region62: #{tpu_custom_call.1} parent=1 // pred_check
      _
    $region63: #{tpu_custom_call.1} parent=1 // pred_check_branch
      %173 = sbr.rel (0) target = $region65
    $region64: #{tpu_custom_call.1} parent=1 // pred_region
      %s175 = ssub.s32 512, 512
      %176 = vsyncadd [#allocation15], %s175
      %s177 = sshll.u32 [#allocation14], 4
      %s178 = int_to_ptr.vmem [resolvable:$true] %s177
      %183 = dma.hbm_to_vmem [thread:$0]  %s31, 512, %s178, [#allocation15], 256, 256, 16
    $region65: #{tpu_custom_call.1} parent=1 // pred_fallthru
      _
    // Predicated region
    $region66: #{tpu_custom_call.1} parent=1 // pred_check
      _
    $region67: #{tpu_custom_call.1} parent=1 // pred_check_branch
      %185 = sbr.rel (0) target = $region69
    $region68: #{tpu_custom_call.1} parent=1 // pred_region
      _
    $region69: #{tpu_custom_call.1} parent=1 // pred_fallthru
      _
    // Predicated region
    $region70: #{tpu_custom_call.1} parent=1 // pred_check
      _
    $region71: #{tpu_custom_call.1} parent=1 // pred_check_branch
      %187 = sbr.rel (0) target = $region73
    $region72: #{tpu_custom_call.1} parent=1 // pred_region
      _
    $region73: #{tpu_custom_call.1} parent=1 // pred_fallthru
      _
    // Predicated region
    $region74: #{tpu_custom_call.1} parent=1 // pred_check
      _
    $region75: #{tpu_custom_call.1} parent=1 // pred_check_branch
      %189 = sbr.rel (0) target = $region77
    $region76: #{tpu_custom_call.1} parent=1 // pred_region
      _
    $region77: #{tpu_custom_call.1} parent=1 // pred_fallthru
      _
    // Predicated region
    $region78: #{tpu_custom_call.1} parent=1 // pred_check
      _
    $region79: #{tpu_custom_call.1} parent=1 // pred_check_branch
      %191 = sbr.rel (0) target = $region81
    $region80: #{tpu_custom_call.1} parent=1 // pred_region
      _
    $region81: #{tpu_custom_call.1} parent=1 // pred_fallthru
      _
    // Predicated region
    $region82: #{tpu_custom_call.1} parent=1 // pred_check
      _
    $region83: #{tpu_custom_call.1} parent=1 // pred_check_branch
      %193 = sbr.rel (0) target = $region85
    $region84: #{tpu_custom_call.1} parent=1 // pred_region
      %s195 = ssub.s32 1024, 1024
      %196 = vsyncadd [#allocation15], %s195
      %s197 = sshll.u32 [#allocation16], 4
      %s198 = int_to_ptr.vmem [resolvable:$true] %s197
      %203 = dma.hbm_to_vmem [thread:$0]  %s41, 1024, %s198, [#allocation15], 256, 256, 16
    $region85: #{tpu_custom_call.1} parent=1 // pred_fallthru
      _
    // Predicated region
    $region86: #{tpu_custom_call.1} parent=1 // pred_check
      _
    $region87: #{tpu_custom_call.1} parent=1 // pred_check_branch
      %205 = sbr.rel (0) target = $region89
    $region88: #{tpu_custom_call.1} parent=1 // pred_region
      _
    $region89: #{tpu_custom_call.1} parent=1 // pred_fallthru
      _
    // Predicated region
    $region90: #{tpu_custom_call.1} parent=1 // pred_check
      _
    $region91: #{tpu_custom_call.1} parent=1 // pred_check_branch
      %207 = sbr.rel (0) target = $region93
    $region92: #{tpu_custom_call.1} parent=1 // pred_region
      _
    $region93: #{tpu_custom_call.1} parent=1 // pred_fallthru
      _
    // Predicated region
    $region94: #{tpu_custom_call.1} parent=1 // pred_check
      _
    $region95: #{tpu_custom_call.1} parent=1 // pred_check_branch
      %209 = sbr.rel (0) target = $region97
    $region96: #{tpu_custom_call.1} parent=1 // pred_region
      _
    $region97: #{tpu_custom_call.1} parent=1 // pred_fallthru
      _
    // Predicated region
    $region98: #{tpu_custom_call.1} parent=1 // pred_check
      _
    $region99: #{tpu_custom_call.1} parent=1 // pred_check_branch
      %211 = sbr.rel (0) target = $region101
    $region100: #{tpu_custom_call.1} parent=1 // pred_region
      _
    $region101: #{tpu_custom_call.1} parent=1 // pred_fallthru
      _
    // Predicated region
    $region102: #{tpu_custom_call.1} parent=1 // pred_check
      _
    $region103: #{tpu_custom_call.1} parent=1 // pred_check_branch
      %213 = sbr.rel (0) target = $region105
    $region104: #{tpu_custom_call.1} parent=1 // pred_region
      %s215 = ssub.s32 2048, 2048
      %216 = vsyncadd [#allocation18], %s215
      %s217 = sshll.u32 [#allocation17], 4
      %s218 = int_to_ptr.vmem [resolvable:$true] %s217
      %223 = dma.hbm_to_vmem [thread:$0]  %s51, 2048, %s218, [#allocation18], 256, 256, 16
    $region105: #{tpu_custom_call.1} parent=1 // pred_fallthru
      _
    // Predicated region
    $region106: #{tpu_custom_call.1} parent=1 // pred_check
      _
    $region107: #{tpu_custom_call.1} parent=1 // pred_check_branch
      %225 = sbr.rel (0) target = $region109
    $region108: #{tpu_custom_call.1} parent=1 // pred_region
      _
    $region109: #{tpu_custom_call.1} parent=1 // pred_fallthru
      _
    // Predicated region
    $region110: #{tpu_custom_call.1} parent=1 // pred_check
      _
    $region111: #{tpu_custom_call.1} parent=1 // pred_check_branch
      %227 = sbr.rel (0) target = $region113
    $region112: #{tpu_custom_call.1} parent=1 // pred_region
      _
    $region113: #{tpu_custom_call.1} parent=1 // pred_fallthru
      _
    // Predicated region
    $region114: #{tpu_custom_call.1} parent=1 // pred_check
      _
    $region115: #{tpu_custom_call.1} parent=1 // pred_check_branch
      %229 = sbr.rel (0) target = $region117
    $region116: #{tpu_custom_call.1} parent=1 // pred_region
      _
    $region117: #{tpu_custom_call.1} parent=1 // pred_fallthru
      _
    // Predicated region
    $region118: #{tpu_custom_call.1} parent=1 // pred_check
      _
    $region119: #{tpu_custom_call.1} parent=1 // pred_check_branch
      %231 = sbr.rel (0) target = $region121
    $region120: #{tpu_custom_call.1} parent=1 // pred_region
      _
    $region121: #{tpu_custom_call.1} parent=1 // pred_fallthru
      _
    // Predicated region
    $region122: #{tpu_custom_call.1} parent=1 // pred_check
      _
    $region123: #{tpu_custom_call.1} parent=1 // pred_check_branch
      %233 = sbr.rel (0) target = $region125
    $region124: #{tpu_custom_call.1} parent=1 // pred_region
      _
    $region125: #{tpu_custom_call.1} parent=1 // pred_fallthru
      _
    // Predicated region
    $region126: #{tpu_custom_call.1} parent=1 // pred_check
      _
    $region127: #{tpu_custom_call.1} parent=1 // pred_check_branch
      %235 = sbr.rel (0) target = $region129
    $region128: #{tpu_custom_call.1} parent=1 // pred_region
      _
    $region129: #{tpu_custom_call.1} parent=1 // pred_fallthru
      _
    // Predicated region
    $region130: #{tpu_custom_call.1} parent=1 // pred_check
      _
    $region131: #{tpu_custom_call.1} parent=1 // pred_check_branch
      %237 = sbr.rel (0) target = $region133
    $region132: #{tpu_custom_call.1} parent=1 // pred_region
      _
    $region133: #{tpu_custom_call.1} parent=1 // pred_fallthru
      _
    // Predicated region
    $region134: #{tpu_custom_call.1} parent=1 // pred_check
      _
    $region135: #{tpu_custom_call.1} parent=1 // pred_check_branch
      %239 = sbr.rel (0) target = $region137
    $region136: #{tpu_custom_call.1} parent=1 // pred_region
      _
    $region137: #{tpu_custom_call.1} parent=1 // pred_fallthru
      _
    // Predicated region
    $region138: #{tpu_custom_call.1} parent=1 // pred_check
      _
    $region139: #{tpu_custom_call.1} parent=1 // pred_check_branch
      %241 = sbr.rel (0) target = $region141
    $region140: #{tpu_custom_call.1} parent=1 // pred_region
      _
    $region141: #{tpu_custom_call.1} parent=1 // pred_fallthru
      _
    // Predicated region
    $region142: #{tpu_custom_call.1} parent=1 // pred_check
      _
    $region143: #{tpu_custom_call.1} parent=1 // pred_check_branch
      %243 = sbr.rel (0) target = $region145
    $region144: #{tpu_custom_call.1} parent=1 // pred_region
      %244 = dma.done [#allocation4], 64
    $region145: #{tpu_custom_call.1} parent=1 // pred_fallthru
      _
    // Predicated region
    $region146: #{tpu_custom_call.1} parent=1 // pred_check
      _
    $region147: #{tpu_custom_call.1} parent=1 // pred_check_branch
      %246 = sbr.rel (0) target = $region149
    $region148: #{tpu_custom_call.1} parent=1 // pred_region
      %247 = dma.done [#allocation6], 32
    $region149: #{tpu_custom_call.1} parent=1 // pred_fallthru
      _
    // Predicated region
    $region150: #{tpu_custom_call.1} parent=1 // pred_check
      _
    $region151: #{tpu_custom_call.1} parent=1 // pred_check_branch
      %249 = sbr.rel (0) target = $region153
    $region152: #{tpu_custom_call.1} parent=1 // pred_region
      %250 = dma.done [#allocation6], 128
    $region153: #{tpu_custom_call.1} parent=1 // pred_fallthru
      _
    // Predicated region
    $region154: #{tpu_custom_call.1} parent=1 // pred_check
      _
    $region155: #{tpu_custom_call.1} parent=1 // pred_check_branch
      %252 = sbr.rel (0) target = $region157
    $region156: #{tpu_custom_call.1} parent=1 // pred_region
      %253 = dma.done [#allocation9], 16
    $region157: #{tpu_custom_call.1} parent=1 // pred_fallthru
      _
    // Predicated region
    $region158: #{tpu_custom_call.1} parent=1 // pred_check
      _
    $region159: #{tpu_custom_call.1} parent=1 // pred_check_branch
      %255 = sbr.rel (0) target = $region161
    $region160: #{tpu_custom_call.1} parent=1 // pred_region
      %256 = dma.done [#allocation9], 16
    $region161: #{tpu_custom_call.1} parent=1 // pred_fallthru
      _
    // Predicated region
    $region162: #{tpu_custom_call.1} parent=1 // pred_check
      _
    $region163: #{tpu_custom_call.1} parent=1 // pred_check_branch
      %258 = sbr.rel (0) target = $region165
    $region164: #{tpu_custom_call.1} parent=1 // pred_region
      %259 = dma.done [#allocation12], 256
    $region165: #{tpu_custom_call.1} parent=1 // pred_fallthru
      _
    // Predicated region
    $region166: #{tpu_custom_call.1} parent=1 // pred_check
      _
    $region167: #{tpu_custom_call.1} parent=1 // pred_check_branch
      %261 = sbr.rel (0) target = $region169
    $region168: #{tpu_custom_call.1} parent=1 // pred_region
      %262 = dma.done [#allocation12], 3968
    $region169: #{tpu_custom_call.1} parent=1 // pred_fallthru
      _
    // Predicated region
    $region170: #{tpu_custom_call.1} parent=1 // pred_check
      _
    $region171: #{tpu_custom_call.1} parent=1 // pred_check_branch
      %264 = sbr.rel (0) target = $region173
    $region172: #{tpu_custom_call.1} parent=1 // pred_region
      %265 = dma.done [#allocation15], 512
    $region173: #{tpu_custom_call.1} parent=1 // pred_fallthru
      _
    // Predicated region
    $region174: #{tpu_custom_call.1} parent=1 // pred_check
      _
    $region175: #{tpu_custom_call.1} parent=1 // pred_check_branch
      %267 = sbr.rel (0) target = $region177
    $region176: #{tpu_custom_call.1} parent=1 // pred_region
      %268 = dma.done [#allocation15], 1024
    $region177: #{tpu_custom_call.1} parent=1 // pred_fallthru
      _
    // Predicated region
    $region178: #{tpu_custom_call.1} parent=1 // pred_check
      _
    $region179: #{tpu_custom_call.1} parent=1 // pred_check_branch
      %270 = sbr.rel (0) target = $region181
    $region180: #{tpu_custom_call.1} parent=1 // pred_region
      %271 = dma.done [#allocation18], 2048
    $region181: #{tpu_custom_call.1} parent=1 // pred_fallthru
      _
    %v273 = vld [vmem:[#allocation3] sm:$0xf]
    %v274 = vld [vmem:[%s3] sm:$0xff]
    %v275 = vld [vmem:[%s3 + $0x8] sm:$0xff]
    %v276 = vld [vmem:[%s3 + $0x10] sm:$0xff]
    %v277 = vld [vmem:[%s3 + $0x18] sm:$0xff]
    %v278 = vld [vmem:[%s3 + $0x20] sm:$0xff]
    %v279 = vld [vmem:[%s3 + $0x28] sm:$0xff]
    %v280 = vld [vmem:[%s3 + $0x30] sm:$0xff]
    %v281 = vld [vmem:[%s3 + $0x38] sm:$0xff]
    %v282 = vld [vmem:[%s3 + $0x40] sm:$0xff]
    %v283 = vld [vmem:[%s3 + $0x48] sm:$0xff]
    %v284 = vld [vmem:[%s3 + $0x50] sm:$0xff]
    %v285 = vld [vmem:[%s3 + $0x58] sm:$0xff]
    %v286 = vld [vmem:[%s3 + $0x60] sm:$0xff]
    %v287 = vld [vmem:[%s3 + $0x68] sm:$0xff]
    %v288 = vld [vmem:[%s3 + $0x70] sm:$0xff]
    %v289 = vld [vmem:[%s3 + $0x78] sm:$0xff]
    %v290 = vld [vmem:[%s3 + $0x80] sm:$0xff]
    %v291 = vld [vmem:[%s3 + $0x88] sm:$0xff]
    %v292 = vld [vmem:[%s3 + $0x90] sm:$0xff]
    %v293 = vld [vmem:[%s3 + $0x98] sm:$0xff]
    %v294 = vld [vmem:[%s3 + $0xa0] sm:$0xff]
    %v295 = vld [vmem:[%s3 + $0xa8] sm:$0xff]
    %v296 = vld [vmem:[%s3 + $0xb0] sm:$0xff]
    %v297 = vld [vmem:[%s3 + $0xb8] sm:$0xff]
    %v298 = vld [vmem:[%s3 + $0xc0] sm:$0xff]
    %v299 = vld [vmem:[%s3 + $0xc8] sm:$0xff]
    %v300 = vld [vmem:[%s3 + $0xd0] sm:$0xff]
    %v301 = vld [vmem:[%s3 + $0xd8] sm:$0xff]
    %v302 = vld [vmem:[%s3 + $0xe0] sm:$0xff]
    %v303 = vld [vmem:[%s3 + $0xe8] sm:$0xff]
    %v304 = vld [vmem:[%s3 + $0xf0] sm:$0xff]
    %v305 = vld [vmem:[%s3 + $0xf8] sm:$0xff]
    %v308 = vunpack.c.l.s4 1983009808
    %v309 = vunpack.c.0.s8 %v308
    %v310 = vlaneseq
    %v311 = vshrl.u32 %v310, 7
    %v312 = vsub.s32 %v309, %v311
    %v313 = vrot.slane %v273, %v312
    %v314 = vcombine.high %v313, %v313
    %v317 = vpack.c.bf16 %v313, %v313
    %v318 = vpack.c.bf16 %v314, %v314
    %v319 = vld [vmem:[#allocation5] sm:$0x3]
    %v321 = vlaneseq
    %v322 = vshrl.u32 %v321, 7
    %v323 = vsub.s32 0, %v322
    %v324 = vrot.slane %v319, %v323
    %v325 = vlaneseq
    %v326 = vshrl.u32 %v325, 7
    %v327 = vsub.s32 1, %v326
    %v328 = vrot.slane %v319, %v327
    %v363 = vunpack.c.l.b16 %v274
    %v364 = vunpack.c.h.b16 %v274
    %v365 = vunpack.c.l.b16 %v275
    %v366 = vunpack.c.h.b16 %v275
    %v367 = vunpack.c.l.b16 %v276
    %v368 = vunpack.c.h.b16 %v276
    %v369 = vunpack.c.l.b16 %v277
    %v370 = vunpack.c.h.b16 %v277
    %v371 = vunpack.c.l.b16 %v278
    %v372 = vunpack.c.h.b16 %v278
    %v373 = vunpack.c.l.b16 %v279
    %v374 = vunpack.c.h.b16 %v279
    %v375 = vunpack.c.l.b16 %v280
    %v376 = vunpack.c.h.b16 %v280
    %v377 = vunpack.c.l.b16 %v281
    %v378 = vunpack.c.h.b16 %v281
    %v379 = vunpack.c.l.b16 %v282
    %v380 = vunpack.c.h.b16 %v282
    %v381 = vunpack.c.l.b16 %v283
    %v382 = vunpack.c.h.b16 %v283
    %v383 = vunpack.c.l.b16 %v284
    %v384 = vunpack.c.h.b16 %v284
    %v385 = vunpack.c.l.b16 %v285
    %v386 = vunpack.c.h.b16 %v285
    %v387 = vunpack.c.l.b16 %v286
    %v388 = vunpack.c.h.b16 %v286
    %v389 = vunpack.c.l.b16 %v287
    %v390 = vunpack.c.h.b16 %v287
    %v391 = vunpack.c.l.b16 %v288
    %v392 = vunpack.c.h.b16 %v288
    %v393 = vunpack.c.l.b16 %v289
    %v394 = vunpack.c.h.b16 %v289
    %v395 = vunpack.c.l.b16 %v290
    %v396 = vunpack.c.h.b16 %v290
    %v397 = vunpack.c.l.b16 %v291
    %v398 = vunpack.c.h.b16 %v291
    %v399 = vunpack.c.l.b16 %v292
    %v400 = vunpack.c.h.b16 %v292
    %v401 = vunpack.c.l.b16 %v293
    %v402 = vunpack.c.h.b16 %v293
    %v403 = vunpack.c.l.b16 %v294
    %v404 = vunpack.c.h.b16 %v294
    %v405 = vunpack.c.l.b16 %v295
    %v406 = vunpack.c.h.b16 %v295
    %v407 = vunpack.c.l.b16 %v296
    %v408 = vunpack.c.h.b16 %v296
    %v409 = vunpack.c.l.b16 %v297
    %v410 = vunpack.c.h.b16 %v297
    %v411 = vunpack.c.l.b16 %v298
    %v412 = vunpack.c.h.b16 %v298
    %v413 = vunpack.c.l.b16 %v299
    %v414 = vunpack.c.h.b16 %v299
    %v415 = vunpack.c.l.b16 %v300
    %v416 = vunpack.c.h.b16 %v300
    %v417 = vunpack.c.l.b16 %v301
    %v418 = vunpack.c.h.b16 %v301
    %v419 = vunpack.c.l.b16 %v302
    %v420 = vunpack.c.h.b16 %v302
    %v421 = vunpack.c.l.b16 %v303
    %v422 = vunpack.c.h.b16 %v303
    %v423 = vunpack.c.l.b16 %v304
    %v424 = vunpack.c.h.b16 %v304
    %v425 = vunpack.c.l.b16 %v305
    %v426 = vunpack.c.h.b16 %v305
    %v427 = vpack.c.b16 %v365, %v363
    %v428 = vpack.c.b16 %v366, %v364
    %v429 = vpack.c.b16 %v369, %v367
    %v430 = vpack.c.b16 %v370, %v368
    %v431 = vpack.c.b16 %v373, %v371
    %v432 = vpack.c.b16 %v374, %v372
    %v433 = vpack.c.b16 %v377, %v375
    %v434 = vpack.c.b16 %v378, %v376
    %v435 = vpack.c.b16 %v381, %v379
    %v436 = vpack.c.b16 %v382, %v380
    %v437 = vpack.c.b16 %v385, %v383
    %v438 = vpack.c.b16 %v386, %v384
    %v439 = vpack.c.b16 %v389, %v387
    %v440 = vpack.c.b16 %v390, %v388
    %v441 = vpack.c.b16 %v393, %v391
    %v442 = vpack.c.b16 %v394, %v392
    %v443 = vpack.c.b16 %v397, %v395
    %v444 = vpack.c.b16 %v398, %v396
    %v445 = vpack.c.b16 %v401, %v399
    %v446 = vpack.c.b16 %v402, %v400
    %v447 = vpack.c.b16 %v405, %v403
    %v448 = vpack.c.b16 %v406, %v404
    %v449 = vpack.c.b16 %v409, %v407
    %v450 = vpack.c.b16 %v410, %v408
    %v451 = vpack.c.b16 %v413, %v411
    %v452 = vpack.c.b16 %v414, %v412
    %v453 = vpack.c.b16 %v417, %v415
    %v454 = vpack.c.b16 %v418, %v416
    %v455 = vpack.c.b16 %v421, %v419
    %v456 = vpack.c.b16 %v422, %v420
    %v457 = vpack.c.b16 %v425, %v423
    %v458 = vpack.c.b16 %v426, %v424
    %491 = vmatprep.subr.bf16.mxu0 %v428
    %492 = vmatpush1.bf16.msra.mxu0 %v427
    %493 = vmatprep.subr.bf16.mxu0 %v430
    %494 = vmatpush1.bf16.msra.mxu0 %v429
    %495 = vmatprep.subr.bf16.mxu0 %v432
    %496 = vmatpush1.bf16.msra.mxu0 %v431
    %497 = vmatprep.subr.bf16.mxu0 %v434
    %498 = vmatpush1.bf16.msra.mxu0 %v433
    %499 = vmatprep.subr.bf16.mxu0 %v436
    %500 = vmatpush1.bf16.msra.mxu0 %v435
    %501 = vmatprep.subr.bf16.mxu0 %v438
    %502 = vmatpush1.bf16.msra.mxu0 %v437
    %503 = vmatprep.subr.bf16.mxu0 %v440
    %504 = vmatpush1.bf16.msra.mxu0 %v439
    %505 = vmatprep.subr.bf16.mxu0 %v442
    %506 = vmatpush1.bf16.msra.mxu0 %v441
    %507 = vmatprep.subr.bf16.mxu0 %v444
    %508 = vmatpush1.bf16.msra.mxu0 %v443
    %509 = vmatprep.subr.bf16.mxu0 %v446
    %510 = vmatpush1.bf16.msra.mxu0 %v445
    %511 = vmatprep.subr.bf16.mxu0 %v448
    %512 = vmatpush1.bf16.msra.mxu0 %v447
    %513 = vmatprep.subr.bf16.mxu0 %v450
    %514 = vmatpush1.bf16.msra.mxu0 %v449
    %515 = vmatprep.subr.bf16.mxu0 %v452
    %516 = vmatpush1.bf16.msra.mxu0 %v451
    %517 = vmatprep.subr.bf16.mxu0 %v454
    %518 = vmatpush1.bf16.msra.mxu0 %v453
    %519 = vmatprep.subr.bf16.mxu0 %v456
    %520 = vmatpush1.bf16.msra.mxu0 %v455
    %521 = vmatprep.subr.bf16.mxu0 %v458
    %522 = vmatpush1.bf16.msra.mxu0 %v457
    %523 = vmatprep.mubr.bf16.mxu0 %v318
    %524 = vmatmul.mubr.bf16.gmra.mrb[0].mxu0 %v317
    %v525 = vpop.f32.mrb[0].mxu0
    %v526 = vadd.f32 %v324, %v525
    %v527 = vpop.f32.mrb[0].mxu0
    %v528 = vadd.f32 %v328, %v527
    %v529 = vpop.f32.mrb[0].mxu0
    %v530 = vpop.f32.mrb[0].mxu0
    %531 = vdwg.mxu0
    %v532 = vmul.f32 %v526, 0.2
    %v533 = vmul.f32 %v528, 0.2
    %v534 = vmax.f32 %v526, %v532
    %v535 = vmax.f32 %v528, %v533
    %v536 = vld [vmem:[%s7] sm:$0xff]
    %v537 = vld [vmem:[%s7 + $0x8] sm:$0xff]
    %v538 = vld [vmem:[%s7 + $0x10] sm:$0xff]
    %v539 = vld [vmem:[%s7 + $0x18] sm:$0xff]
    %v540 = vld [vmem:[%s7 + $0x20] sm:$0xff]
    %v541 = vld [vmem:[%s7 + $0x28] sm:$0xff]
    %v542 = vld [vmem:[%s7 + $0x30] sm:$0xff]
    %v543 = vld [vmem:[%s7 + $0x38] sm:$0xff]
    %v544 = vld [vmem:[%s7 + $0x40] sm:$0xff]
    %v545 = vld [vmem:[%s7 + $0x48] sm:$0xff]
    %v546 = vld [vmem:[%s7 + $0x50] sm:$0xff]
    %v547 = vld [vmem:[%s7 + $0x58] sm:$0xff]
    %v548 = vld [vmem:[%s7 + $0x60] sm:$0xff]
    %v549 = vld [vmem:[%s7 + $0x68] sm:$0xff]
    %v550 = vld [vmem:[%s7 + $0x70] sm:$0xff]
    %v551 = vld [vmem:[%s7 + $0x78] sm:$0xff]
    %v552 = vld [vmem:[%s7 + $0x80] sm:$0xff]
    %v553 = vld [vmem:[%s7 + $0x88] sm:$0xff]
    %v554 = vld [vmem:[%s7 + $0x90] sm:$0xff]
    %v555 = vld [vmem:[%s7 + $0x98] sm:$0xff]
    %v556 = vld [vmem:[%s7 + $0xa0] sm:$0xff]
    %v557 = vld [vmem:[%s7 + $0xa8] sm:$0xff]
    %v558 = vld [vmem:[%s7 + $0xb0] sm:$0xff]
    %v559 = vld [vmem:[%s7 + $0xb8] sm:$0xff]
    %v560 = vld [vmem:[%s7 + $0xc0] sm:$0xff]
    %v561 = vld [vmem:[%s7 + $0xc8] sm:$0xff]
    %v562 = vld [vmem:[%s7 + $0xd0] sm:$0xff]
    %v563 = vld [vmem:[%s7 + $0xd8] sm:$0xff]
    %v564 = vld [vmem:[%s7 + $0xe0] sm:$0xff]
    %v565 = vld [vmem:[%s7 + $0xe8] sm:$0xff]
    %v566 = vld [vmem:[%s7 + $0xf0] sm:$0xff]
    %v567 = vld [vmem:[%s7 + $0xf8] sm:$0x33]
    %v568 = vpack.c.bf16 %v534, %v534
    %v569 = vpack.c.bf16 %v535, %v535
    %v602 = vunpack.c.l.b16 %v536
    %v603 = vunpack.c.h.b16 %v536
    %v604 = vunpack.c.l.b16 %v537
    %v605 = vunpack.c.h.b16 %v537
    %v606 = vunpack.c.l.b16 %v538
    %v607 = vunpack.c.h.b16 %v538
    %v608 = vunpack.c.l.b16 %v539
    %v609 = vunpack.c.h.b16 %v539
    %v610 = vunpack.c.l.b16 %v540
    %v611 = vunpack.c.h.b16 %v540
    %v612 = vunpack.c.l.b16 %v541
    %v613 = vunpack.c.h.b16 %v541
    %v614 = vunpack.c.l.b16 %v542
    %v615 = vunpack.c.h.b16 %v542
    %v616 = vunpack.c.l.b16 %v543
    %v617 = vunpack.c.h.b16 %v543
    %v618 = vunpack.c.l.b16 %v544
    %v619 = vunpack.c.h.b16 %v544
    %v620 = vunpack.c.l.b16 %v545
    %v621 = vunpack.c.h.b16 %v545
    %v622 = vunpack.c.l.b16 %v546
    %v623 = vunpack.c.h.b16 %v546
    %v624 = vunpack.c.l.b16 %v547
    %v625 = vunpack.c.h.b16 %v547
    %v626 = vunpack.c.l.b16 %v548
    %v627 = vunpack.c.h.b16 %v548
    %v628 = vunpack.c.l.b16 %v549
    %v629 = vunpack.c.h.b16 %v549
    %v630 = vunpack.c.l.b16 %v550
    %v631 = vunpack.c.h.b16 %v550
    %v632 = vunpack.c.l.b16 %v551
    %v633 = vunpack.c.h.b16 %v551
    %v634 = vunpack.c.l.b16 %v552
    %v635 = vunpack.c.h.b16 %v552
    %v636 = vunpack.c.l.b16 %v553
    %v637 = vunpack.c.h.b16 %v553
    %v638 = vunpack.c.l.b16 %v554
    %v639 = vunpack.c.h.b16 %v554
    %v640 = vunpack.c.l.b16 %v555
    %v641 = vunpack.c.h.b16 %v555
    %v642 = vunpack.c.l.b16 %v556
    %v643 = vunpack.c.h.b16 %v556
    %v644 = vunpack.c.l.b16 %v557
    %v645 = vunpack.c.h.b16 %v557
    %v646 = vunpack.c.l.b16 %v558
    %v647 = vunpack.c.h.b16 %v558
    %v648 = vunpack.c.l.b16 %v559
    %v649 = vunpack.c.h.b16 %v559
    %v650 = vunpack.c.l.b16 %v560
    %v651 = vunpack.c.h.b16 %v560
    %v652 = vunpack.c.l.b16 %v561
    %v653 = vunpack.c.h.b16 %v561
    %v654 = vunpack.c.l.b16 %v562
    %v655 = vunpack.c.h.b16 %v562
    %v656 = vunpack.c.l.b16 %v563
    %v657 = vunpack.c.h.b16 %v563
    %v658 = vunpack.c.l.b16 %v564
    %v659 = vunpack.c.h.b16 %v564
    %v660 = vunpack.c.l.b16 %v565
    %v661 = vunpack.c.h.b16 %v565
    %v662 = vunpack.c.l.b16 %v566
    %v663 = vunpack.c.h.b16 %v566
    %v664 = vunpack.c.l.b16 %v567
    %v665 = vunpack.c.h.b16 %v567
    %v666 = vpack.c.b16 %v604, %v602
    %v667 = vpack.c.b16 %v605, %v603
    %v668 = vpack.c.b16 %v608, %v606
    %v669 = vpack.c.b16 %v609, %v607
    %v670 = vpack.c.b16 %v612, %v610
    %v671 = vpack.c.b16 %v613, %v611
    %v672 = vpack.c.b16 %v616, %v614
    %v673 = vpack.c.b16 %v617, %v615
    %v674 = vpack.c.b16 %v620, %v618
    %v675 = vpack.c.b16 %v621, %v619
    %v676 = vpack.c.b16 %v624, %v622
    %v677 = vpack.c.b16 %v625, %v623
    %v678 = vpack.c.b16 %v628, %v626
    %v679 = vpack.c.b16 %v629, %v627
    %v680 = vpack.c.b16 %v632, %v630
    %v681 = vpack.c.b16 %v633, %v631
    %v682 = vpack.c.b16 %v636, %v634
    %v683 = vpack.c.b16 %v637, %v635
    %v684 = vpack.c.b16 %v640, %v638
    %v685 = vpack.c.b16 %v641, %v639
    %v686 = vpack.c.b16 %v644, %v642
    %v687 = vpack.c.b16 %v645, %v643
    %v688 = vpack.c.b16 %v648, %v646
    %v689 = vpack.c.b16 %v649, %v647
    %v690 = vpack.c.b16 %v652, %v650
    %v691 = vpack.c.b16 %v653, %v651
    %v692 = vpack.c.b16 %v656, %v654
    %v693 = vpack.c.b16 %v657, %v655
    %v694 = vpack.c.b16 %v660, %v658
    %v695 = vpack.c.b16 %v661, %v659
    %v696 = vpack.c.b16 %v664, %v662
    %v697 = vpack.c.b16 %v665, %v663
    %vm728 = vcmask 1014784
    %v730 = vsel %vm728, %v569, 0
    %vm732 = vcmask 1045504
    %v734 = vsel %vm732, %v696, 0
    %v737 = vsel %vm732, %v697, 0
    %739 = vmatprep.subr.bf16.mxu0 %v667
    %740 = vmatpush1.bf16.msra.mxu0 %v666
    %741 = vmatprep.subr.bf16.mxu0 %v669
    %742 = vmatpush1.bf16.msra.mxu0 %v668
    %743 = vmatprep.subr.bf16.mxu0 %v671
    %744 = vmatpush1.bf16.msra.mxu0 %v670
    %745 = vmatprep.subr.bf16.mxu0 %v673
    %746 = vmatpush1.bf16.msra.mxu0 %v672
    %747 = vmatprep.subr.bf16.mxu0 %v675
    %748 = vmatpush1.bf16.msra.mxu0 %v674
    %749 = vmatprep.subr.bf16.mxu0 %v677
    %750 = vmatpush1.bf16.msra.mxu0 %v676
    %751 = vmatprep.subr.bf16.mxu0 %v679
    %752 = vmatpush1.bf16.msra.mxu0 %v678
    %753 = vmatprep.subr.bf16.mxu0 %v681
    %754 = vmatpush1.bf16.msra.mxu0 %v680
    %755 = vmatprep.subr.bf16.mxu0 %v683
    %756 = vmatpush1.bf16.msra.mxu0 %v682
    %757 = vmatprep.subr.bf16.mxu0 %v685
    %758 = vmatpush1.bf16.msra.mxu0 %v684
    %759 = vmatprep.subr.bf16.mxu0 %v687
    %760 = vmatpush1.bf16.msra.mxu0 %v686
    %761 = vmatprep.subr.bf16.mxu0 %v689
    %762 = vmatpush1.bf16.msra.mxu0 %v688
    %763 = vmatprep.subr.bf16.mxu0 %v691
    %764 = vmatpush1.bf16.msra.mxu0 %v690
    %765 = vmatprep.subr.bf16.mxu0 %v693
    %766 = vmatpush1.bf16.msra.mxu0 %v692
    %767 = vmatprep.subr.bf16.mxu0 %v695
    %768 = vmatpush1.bf16.msra.mxu0 %v694
    %769 = vmatprep.subr.bf16.mxu0 %v737
    %770 = vmatpush1.bf16.msra.mxu0 %v734
    %771 = vmatprep.mubr.bf16.mxu0 %v730
    %772 = vmatmul.mubr.bf16.gmra.mrb[0].mxu0 %v568
    %v773 = vpop.f32.mrb[0].mxu0
    %v774 = vadd.f32 0.0, %v773
    %v775 = vpop.f32.mrb[0].mxu0
    %v776 = vadd.f32 0.0, %v775
    %v777 = vpop.f32.mrb[0].mxu0
    %v778 = vpop.f32.mrb[0].mxu0
    %779 = vdwg.mxu0
    %v780 = vld [vmem:[%s9] sm:$0xff]
    %v781 = vld [vmem:[%s9 + $0x8] sm:$0xff]
    %v782 = vld [vmem:[%s9 + $0x10] sm:$0xff]
    %v783 = vld [vmem:[%s9 + $0x18] sm:$0xff]
    %v784 = vld [vmem:[%s9 + $0x20] sm:$0xff]
    %v785 = vld [vmem:[%s9 + $0x28] sm:$0xff]
    %v786 = vld [vmem:[%s9 + $0x30] sm:$0xff]
    %v787 = vld [vmem:[%s9 + $0x38] sm:$0xff]
    %v788 = vld [vmem:[%s9 + $0x40] sm:$0xff]
    %v789 = vld [vmem:[%s9 + $0x48] sm:$0xff]
    %v790 = vld [vmem:[%s9 + $0x50] sm:$0xff]
    %v791 = vld [vmem:[%s9 + $0x58] sm:$0xff]
    %v792 = vld [vmem:[%s9 + $0x60] sm:$0xff]
    %v793 = vld [vmem:[%s9 + $0x68] sm:$0xff]
    %v794 = vld [vmem:[%s9 + $0x70] sm:$0xff]
    %v795 = vld [vmem:[%s9 + $0x78] sm:$0xff]
    %v796 = vld [vmem:[%s9 + $0x80] sm:$0xff]
    %v797 = vld [vmem:[%s9 + $0x88] sm:$0xff]
    %v798 = vld [vmem:[%s9 + $0x90] sm:$0xff]
    %v799 = vld [vmem:[%s9 + $0x98] sm:$0xff]
    %v800 = vld [vmem:[%s9 + $0xa0] sm:$0xff]
    %v801 = vld [vmem:[%s9 + $0xa8] sm:$0xff]
    %v802 = vld [vmem:[%s9 + $0xb0] sm:$0xff]
    %v803 = vld [vmem:[%s9 + $0xb8] sm:$0xff]
    %v804 = vld [vmem:[%s9 + $0xc0] sm:$0xff]
    %v805 = vld [vmem:[%s9 + $0xc8] sm:$0xff]
    %v806 = vld [vmem:[%s9 + $0xd0] sm:$0xff]
    %v807 = vld [vmem:[%s9 + $0xd8] sm:$0xff]
    %v808 = vld [vmem:[%s9 + $0xe0] sm:$0xff]
    %v809 = vld [vmem:[%s9 + $0xe8] sm:$0xff]
    %v810 = vld [vmem:[%s9 + $0xf0] sm:$0xff]
    %v811 = vld [vmem:[#allocation7] sm:$0xff]
    %v812 = vld [vmem:[#allocation8] sm:$0x1]
    %v813 = vld [vmem:[#allocation10] sm:$0x1]
    %vm814 = vcmask 1041408
    %v815 = vsel %vm814, %v774, 0.0
    %v816 = vrot.slane %v815, 4
    %v817 = vadd.f32 %v815, %v816
    %v818 = vrot.slane %v817, 2
    %v819 = vadd.f32 %v817, %v818
    %v820 = vrot.slane %v819, 1
    %v821 = vadd.f32 %v819, %v820
    %vm822 = vcmask 975872
    %v823 = vsel %vm822, %v776, 0.0
    %v824 = vrot.slane %v823, 4
    %v825 = vadd.f32 %v823, %v824
    %v826 = vrot.slane %v825, 2
    %v827 = vadd.f32 %v825, %v826
    %v828 = vrot.slane %v827, 1
    %v829 = vadd.f32 %v827, %v828
    %v830 = vmul.f32 %v774, %v774
    %v831 = vmul.f32 %v776, %v776
    %v832 = vsel %vm814, %v830, 0.0
    %v833 = vrot.slane %v832, 4
    %v834 = vadd.f32 %v832, %v833
    %v835 = vrot.slane %v834, 2
    %v836 = vadd.f32 %v834, %v835
    %v837 = vrot.slane %v836, 1
    %v838 = vadd.f32 %v836, %v837
    %v839 = vsel %vm822, %v831, 0.0
    %v840 = vrot.slane %v839, 4
    %v841 = vadd.f32 %v839, %v840
    %v842 = vrot.slane %v841, 2
    %v843 = vadd.f32 %v841, %v842
    %v844 = vrot.slane %v843, 1
    %v845 = vadd.f32 %v843, %v844
    %vm846 = vcmask 982016
    %v848 = vsel %vm846, %v829, 0
    %850 = vmatprep.subr.mxu0 0.0
    %851 = vmatpush1.msra.mxu0 %v780
    %852 = vmatprep.subr.mxu0 0.0
    %853 = vmatpush1.msra.mxu0 %v781
    %854 = vmatprep.subr.mxu0 0.0
    %855 = vmatpush1.msra.mxu0 %v782
    %856 = vmatprep.subr.mxu0 0.0
    %857 = vmatpush1.msra.mxu0 %v783
    %858 = vmatprep.subr.mxu0 0.0
    %859 = vmatpush1.msra.mxu0 %v784
    %860 = vmatprep.subr.mxu0 0.0
    %861 = vmatpush1.msra.mxu0 %v785
    %862 = vmatprep.subr.mxu0 0.0
    %863 = vmatpush1.msra.mxu0 %v786
    %864 = vmatprep.subr.mxu0 0.0
    %865 = vmatpush1.msra.mxu0 %v787
    %866 = vmatprep.subr.mxu0 0.0
    %867 = vmatpush1.msra.mxu0 %v788
    %868 = vmatprep.subr.mxu0 0.0
    %869 = vmatpush1.msra.mxu0 %v789
    %870 = vmatprep.subr.mxu0 0.0
    %871 = vmatpush1.msra.mxu0 %v790
    %872 = vmatprep.subr.mxu0 0.0
    %873 = vmatpush1.msra.mxu0 %v791
    %874 = vmatprep.subr.mxu0 0.0
    %875 = vmatpush1.msra.mxu0 %v792
    %876 = vmatprep.subr.mxu0 0.0
    %877 = vmatpush1.msra.mxu0 %v793
    %878 = vmatprep.subr.mxu0 0.0
    %879 = vmatpush1.msra.mxu0 %v794
    %880 = vmatprep.subr.mxu0 0.0
    %881 = vmatpush1.msra.mxu0 %v795
    %882 = vmatprep.subr.mxu0 0.0
    %883 = vmatpush1.msra.mxu0 %v796
    %884 = vmatprep.subr.mxu0 0.0
    %885 = vmatpush1.msra.mxu0 %v797
    %886 = vmatprep.subr.mxu0 0.0
    %887 = vmatpush1.msra.mxu0 %v798
    %888 = vmatprep.subr.mxu0 0.0
    %889 = vmatpush1.msra.mxu0 %v799
    %890 = vmatprep.subr.mxu0 0.0
    %891 = vmatpush1.msra.mxu0 %v800
    %892 = vmatprep.subr.mxu0 0.0
    %893 = vmatpush1.msra.mxu0 %v801
    %894 = vmatprep.subr.mxu0 0.0
    %895 = vmatpush1.msra.mxu0 %v802
    %896 = vmatprep.subr.mxu0 0.0
    %897 = vmatpush1.msra.mxu0 %v803
    %898 = vmatprep.subr.mxu0 0.0
    %899 = vmatpush1.msra.mxu0 %v804
    %900 = vmatprep.subr.mxu0 0.0
    %901 = vmatpush1.msra.mxu0 %v805
    %902 = vmatprep.subr.mxu0 0.0
    %903 = vmatpush1.msra.mxu0 %v806
    %904 = vmatprep.subr.mxu0 0.0
    %905 = vmatpush1.msra.mxu0 %v807
    %906 = vmatprep.subr.mxu0 0.0
    %907 = vmatpush1.msra.mxu0 %v808
    %908 = vmatprep.subr.mxu0 0.0
    %909 = vmatpush1.msra.mxu0 %v809
    %910 = vmatprep.subr.mxu0 0.0
    %911 = vmatpush1.msra.mxu0 %v810
    %912 = vmatprep.subr.mxu0 0.0
    %913 = vmatpush1.msra.mxu0 0.0
    %914 = vmatprep.mubr.f32.mxu0 %v848
    %915 = vmatmul.mubr.f32.gmra.mrb[0].mxu0 %v821
    %v916 = vpop.f32.mrb[0].mxu0
    %v917 = vadd.f32 0.0, %v916
    %v918 = vpop.f32.mrb[0].mxu0
    %919 = vdwg.mxu0
    %v921 = vsel %vm846, %v845, 0
    %923 = vmatprep.subr.mxu0 0.0
    %924 = vmatpush1.msra.mxu0 %v780
    %925 = vmatprep.subr.mxu0 0.0
    %926 = vmatpush1.msra.mxu0 %v781
    %927 = vmatprep.subr.mxu0 0.0
    %928 = vmatpush1.msra.mxu0 %v782
    %929 = vmatprep.subr.mxu0 0.0
    %930 = vmatpush1.msra.mxu0 %v783
    %931 = vmatprep.subr.mxu0 0.0
    %932 = vmatpush1.msra.mxu0 %v784
    %933 = vmatprep.subr.mxu0 0.0
    %934 = vmatpush1.msra.mxu0 %v785
    %935 = vmatprep.subr.mxu0 0.0
    %936 = vmatpush1.msra.mxu0 %v786
    %937 = vmatprep.subr.mxu0 0.0
    %938 = vmatpush1.msra.mxu0 %v787
    %939 = vmatprep.subr.mxu0 0.0
    %940 = vmatpush1.msra.mxu0 %v788
    %941 = vmatprep.subr.mxu0 0.0
    %942 = vmatpush1.msra.mxu0 %v789
    %943 = vmatprep.subr.mxu0 0.0
    %944 = vmatpush1.msra.mxu0 %v790
    %945 = vmatprep.subr.mxu0 0.0
    %946 = vmatpush1.msra.mxu0 %v791
    %947 = vmatprep.subr.mxu0 0.0
    %948 = vmatpush1.msra.mxu0 %v792
    %949 = vmatprep.subr.mxu0 0.0
    %950 = vmatpush1.msra.mxu0 %v793
    %951 = vmatprep.subr.mxu0 0.0
    %952 = vmatpush1.msra.mxu0 %v794
    %953 = vmatprep.subr.mxu0 0.0
    %954 = vmatpush1.msra.mxu0 %v795
    %955 = vmatprep.subr.mxu0 0.0
    %956 = vmatpush1.msra.mxu0 %v796
    %957 = vmatprep.subr.mxu0 0.0
    %958 = vmatpush1.msra.mxu0 %v797
    %959 = vmatprep.subr.mxu0 0.0
    %960 = vmatpush1.msra.mxu0 %v798
    %961 = vmatprep.subr.mxu0 0.0
    %962 = vmatpush1.msra.mxu0 %v799
    %963 = vmatprep.subr.mxu0 0.0
    %964 = vmatpush1.msra.mxu0 %v800
    %965 = vmatprep.subr.mxu0 0.0
    %966 = vmatpush1.msra.mxu0 %v801
    %967 = vmatprep.subr.mxu0 0.0
    %968 = vmatpush1.msra.mxu0 %v802
    %969 = vmatprep.subr.mxu0 0.0
    %970 = vmatpush1.msra.mxu0 %v803
    %971 = vmatprep.subr.mxu0 0.0
    %972 = vmatpush1.msra.mxu0 %v804
    %973 = vmatprep.subr.mxu0 0.0
    %974 = vmatpush1.msra.mxu0 %v805
    %975 = vmatprep.subr.mxu0 0.0
    %976 = vmatpush1.msra.mxu0 %v806
    %977 = vmatprep.subr.mxu0 0.0
    %978 = vmatpush1.msra.mxu0 %v807
    %979 = vmatprep.subr.mxu0 0.0
    %980 = vmatpush1.msra.mxu0 %v808
    %981 = vmatprep.subr.mxu0 0.0
    %982 = vmatpush1.msra.mxu0 %v809
    %983 = vmatprep.subr.mxu0 0.0
    %984 = vmatpush1.msra.mxu0 %v810
    %985 = vmatprep.subr.mxu0 0.0
    %986 = vmatpush1.msra.mxu0 0.0
    %987 = vmatprep.mubr.f32.mxu0 %v921
    %988 = vmatmul.mubr.f32.gmra.mrb[0].mxu0 %v838
    %v989 = vpop.f32.mrb[0].mxu0
    %v990 = vadd.f32 0.0, %v989
    %v991 = vpop.f32.mrb[0].mxu0
    %992 = vdwg.mxu0
    %v993 = vmul.f32 %v917, 0.008064516
    %v994 = vmul.f32 %v990, 0.008064516
    %v995 = vmul.f32 %v993, %v993
    %v996 = vsub.f32 %v994, %v995
    %v997 = vmax.f32 %v996, 0.0
    %v998 = vadd.f32 %v997, 1e-05
    %v999 = vrsqrt.pop %v998
    %v1000 = vmul.f32 %v812, %v999
    %v1001 = vmul.f32 %v993, %v1000
    %v1002 = vsub.f32 %v813, %v1001
    %v1004 = vcombine.high %v811, %v811
    %vm1005 = vcmask 31744
    %v1007 = vsel %vm1005, %v1000, 0
    %vm1009 = vcmask 1043456
    %v1010 = vsel %vm1009, %v811, 0
    %v1012 = vsel %vm1009, %v1004, 0
    %1014 = vmatprep.subr.mxu0 %v1012
    %1015 = vmatpush1.msra.mxu0 %v1010
    %1016 = vmatprep.subr.mxu0 0.0
    %1017 = vmatpush1.msra.mxu0 0.0
    %1018 = vmatprep.subr.mxu0 0.0
    %1019 = vmatpush1.msra.mxu0 0.0
    %1020 = vmatprep.subr.mxu0 0.0
    %1021 = vmatpush1.msra.mxu0 0.0
    %1022 = vmatprep.subr.mxu0 0.0
    %1023 = vmatpush1.msra.mxu0 0.0
    %1024 = vmatprep.subr.mxu0 0.0
    %1025 = vmatpush1.msra.mxu0 0.0
    %1026 = vmatprep.subr.mxu0 0.0
    %1027 = vmatpush1.msra.mxu0 0.0
    %1028 = vmatprep.subr.mxu0 0.0
    %1029 = vmatpush1.msra.mxu0 0.0
    %1030 = vmatprep.subr.mxu0 0.0
    %1031 = vmatpush1.msra.mxu0 0.0
    %1032 = vmatprep.subr.mxu0 0.0
    %1033 = vmatpush1.msra.mxu0 0.0
    %1034 = vmatprep.subr.mxu0 0.0
    %1035 = vmatpush1.msra.mxu0 0.0
    %1036 = vmatprep.subr.mxu0 0.0
    %1037 = vmatpush1.msra.mxu0 0.0
    %1038 = vmatprep.subr.mxu0 0.0
    %1039 = vmatpush1.msra.mxu0 0.0
    %1040 = vmatprep.subr.mxu0 0.0
    %1041 = vmatpush1.msra.mxu0 0.0
    %1042 = vmatprep.subr.mxu0 0.0
    %1043 = vmatpush1.msra.mxu0 0.0
    %1044 = vmatprep.subr.mxu0 0.0
    %1045 = vmatpush1.msra.mxu0 0.0
    %1046 = vmatprep.subr.mxu0 0.0
    %1047 = vmatpush1.msra.mxu0 0.0
    %1048 = vmatprep.subr.mxu0 0.0
    %1049 = vmatpush1.msra.mxu0 0.0
    %1050 = vmatprep.subr.mxu0 0.0
    %1051 = vmatpush1.msra.mxu0 0.0
    %1052 = vmatprep.subr.mxu0 0.0
    %1053 = vmatpush1.msra.mxu0 0.0
    %1054 = vmatprep.subr.mxu0 0.0
    %1055 = vmatpush1.msra.mxu0 0.0
    %1056 = vmatprep.subr.mxu0 0.0
    %1057 = vmatpush1.msra.mxu0 0.0
    %1058 = vmatprep.subr.mxu0 0.0
    %1059 = vmatpush1.msra.mxu0 0.0
    %1060 = vmatprep.subr.mxu0 0.0
    %1061 = vmatpush1.msra.mxu0 0.0
    %1062 = vmatprep.subr.mxu0 0.0
    %1063 = vmatpush1.msra.mxu0 0.0
    %1064 = vmatprep.subr.mxu0 0.0
    %1065 = vmatpush1.msra.mxu0 0.0
    %1066 = vmatprep.subr.mxu0 0.0
    %1067 = vmatpush1.msra.mxu0 0.0
    %1068 = vmatprep.subr.mxu0 0.0
    %1069 = vmatpush1.msra.mxu0 0.0
    %1070 = vmatprep.subr.mxu0 0.0
    %1071 = vmatpush1.msra.mxu0 0.0
    %1072 = vmatprep.subr.mxu0 0.0
    %1073 = vmatpush1.msra.mxu0 0.0
    %1074 = vmatprep.subr.mxu0 0.0
    %1075 = vmatpush1.msra.mxu0 0.0
    %1076 = vmatprep.subr.mxu0 0.0
    %1077 = vmatpush1.msra.mxu0 0.0
    %1078 = vmatprep.mubr.f32.mxu0 0.0
    %1079 = vmatmul.mubr.f32.gmra.mrb[0].mxu0 %v1007
    %v1080 = vpop.f32.mrb[0].mxu0
    %v1081 = vadd.f32 0.0, %v1080
    %v1082 = vpop.f32.mrb[0].mxu0
    %v1083 = vadd.f32 0.0, %v1082
    %1084 = vdwg.mxu0
    %v1086 = vsel %vm1005, %v1002, 0
    %1088 = vmatprep.subr.mxu0 %v1012
    %1089 = vmatpush1.msra.mxu0 %v1010
    %1090 = vmatprep.subr.mxu0 0.0
    %1091 = vmatpush1.msra.mxu0 0.0
    %1092 = vmatprep.subr.mxu0 0.0
    %1093 = vmatpush1.msra.mxu0 0.0
    %1094 = vmatprep.subr.mxu0 0.0
    %1095 = vmatpush1.msra.mxu0 0.0
    %1096 = vmatprep.subr.mxu0 0.0
    %1097 = vmatpush1.msra.mxu0 0.0
    %1098 = vmatprep.subr.mxu0 0.0
    %1099 = vmatpush1.msra.mxu0 0.0
    %1100 = vmatprep.subr.mxu0 0.0
    %1101 = vmatpush1.msra.mxu0 0.0
    %1102 = vmatprep.subr.mxu0 0.0
    %1103 = vmatpush1.msra.mxu0 0.0
    %1104 = vmatprep.subr.mxu0 0.0
    %1105 = vmatpush1.msra.mxu0 0.0
    %1106 = vmatprep.subr.mxu0 0.0
    %1107 = vmatpush1.msra.mxu0 0.0
    %1108 = vmatprep.subr.mxu0 0.0
    %1109 = vmatpush1.msra.mxu0 0.0
    %1110 = vmatprep.subr.mxu0 0.0
    %1111 = vmatpush1.msra.mxu0 0.0
    %1112 = vmatprep.subr.mxu0 0.0
    %1113 = vmatpush1.msra.mxu0 0.0
    %1114 = vmatprep.subr.mxu0 0.0
    %1115 = vmatpush1.msra.mxu0 0.0
    %1116 = vmatprep.subr.mxu0 0.0
    %1117 = vmatpush1.msra.mxu0 0.0
    %1118 = vmatprep.subr.mxu0 0.0
    %1119 = vmatpush1.msra.mxu0 0.0
    %1120 = vmatprep.subr.mxu0 0.0
    %1121 = vmatpush1.msra.mxu0 0.0
    %1122 = vmatprep.subr.mxu0 0.0
    %1123 = vmatpush1.msra.mxu0 0.0
    %1124 = vmatprep.subr.mxu0 0.0
    %1125 = vmatpush1.msra.mxu0 0.0
    %1126 = vmatprep.subr.mxu0 0.0
    %1127 = vmatpush1.msra.mxu0 0.0
    %1128 = vmatprep.subr.mxu0 0.0
    %1129 = vmatpush1.msra.mxu0 0.0
    %1130 = vmatprep.subr.mxu0 0.0
    %1131 = vmatpush1.msra.mxu0 0.0
    %1132 = vmatprep.subr.mxu0 0.0
    %1133 = vmatpush1.msra.mxu0 0.0
    %1134 = vmatprep.subr.mxu0 0.0
    %1135 = vmatpush1.msra.mxu0 0.0
    %1136 = vmatprep.subr.mxu0 0.0
    %1137 = vmatpush1.msra.mxu0 0.0
    %1138 = vmatprep.subr.mxu0 0.0
    %1139 = vmatpush1.msra.mxu0 0.0
    %1140 = vmatprep.subr.mxu0 0.0
    %1141 = vmatpush1.msra.mxu0 0.0
    %1142 = vmatprep.subr.mxu0 0.0
    %1143 = vmatpush1.msra.mxu0 0.0
    %1144 = vmatprep.subr.mxu0 0.0
    %1145 = vmatpush1.msra.mxu0 0.0
    %1146 = vmatprep.subr.mxu0 0.0
    %1147 = vmatpush1.msra.mxu0 0.0
    %1148 = vmatprep.subr.mxu0 0.0
    %1149 = vmatpush1.msra.mxu0 0.0
    %1150 = vmatprep.subr.mxu0 0.0
    %1151 = vmatpush1.msra.mxu0 0.0
    %1152 = vmatprep.mubr.f32.mxu0 0.0
    %1153 = vmatmul.mubr.f32.gmra.mrb[0].mxu0 %v1086
    %v1154 = vpop.f32.mrb[0].mxu0
    %v1155 = vadd.f32 0.0, %v1154
    %v1156 = vpop.f32.mrb[0].mxu0
    %v1157 = vadd.f32 0.0, %v1156
    %1158 = vdwg.mxu0
    %v1159 = vlaneseq
    %v1160 = vshrl.u32 %v1159, 7
    %v1161 = vsub.s32 0, %v1160
    %v1162 = vrot.slane %v1081, %v1161
    %v1163 = vlaneseq
    %v1164 = vshrl.u32 %v1163, 7
    %v1165 = vsub.s32 0, %v1164
    %v1166 = vrot.slane %v1083, %v1165
    %v1167 = vmul.f32 %v774, %v1162
    %v1168 = vmul.f32 %v776, %v1166
    %v1169 = vlaneseq
    %v1170 = vshrl.u32 %v1169, 7
    %v1171 = vsub.s32 0, %v1170
    %v1172 = vrot.slane %v1155, %v1171
    %v1173 = vlaneseq
    %v1174 = vshrl.u32 %v1173, 7
    %v1175 = vsub.s32 0, %v1174
    %v1176 = vrot.slane %v1157, %v1175
    %v1177 = vadd.f32 %v1167, %v1172
    %v1178 = vadd.f32 %v1168, %v1176
    %v1179 = vmul.f32 %v1177, 0.2
    %v1180 = vmul.f32 %v1178, 0.2
    %v1181 = vmax.f32 %v1177, %v1179
    %v1182 = vmax.f32 %v1178, %v1180
    %v1183 = vld [vmem:[%s17] sm:$0xff]
    %v1184 = vld [vmem:[%s17 + $0x8] sm:$0xff]
    %v1185 = vld [vmem:[%s17 + $0x10] sm:$0xff]
    %v1186 = vld [vmem:[%s17 + $0x18] sm:$0xff]
    %v1187 = vld [vmem:[%s17 + $0x20] sm:$0xff]
    %v1188 = vld [vmem:[%s17 + $0x28] sm:$0xff]
    %v1189 = vld [vmem:[%s17 + $0x30] sm:$0xff]
    %v1190 = vld [vmem:[%s17 + $0x38] sm:$0xff]
    %v1191 = vld [vmem:[%s17 + $0x40] sm:$0xff]
    %v1192 = vld [vmem:[%s17 + $0x48] sm:$0xff]
    %v1193 = vld [vmem:[%s17 + $0x50] sm:$0xff]
    %v1194 = vld [vmem:[%s17 + $0x58] sm:$0xff]
    %v1195 = vld [vmem:[%s17 + $0x60] sm:$0xff]
    %v1196 = vld [vmem:[%s17 + $0x68] sm:$0xff]
    %v1197 = vld [vmem:[%s17 + $0x70] sm:$0xff]
    %v1198 = vld [vmem:[%s17 + $0x78] sm:$0xff]
    %v1199 = vld [vmem:[%s17 + $0x80] sm:$0xff]
    %v1200 = vld [vmem:[%s17 + $0x88] sm:$0xff]
    %v1201 = vld [vmem:[%s17 + $0x90] sm:$0xff]
    %v1202 = vld [vmem:[%s17 + $0x98] sm:$0xff]
    %v1203 = vld [vmem:[%s17 + $0xa0] sm:$0xff]
    %v1204 = vld [vmem:[%s17 + $0xa8] sm:$0xff]
    %v1205 = vld [vmem:[%s17 + $0xb0] sm:$0xff]
    %v1206 = vld [vmem:[%s17 + $0xb8] sm:$0xff]
    %v1207 = vld [vmem:[%s17 + $0xc0] sm:$0xff]
    %v1208 = vld [vmem:[%s17 + $0xc8] sm:$0xff]
    %v1209 = vld [vmem:[%s17 + $0xd0] sm:$0xff]
    %v1210 = vld [vmem:[%s17 + $0xd8] sm:$0xff]
    %v1211 = vld [vmem:[%s17 + $0xe0] sm:$0xff]
    %v1212 = vld [vmem:[%s17 + $0xe8] sm:$0xff]
    %v1213 = vld [vmem:[%s17 + $0xf0] sm:$0xff]
    %v1214 = vpack.c.bf16 %v1181, %v1181
    %v1215 = vpack.c.bf16 %v1182, %v1182
    %v1247 = vunpack.c.l.b16 %v1183
    %v1248 = vunpack.c.h.b16 %v1183
    %v1249 = vunpack.c.l.b16 %v1184
    %v1250 = vunpack.c.h.b16 %v1184
    %v1251 = vunpack.c.l.b16 %v1185
    %v1252 = vunpack.c.h.b16 %v1185
    %v1253 = vunpack.c.l.b16 %v1186
    %v1254 = vunpack.c.h.b16 %v1186
    %v1255 = vunpack.c.l.b16 %v1187
    %v1256 = vunpack.c.h.b16 %v1187
    %v1257 = vunpack.c.l.b16 %v1188
    %v1258 = vunpack.c.h.b16 %v1188
    %v1259 = vunpack.c.l.b16 %v1189
    %v1260 = vunpack.c.h.b16 %v1189
    %v1261 = vunpack.c.l.b16 %v1190
    %v1262 = vunpack.c.h.b16 %v1190
    %v1263 = vunpack.c.l.b16 %v1191
    %v1264 = vunpack.c.h.b16 %v1191
    %v1265 = vunpack.c.l.b16 %v1192
    %v1266 = vunpack.c.h.b16 %v1192
    %v1267 = vunpack.c.l.b16 %v1193
    %v1268 = vunpack.c.h.b16 %v1193
    %v1269 = vunpack.c.l.b16 %v1194
    %v1270 = vunpack.c.h.b16 %v1194
    %v1271 = vunpack.c.l.b16 %v1195
    %v1272 = vunpack.c.h.b16 %v1195
    %v1273 = vunpack.c.l.b16 %v1196
    %v1274 = vunpack.c.h.b16 %v1196
    %v1275 = vunpack.c.l.b16 %v1197
    %v1276 = vunpack.c.h.b16 %v1197
    %v1277 = vunpack.c.l.b16 %v1198
    %v1278 = vunpack.c.h.b16 %v1198
    %v1279 = vunpack.c.l.b16 %v1199
    %v1280 = vunpack.c.h.b16 %v1199
    %v1281 = vunpack.c.l.b16 %v1200
    %v1282 = vunpack.c.h.b16 %v1200
    %v1283 = vunpack.c.l.b16 %v1201
    %v1284 = vunpack.c.h.b16 %v1201
    %v1285 = vunpack.c.l.b16 %v1202
    %v1286 = vunpack.c.h.b16 %v1202
    %v1287 = vunpack.c.l.b16 %v1203
    %v1288 = vunpack.c.h.b16 %v1203
    %v1289 = vunpack.c.l.b16 %v1204
    %v1290 = vunpack.c.h.b16 %v1204
    %v1291 = vunpack.c.l.b16 %v1205
    %v1292 = vunpack.c.h.b16 %v1205
    %v1293 = vunpack.c.l.b16 %v1206
    %v1294 = vunpack.c.h.b16 %v1206
    %v1295 = vunpack.c.l.b16 %v1207
    %v1296 = vunpack.c.h.b16 %v1207
    %v1297 = vunpack.c.l.b16 %v1208
    %v1298 = vunpack.c.h.b16 %v1208
    %v1299 = vunpack.c.l.b16 %v1209
    %v1300 = vunpack.c.h.b16 %v1209
    %v1301 = vunpack.c.l.b16 %v1210
    %v1302 = vunpack.c.h.b16 %v1210
    %v1303 = vunpack.c.l.b16 %v1211
    %v1304 = vunpack.c.h.b16 %v1211
    %v1305 = vunpack.c.l.b16 %v1212
    %v1306 = vunpack.c.h.b16 %v1212
    %v1307 = vunpack.c.l.b16 %v1213
    %v1308 = vunpack.c.h.b16 %v1213
    %v1309 = vpack.c.b16 %v1249, %v1247
    %v1310 = vpack.c.b16 %v1250, %v1248
    %v1311 = vpack.c.b16 %v1253, %v1251
    %v1312 = vpack.c.b16 %v1254, %v1252
    %v1313 = vpack.c.b16 %v1257, %v1255
    %v1314 = vpack.c.b16 %v1258, %v1256
    %v1315 = vpack.c.b16 %v1261, %v1259
    %v1316 = vpack.c.b16 %v1262, %v1260
    %v1317 = vpack.c.b16 %v1265, %v1263
    %v1318 = vpack.c.b16 %v1266, %v1264
    %v1319 = vpack.c.b16 %v1269, %v1267
    %v1320 = vpack.c.b16 %v1270, %v1268
    %v1321 = vpack.c.b16 %v1273, %v1271
    %v1322 = vpack.c.b16 %v1274, %v1272
    %v1323 = vpack.c.b16 %v1277, %v1275
    %v1324 = vpack.c.b16 %v1278, %v1276
    %v1325 = vpack.c.b16 %v1281, %v1279
    %v1326 = vpack.c.b16 %v1282, %v1280
    %v1327 = vpack.c.b16 %v1285, %v1283
    %v1328 = vpack.c.b16 %v1286, %v1284
    %v1329 = vpack.c.b16 %v1289, %v1287
    %v1330 = vpack.c.b16 %v1290, %v1288
    %v1331 = vpack.c.b16 %v1293, %v1291
    %v1332 = vpack.c.b16 %v1294, %v1292
    %v1333 = vpack.c.b16 %v1297, %v1295
    %v1334 = vpack.c.b16 %v1298, %v1296
    %v1335 = vpack.c.b16 %v1301, %v1299
    %v1336 = vpack.c.b16 %v1302, %v1300
    %v1337 = vpack.c.b16 %v1305, %v1303
    %v1338 = vpack.c.b16 %v1306, %v1304
    %v1339 = vpack.c.b16 %v1307, %v1307
    %v1340 = vpack.c.b16 %v1308, %v1308
    %v1372 = vsel %vm846, %v1215, 0
    %v1375 = vsel %vm1009, %v1339, 0
    %v1378 = vsel %vm1009, %v1340, 0
    %1380 = vmatprep.subr.bf16.mxu0 %v1310
    %1381 = vmatpush1.bf16.msra.mxu0 %v1309
    %1382 = vmatprep.subr.bf16.mxu0 %v1312
    %1383 = vmatpush1.bf16.msra.mxu0 %v1311
    %1384 = vmatprep.subr.bf16.mxu0 %v1314
    %1385 = vmatpush1.bf16.msra.mxu0 %v1313
    %1386 = vmatprep.subr.bf16.mxu0 %v1316
    %1387 = vmatpush1.bf16.msra.mxu0 %v1315
    %1388 = vmatprep.subr.bf16.mxu0 %v1318
    %1389 = vmatpush1.bf16.msra.mxu0 %v1317
    %1390 = vmatprep.subr.bf16.mxu0 %v1320
    %1391 = vmatpush1.bf16.msra.mxu0 %v1319
    %1392 = vmatprep.subr.bf16.mxu0 %v1322
    %1393 = vmatpush1.bf16.msra.mxu0 %v1321
    %1394 = vmatprep.subr.bf16.mxu0 %v1324
    %1395 = vmatpush1.bf16.msra.mxu0 %v1323
    %1396 = vmatprep.subr.bf16.mxu0 %v1326
    %1397 = vmatpush1.bf16.msra.mxu0 %v1325
    %1398 = vmatprep.subr.bf16.mxu0 %v1328
    %1399 = vmatpush1.bf16.msra.mxu0 %v1327
    %1400 = vmatprep.subr.bf16.mxu0 %v1330
    %1401 = vmatpush1.bf16.msra.mxu0 %v1329
    %1402 = vmatprep.subr.bf16.mxu0 %v1332
    %1403 = vmatpush1.bf16.msra.mxu0 %v1331
    %1404 = vmatprep.subr.bf16.mxu0 %v1334
    %1405 = vmatpush1.bf16.msra.mxu0 %v1333
    %1406 = vmatprep.subr.bf16.mxu0 %v1336
    %1407 = vmatpush1.bf16.msra.mxu0 %v1335
    %1408 = vmatprep.subr.bf16.mxu0 %v1338
    %1409 = vmatpush1.bf16.msra.mxu0 %v1337
    %1410 = vmatprep.subr.bf16.mxu0 %v1378
    %1411 = vmatpush1.bf16.msra.mxu0 %v1375
    %1412 = vmatprep.mubr.bf16.mxu0 %v1372
    %1413 = vmatmul.mubr.bf16.gmra.mrb[0].mxu0 %v1214
    %v1414 = vpop.f32.mrb[0].mxu0
    %v1415 = vadd.f32 0.0, %v1414
    %v1416 = vpop.f32.mrb[0].mxu0
    %v1417 = vadd.f32 0.0, %v1416
    %v1418 = vpop.f32.mrb[0].mxu0
    %v1419 = vpop.f32.mrb[0].mxu0
    %1420 = vdwg.mxu0
    %v1421 = vld [vmem:[%s19] sm:$0xff]
    %v1422 = vld [vmem:[%s19 + $0x8] sm:$0xff]
    %v1423 = vld [vmem:[%s19 + $0x10] sm:$0xff]
    %v1424 = vld [vmem:[%s19 + $0x18] sm:$0xff]
    %v1425 = vld [vmem:[%s19 + $0x20] sm:$0xff]
    %v1426 = vld [vmem:[%s19 + $0x28] sm:$0xff]
    %v1427 = vld [vmem:[%s19 + $0x30] sm:$0xff]
    %v1428 = vld [vmem:[%s19 + $0x38] sm:$0xff]
    %v1429 = vld [vmem:[%s19 + $0x40] sm:$0xff]
    %v1430 = vld [vmem:[%s19 + $0x48] sm:$0xff]
    %v1431 = vld [vmem:[%s19 + $0x50] sm:$0xff]
    %v1432 = vld [vmem:[%s19 + $0x58] sm:$0xff]
    %v1433 = vld [vmem:[%s19 + $0x60] sm:$0xff]
    %v1434 = vld [vmem:[%s19 + $0x68] sm:$0xff]
    %v1435 = vld [vmem:[%s19 + $0x70] sm:$0xff]
    %v1436 = vld [vmem:[%s19 + $0x78] sm:$0xff]
    %v1437 = vld [vmem:[%s19 + $0x80] sm:$0xff]
    %v1438 = vld [vmem:[%s19 + $0x88] sm:$0xff]
    %v1439 = vld [vmem:[%s19 + $0x90] sm:$0xff]
    %v1440 = vld [vmem:[%s19 + $0x98] sm:$0xff]
    %v1441 = vld [vmem:[%s19 + $0xa0] sm:$0xff]
    %v1442 = vld [vmem:[%s19 + $0xa8] sm:$0xff]
    %v1443 = vld [vmem:[%s19 + $0xb0] sm:$0xff]
    %v1444 = vld [vmem:[%s19 + $0xb8] sm:$0xff]
    %v1445 = vld [vmem:[%s19 + $0xc0] sm:$0xff]
    %v1446 = vld [vmem:[%s19 + $0xc8] sm:$0xff]
    %v1447 = vld [vmem:[%s19 + $0xd0] sm:$0xff]
    %v1448 = vld [vmem:[%s19 + $0xd8] sm:$0xff]
    %v1449 = vld [vmem:[%s19 + $0xe0] sm:$0xff]
    %v1450 = vld [vmem:[%s19 + $0xe8] sm:$0xff]
    %v1451 = vld [vmem:[%s19 + $0xf0] sm:$0xff]
    %v1452 = vld [vmem:[#allocation11] sm:$0xff]
    %v1453 = vld [vmem:[#allocation11 + $0x8] sm:$0xff]
    %v1454 = vld [vmem:[%s23] sm:$0x1]
    %v1455 = vld [vmem:[%s25] sm:$0x1]
    %v1456 = vsel %vm814, %v1415, 0.0
    %v1457 = vrot.slane %v1456, 4
    %v1458 = vadd.f32 %v1456, %v1457
    %v1459 = vrot.slane %v1458, 2
    %v1460 = vadd.f32 %v1458, %v1459
    %v1461 = vrot.slane %v1460, 1
    %v1462 = vadd.f32 %v1460, %v1461
    %v1463 = vsel %vm822, %v1417, 0.0
    %v1464 = vrot.slane %v1463, 4
    %v1465 = vadd.f32 %v1463, %v1464
    %v1466 = vrot.slane %v1465, 2
    %v1467 = vadd.f32 %v1465, %v1466
    %v1468 = vrot.slane %v1467, 1
    %v1469 = vadd.f32 %v1467, %v1468
    %v1470 = vmul.f32 %v1415, %v1415
    %v1471 = vmul.f32 %v1417, %v1417
    %v1472 = vsel %vm814, %v1470, 0.0
    %v1473 = vrot.slane %v1472, 4
    %v1474 = vadd.f32 %v1472, %v1473
    %v1475 = vrot.slane %v1474, 2
    %v1476 = vadd.f32 %v1474, %v1475
    %v1477 = vrot.slane %v1476, 1
    %v1478 = vadd.f32 %v1476, %v1477
    %v1479 = vsel %vm822, %v1471, 0.0
    %v1480 = vrot.slane %v1479, 4
    %v1481 = vadd.f32 %v1479, %v1480
    %v1482 = vrot.slane %v1481, 2
    %v1483 = vadd.f32 %v1481, %v1482
    %v1484 = vrot.slane %v1483, 1
    %v1485 = vadd.f32 %v1483, %v1484
    %v1487 = vsel %vm846, %v1469, 0
    %1489 = vmatprep.subr.mxu0 0.0
    %1490 = vmatpush1.msra.mxu0 %v1421
    %1491 = vmatprep.subr.mxu0 0.0
    %1492 = vmatpush1.msra.mxu0 %v1422
    %1493 = vmatprep.subr.mxu0 0.0
    %1494 = vmatpush1.msra.mxu0 %v1423
    %1495 = vmatprep.subr.mxu0 0.0
    %1496 = vmatpush1.msra.mxu0 %v1424
    %1497 = vmatprep.subr.mxu0 0.0
    %1498 = vmatpush1.msra.mxu0 %v1425
    %1499 = vmatprep.subr.mxu0 0.0
    %1500 = vmatpush1.msra.mxu0 %v1426
    %1501 = vmatprep.subr.mxu0 0.0
    %1502 = vmatpush1.msra.mxu0 %v1427
    %1503 = vmatprep.subr.mxu0 0.0
    %1504 = vmatpush1.msra.mxu0 %v1428
    %1505 = vmatprep.subr.mxu0 0.0
    %1506 = vmatpush1.msra.mxu0 %v1429
    %1507 = vmatprep.subr.mxu0 0.0
    %1508 = vmatpush1.msra.mxu0 %v1430
    %1509 = vmatprep.subr.mxu0 0.0
    %1510 = vmatpush1.msra.mxu0 %v1431
    %1511 = vmatprep.subr.mxu0 0.0
    %1512 = vmatpush1.msra.mxu0 %v1432
    %1513 = vmatprep.subr.mxu0 0.0
    %1514 = vmatpush1.msra.mxu0 %v1433
    %1515 = vmatprep.subr.mxu0 0.0
    %1516 = vmatpush1.msra.mxu0 %v1434
    %1517 = vmatprep.subr.mxu0 0.0
    %1518 = vmatpush1.msra.mxu0 %v1435
    %1519 = vmatprep.subr.mxu0 0.0
    %1520 = vmatpush1.msra.mxu0 %v1436
    %1521 = vmatprep.subr.mxu0 0.0
    %1522 = vmatpush1.msra.mxu0 %v1437
    %1523 = vmatprep.subr.mxu0 0.0
    %1524 = vmatpush1.msra.mxu0 %v1438
    %1525 = vmatprep.subr.mxu0 0.0
    %1526 = vmatpush1.msra.mxu0 %v1439
    %1527 = vmatprep.subr.mxu0 0.0
    %1528 = vmatpush1.msra.mxu0 %v1440
    %1529 = vmatprep.subr.mxu0 0.0
    %1530 = vmatpush1.msra.mxu0 %v1441
    %1531 = vmatprep.subr.mxu0 0.0
    %1532 = vmatpush1.msra.mxu0 %v1442
    %1533 = vmatprep.subr.mxu0 0.0
    %1534 = vmatpush1.msra.mxu0 %v1443
    %1535 = vmatprep.subr.mxu0 0.0
    %1536 = vmatpush1.msra.mxu0 %v1444
    %1537 = vmatprep.subr.mxu0 0.0
    %1538 = vmatpush1.msra.mxu0 %v1445
    %1539 = vmatprep.subr.mxu0 0.0
    %1540 = vmatpush1.msra.mxu0 %v1446
    %1541 = vmatprep.subr.mxu0 0.0
    %1542 = vmatpush1.msra.mxu0 %v1447
    %1543 = vmatprep.subr.mxu0 0.0
    %1544 = vmatpush1.msra.mxu0 %v1448
    %1545 = vmatprep.subr.mxu0 0.0
    %1546 = vmatpush1.msra.mxu0 %v1449
    %1547 = vmatprep.subr.mxu0 0.0
    %1548 = vmatpush1.msra.mxu0 %v1450
    %1549 = vmatprep.subr.mxu0 0.0
    %1550 = vmatpush1.msra.mxu0 %v1451
    %1551 = vmatprep.subr.mxu0 0.0
    %1552 = vmatpush1.msra.mxu0 0.0
    %1553 = vmatprep.mubr.f32.mxu0 %v1487
    %1554 = vmatmul.mubr.f32.gmra.mrb[0].mxu0 %v1462
    %v1555 = vpop.f32.mrb[0].mxu0
    %v1556 = vadd.f32 0.0, %v1555
    %v1557 = vpop.f32.mrb[0].mxu0
    %1558 = vdwg.mxu0
    %v1560 = vsel %vm846, %v1485, 0
    %1562 = vmatprep.subr.mxu0 0.0
    %1563 = vmatpush1.msra.mxu0 %v1421
    %1564 = vmatprep.subr.mxu0 0.0
    %1565 = vmatpush1.msra.mxu0 %v1422
    %1566 = vmatprep.subr.mxu0 0.0
    %1567 = vmatpush1.msra.mxu0 %v1423
    %1568 = vmatprep.subr.mxu0 0.0
    %1569 = vmatpush1.msra.mxu0 %v1424
    %1570 = vmatprep.subr.mxu0 0.0
    %1571 = vmatpush1.msra.mxu0 %v1425
    %1572 = vmatprep.subr.mxu0 0.0
    %1573 = vmatpush1.msra.mxu0 %v1426
    %1574 = vmatprep.subr.mxu0 0.0
    %1575 = vmatpush1.msra.mxu0 %v1427
    %1576 = vmatprep.subr.mxu0 0.0
    %1577 = vmatpush1.msra.mxu0 %v1428
    %1578 = vmatprep.subr.mxu0 0.0
    %1579 = vmatpush1.msra.mxu0 %v1429
    %1580 = vmatprep.subr.mxu0 0.0
    %1581 = vmatpush1.msra.mxu0 %v1430
    %1582 = vmatprep.subr.mxu0 0.0
    %1583 = vmatpush1.msra.mxu0 %v1431
    %1584 = vmatprep.subr.mxu0 0.0
    %1585 = vmatpush1.msra.mxu0 %v1432
    %1586 = vmatprep.subr.mxu0 0.0
    %1587 = vmatpush1.msra.mxu0 %v1433
    %1588 = vmatprep.subr.mxu0 0.0
    %1589 = vmatpush1.msra.mxu0 %v1434
    %1590 = vmatprep.subr.mxu0 0.0
    %1591 = vmatpush1.msra.mxu0 %v1435
    %1592 = vmatprep.subr.mxu0 0.0
    %1593 = vmatpush1.msra.mxu0 %v1436
    %1594 = vmatprep.subr.mxu0 0.0
    %1595 = vmatpush1.msra.mxu0 %v1437
    %1596 = vmatprep.subr.mxu0 0.0
    %1597 = vmatpush1.msra.mxu0 %v1438
    %1598 = vmatprep.subr.mxu0 0.0
    %1599 = vmatpush1.msra.mxu0 %v1439
    %1600 = vmatprep.subr.mxu0 0.0
    %1601 = vmatpush1.msra.mxu0 %v1440
    %1602 = vmatprep.subr.mxu0 0.0
    %1603 = vmatpush1.msra.mxu0 %v1441
    %1604 = vmatprep.subr.mxu0 0.0
    %1605 = vmatpush1.msra.mxu0 %v1442
    %1606 = vmatprep.subr.mxu0 0.0
    %1607 = vmatpush1.msra.mxu0 %v1443
    %1608 = vmatprep.subr.mxu0 0.0
    %1609 = vmatpush1.msra.mxu0 %v1444
    %1610 = vmatprep.subr.mxu0 0.0
    %1611 = vmatpush1.msra.mxu0 %v1445
    %1612 = vmatprep.subr.mxu0 0.0
    %1613 = vmatpush1.msra.mxu0 %v1446
    %1614 = vmatprep.subr.mxu0 0.0
    %1615 = vmatpush1.msra.mxu0 %v1447
    %1616 = vmatprep.subr.mxu0 0.0
    %1617 = vmatpush1.msra.mxu0 %v1448
    %1618 = vmatprep.subr.mxu0 0.0
    %1619 = vmatpush1.msra.mxu0 %v1449
    %1620 = vmatprep.subr.mxu0 0.0
    %1621 = vmatpush1.msra.mxu0 %v1450
    %1622 = vmatprep.subr.mxu0 0.0
    %1623 = vmatpush1.msra.mxu0 %v1451
    %1624 = vmatprep.subr.mxu0 0.0
    %1625 = vmatpush1.msra.mxu0 0.0
    %1626 = vmatprep.mubr.f32.mxu0 %v1560
    %1627 = vmatmul.mubr.f32.gmra.mrb[0].mxu0 %v1478
    %v1628 = vpop.f32.mrb[0].mxu0
    %v1629 = vadd.f32 0.0, %v1628
    %v1630 = vpop.f32.mrb[0].mxu0
    %1631 = vdwg.mxu0
    %v1632 = vmul.f32 %v1556, 0.016129032
    %v1633 = vmul.f32 %v1629, 0.016129032
    %v1634 = vmul.f32 %v1632, %v1632
    %v1635 = vsub.f32 %v1633, %v1634
    %v1636 = vmax.f32 %v1635, 0.0
    %v1637 = vadd.f32 %v1636, 1e-05
    %v1638 = vrsqrt.pop %v1637
    %v1639 = vmul.f32 %v1454, %v1638
    %v1640 = vmul.f32 %v1632, %v1639
    %v1641 = vsub.f32 %v1455, %v1640
    %vm1642 = vcmask 64512
    %v1644 = vsel %vm1642, %v1639, 0
    %1646 = vmatprep.subr.mxu0 %v1453
    %1647 = vmatpush1.msra.mxu0 %v1452
    %1648 = vmatprep.subr.mxu0 0.0
    %1649 = vmatpush1.msra.mxu0 0.0
    %1650 = vmatprep.subr.mxu0 0.0
    %1651 = vmatpush1.msra.mxu0 0.0
    %1652 = vmatprep.subr.mxu0 0.0
    %1653 = vmatpush1.msra.mxu0 0.0
    %1654 = vmatprep.subr.mxu0 0.0
    %1655 = vmatpush1.msra.mxu0 0.0
    %1656 = vmatprep.subr.mxu0 0.0
    %1657 = vmatpush1.msra.mxu0 0.0
    %1658 = vmatprep.subr.mxu0 0.0
    %1659 = vmatpush1.msra.mxu0 0.0
    %1660 = vmatprep.subr.mxu0 0.0
    %1661 = vmatpush1.msra.mxu0 0.0
    %1662 = vmatprep.subr.mxu0 0.0
    %1663 = vmatpush1.msra.mxu0 0.0
    %1664 = vmatprep.subr.mxu0 0.0
    %1665 = vmatpush1.msra.mxu0 0.0
    %1666 = vmatprep.subr.mxu0 0.0
    %1667 = vmatpush1.msra.mxu0 0.0
    %1668 = vmatprep.subr.mxu0 0.0
    %1669 = vmatpush1.msra.mxu0 0.0
    %1670 = vmatprep.subr.mxu0 0.0
    %1671 = vmatpush1.msra.mxu0 0.0
    %1672 = vmatprep.subr.mxu0 0.0
    %1673 = vmatpush1.msra.mxu0 0.0
    %1674 = vmatprep.subr.mxu0 0.0
    %1675 = vmatpush1.msra.mxu0 0.0
    %1676 = vmatprep.subr.mxu0 0.0
    %1677 = vmatpush1.msra.mxu0 0.0
    %1678 = vmatprep.subr.mxu0 0.0
    %1679 = vmatpush1.msra.mxu0 0.0
    %1680 = vmatprep.subr.mxu0 0.0
    %1681 = vmatpush1.msra.mxu0 0.0
    %1682 = vmatprep.subr.mxu0 0.0
    %1683 = vmatpush1.msra.mxu0 0.0
    %1684 = vmatprep.subr.mxu0 0.0
    %1685 = vmatpush1.msra.mxu0 0.0
    %1686 = vmatprep.subr.mxu0 0.0
    %1687 = vmatpush1.msra.mxu0 0.0
    %1688 = vmatprep.subr.mxu0 0.0
    %1689 = vmatpush1.msra.mxu0 0.0
    %1690 = vmatprep.subr.mxu0 0.0
    %1691 = vmatpush1.msra.mxu0 0.0
    %1692 = vmatprep.subr.mxu0 0.0
    %1693 = vmatpush1.msra.mxu0 0.0
    %1694 = vmatprep.subr.mxu0 0.0
    %1695 = vmatpush1.msra.mxu0 0.0
    %1696 = vmatprep.subr.mxu0 0.0
    %1697 = vmatpush1.msra.mxu0 0.0
    %1698 = vmatprep.subr.mxu0 0.0
    %1699 = vmatpush1.msra.mxu0 0.0
    %1700 = vmatprep.subr.mxu0 0.0
    %1701 = vmatpush1.msra.mxu0 0.0
    %1702 = vmatprep.subr.mxu0 0.0
    %1703 = vmatpush1.msra.mxu0 0.0
    %1704 = vmatprep.subr.mxu0 0.0
    %1705 = vmatpush1.msra.mxu0 0.0
    %1706 = vmatprep.subr.mxu0 0.0
    %1707 = vmatpush1.msra.mxu0 0.0
    %1708 = vmatprep.subr.mxu0 0.0
    %1709 = vmatpush1.msra.mxu0 0.0
    %1710 = vmatprep.mubr.f32.mxu0 0.0
    %1711 = vmatmul.mubr.f32.gmra.mrb[0].mxu0 %v1644
    %v1712 = vpop.f32.mrb[0].mxu0
    %v1713 = vadd.f32 0.0, %v1712
    %v1714 = vpop.f32.mrb[0].mxu0
    %v1715 = vadd.f32 0.0, %v1714
    %1716 = vdwg.mxu0
    %v1718 = vsel %vm1642, %v1641, 0
    %1720 = vmatprep.subr.mxu0 %v1453
    %1721 = vmatpush1.msra.mxu0 %v1452
    %1722 = vmatprep.subr.mxu0 0.0
    %1723 = vmatpush1.msra.mxu0 0.0
    %1724 = vmatprep.subr.mxu0 0.0
    %1725 = vmatpush1.msra.mxu0 0.0
    %1726 = vmatprep.subr.mxu0 0.0
    %1727 = vmatpush1.msra.mxu0 0.0
    %1728 = vmatprep.subr.mxu0 0.0
    %1729 = vmatpush1.msra.mxu0 0.0
    %1730 = vmatprep.subr.mxu0 0.0
    %1731 = vmatpush1.msra.mxu0 0.0
    %1732 = vmatprep.subr.mxu0 0.0
    %1733 = vmatpush1.msra.mxu0 0.0
    %1734 = vmatprep.subr.mxu0 0.0
    %1735 = vmatpush1.msra.mxu0 0.0
    %1736 = vmatprep.subr.mxu0 0.0
    %1737 = vmatpush1.msra.mxu0 0.0
    %1738 = vmatprep.subr.mxu0 0.0
    %1739 = vmatpush1.msra.mxu0 0.0
    %1740 = vmatprep.subr.mxu0 0.0
    %1741 = vmatpush1.msra.mxu0 0.0
    %1742 = vmatprep.subr.mxu0 0.0
    %1743 = vmatpush1.msra.mxu0 0.0
    %1744 = vmatprep.subr.mxu0 0.0
    %1745 = vmatpush1.msra.mxu0 0.0
    %1746 = vmatprep.subr.mxu0 0.0
    %1747 = vmatpush1.msra.mxu0 0.0
    %1748 = vmatprep.subr.mxu0 0.0
    %1749 = vmatpush1.msra.mxu0 0.0
    %1750 = vmatprep.subr.mxu0 0.0
    %1751 = vmatpush1.msra.mxu0 0.0
    %1752 = vmatprep.subr.mxu0 0.0
    %1753 = vmatpush1.msra.mxu0 0.0
    %1754 = vmatprep.subr.mxu0 0.0
    %1755 = vmatpush1.msra.mxu0 0.0
    %1756 = vmatprep.subr.mxu0 0.0
    %1757 = vmatpush1.msra.mxu0 0.0
    %1758 = vmatprep.subr.mxu0 0.0
    %1759 = vmatpush1.msra.mxu0 0.0
    %1760 = vmatprep.subr.mxu0 0.0
    %1761 = vmatpush1.msra.mxu0 0.0
    %1762 = vmatprep.subr.mxu0 0.0
    %1763 = vmatpush1.msra.mxu0 0.0
    %1764 = vmatprep.subr.mxu0 0.0
    %1765 = vmatpush1.msra.mxu0 0.0
    %1766 = vmatprep.subr.mxu0 0.0
    %1767 = vmatpush1.msra.mxu0 0.0
    %1768 = vmatprep.subr.mxu0 0.0
    %1769 = vmatpush1.msra.mxu0 0.0
    %1770 = vmatprep.subr.mxu0 0.0
    %1771 = vmatpush1.msra.mxu0 0.0
    %1772 = vmatprep.subr.mxu0 0.0
    %1773 = vmatpush1.msra.mxu0 0.0
    %1774 = vmatprep.subr.mxu0 0.0
    %1775 = vmatpush1.msra.mxu0 0.0
    %1776 = vmatprep.subr.mxu0 0.0
    %1777 = vmatpush1.msra.mxu0 0.0
    %1778 = vmatprep.subr.mxu0 0.0
    %1779 = vmatpush1.msra.mxu0 0.0
    %1780 = vmatprep.subr.mxu0 0.0
    %1781 = vmatpush1.msra.mxu0 0.0
    %1782 = vmatprep.subr.mxu0 0.0
    %1783 = vmatpush1.msra.mxu0 0.0
    %1784 = vmatprep.mubr.f32.mxu0 0.0
    %1785 = vmatmul.mubr.f32.gmra.mrb[0].mxu0 %v1718
    %v1786 = vpop.f32.mrb[0].mxu0
    %v1787 = vadd.f32 0.0, %v1786
    %v1788 = vpop.f32.mrb[0].mxu0
    %v1789 = vadd.f32 0.0, %v1788
    %1790 = vdwg.mxu0
    %v1791 = vlaneseq
    %v1792 = vshrl.u32 %v1791, 7
    %v1793 = vsub.s32 0, %v1792
    %v1794 = vrot.slane %v1713, %v1793
    %v1795 = vlaneseq
    %v1796 = vshrl.u32 %v1795, 7
    %v1797 = vsub.s32 0, %v1796
    %v1798 = vrot.slane %v1715, %v1797
    %v1799 = vmul.f32 %v1415, %v1794
    %v1800 = vmul.f32 %v1417, %v1798
    %v1801 = vlaneseq
    %v1802 = vshrl.u32 %v1801, 7
    %v1803 = vsub.s32 0, %v1802
    %v1804 = vrot.slane %v1787, %v1803
    %v1805 = vlaneseq
    %v1806 = vshrl.u32 %v1805, 7
    %v1807 = vsub.s32 0, %v1806
    %v1808 = vrot.slane %v1789, %v1807
    %v1809 = vadd.f32 %v1799, %v1804
    %v1810 = vadd.f32 %v1800, %v1808
    %v1811 = vmul.f32 %v1809, 0.2
    %v1812 = vmul.f32 %v1810, 0.2
    %v1813 = vmax.f32 %v1809, %v1811
    %v1814 = vmax.f32 %v1810, %v1812
    %v1815 = vld [vmem:[#allocation13] sm:$0xff]
    %v1816 = vld [vmem:[#allocation13 + $0x8] sm:$0xff]
    %v1817 = vld [vmem:[#allocation13 + $0x10] sm:$0xff]
    %v1818 = vld [vmem:[#allocation13 + $0x18] sm:$0xff]
    %v1819 = vld [vmem:[#allocation13 + $0x20] sm:$0xff]
    %v1820 = vld [vmem:[#allocation13 + $0x28] sm:$0xff]
    %v1821 = vld [vmem:[#allocation13 + $0x30] sm:$0xff]
    %v1822 = vld [vmem:[#allocation13 + $0x38] sm:$0xff]
    %v1823 = vld [vmem:[#allocation13 + $0x40] sm:$0xff]
    %v1824 = vld [vmem:[#allocation13 + $0x48] sm:$0xff]
    %v1825 = vld [vmem:[#allocation13 + $0x50] sm:$0xff]
    %v1826 = vld [vmem:[#allocation13 + $0x58] sm:$0xff]
    %v1827 = vld [vmem:[#allocation13 + $0x60] sm:$0xff]
    %v1828 = vld [vmem:[#allocation13 + $0x68] sm:$0xff]
    %v1829 = vld [vmem:[#allocation13 + $0x70] sm:$0xff]
    %v1830 = vld [vmem:[#allocation13 + $0x78] sm:$0xff]
    %v1831 = vld [vmem:[#allocation13 + $0x80] sm:$0xff]
    %v1832 = vld [vmem:[#allocation13 + $0x88] sm:$0xff]
    %v1833 = vld [vmem:[#allocation13 + $0x90] sm:$0xff]
    %v1834 = vld [vmem:[#allocation13 + $0x98] sm:$0xff]
    %v1835 = vld [vmem:[#allocation13 + $0xa0] sm:$0xff]
    %v1836 = vld [vmem:[#allocation13 + $0xa8] sm:$0xff]
    %v1837 = vld [vmem:[#allocation13 + $0xb0] sm:$0xff]
    %v1838 = vld [vmem:[#allocation13 + $0xb8] sm:$0xff]
    %v1839 = vld [vmem:[#allocation13 + $0xc0] sm:$0xff]
    %v1840 = vld [vmem:[#allocation13 + $0xc8] sm:$0xff]
    %v1841 = vld [vmem:[#allocation13 + $0xd0] sm:$0xff]
    %v1842 = vld [vmem:[#allocation13 + $0xd8] sm:$0xff]
    %v1843 = vld [vmem:[#allocation13 + $0xe0] sm:$0xff]
    %v1844 = vld [vmem:[#allocation13 + $0xe8] sm:$0xff]
    %v1845 = vld [vmem:[#allocation13 + $0xf0] sm:$0xff]
    %v1846 = vpack.c.bf16 %v1813, %v1813
    %v1847 = vpack.c.bf16 %v1814, %v1814
    %v1879 = vunpack.c.l.b16 %v1815
    %v1880 = vunpack.c.h.b16 %v1815
    %v1881 = vunpack.c.l.b16 %v1816
    %v1882 = vunpack.c.h.b16 %v1816
    %v1883 = vunpack.c.l.b16 %v1817
    %v1884 = vunpack.c.h.b16 %v1817
    %v1885 = vunpack.c.l.b16 %v1818
    %v1886 = vunpack.c.h.b16 %v1818
    %v1887 = vunpack.c.l.b16 %v1819
    %v1888 = vunpack.c.h.b16 %v1819
    %v1889 = vunpack.c.l.b16 %v1820
    %v1890 = vunpack.c.h.b16 %v1820
    %v1891 = vunpack.c.l.b16 %v1821
    %v1892 = vunpack.c.h.b16 %v1821
    %v1893 = vunpack.c.l.b16 %v1822
    %v1894 = vunpack.c.h.b16 %v1822
    %v1895 = vunpack.c.l.b16 %v1823
    %v1896 = vunpack.c.h.b16 %v1823
    %v1897 = vunpack.c.l.b16 %v1824
    %v1898 = vunpack.c.h.b16 %v1824
    %v1899 = vunpack.c.l.b16 %v1825
    %v1900 = vunpack.c.h.b16 %v1825
    %v1901 = vunpack.c.l.b16 %v1826
    %v1902 = vunpack.c.h.b16 %v1826
    %v1903 = vunpack.c.l.b16 %v1827
    %v1904 = vunpack.c.h.b16 %v1827
    %v1905 = vunpack.c.l.b16 %v1828
    %v1906 = vunpack.c.h.b16 %v1828
    %v1907 = vunpack.c.l.b16 %v1829
    %v1908 = vunpack.c.h.b16 %v1829
    %v1909 = vunpack.c.l.b16 %v1830
    %v1910 = vunpack.c.h.b16 %v1830
    %v1911 = vunpack.c.l.b16 %v1831
    %v1912 = vunpack.c.h.b16 %v1831
    %v1913 = vunpack.c.l.b16 %v1832
    %v1914 = vunpack.c.h.b16 %v1832
    %v1915 = vunpack.c.l.b16 %v1833
    %v1916 = vunpack.c.h.b16 %v1833
    %v1917 = vunpack.c.l.b16 %v1834
    %v1918 = vunpack.c.h.b16 %v1834
    %v1919 = vunpack.c.l.b16 %v1835
    %v1920 = vunpack.c.h.b16 %v1835
    %v1921 = vunpack.c.l.b16 %v1836
    %v1922 = vunpack.c.h.b16 %v1836
    %v1923 = vunpack.c.l.b16 %v1837
    %v1924 = vunpack.c.h.b16 %v1837
    %v1925 = vunpack.c.l.b16 %v1838
    %v1926 = vunpack.c.h.b16 %v1838
    %v1927 = vunpack.c.l.b16 %v1839
    %v1928 = vunpack.c.h.b16 %v1839
    %v1929 = vunpack.c.l.b16 %v1840
    %v1930 = vunpack.c.h.b16 %v1840
    %v1931 = vunpack.c.l.b16 %v1841
    %v1932 = vunpack.c.h.b16 %v1841
    %v1933 = vunpack.c.l.b16 %v1842
    %v1934 = vunpack.c.h.b16 %v1842
    %v1935 = vunpack.c.l.b16 %v1843
    %v1936 = vunpack.c.h.b16 %v1843
    %v1937 = vunpack.c.l.b16 %v1844
    %v1938 = vunpack.c.h.b16 %v1844
    %v1939 = vunpack.c.l.b16 %v1845
    %v1940 = vunpack.c.h.b16 %v1845
    %v1941 = vpack.c.b16 %v1881, %v1879
    %v1942 = vpack.c.b16 %v1882, %v1880
    %v1943 = vpack.c.b16 %v1885, %v1883
    %v1944 = vpack.c.b16 %v1886, %v1884
    %v1945 = vpack.c.b16 %v1889, %v1887
    %v1946 = vpack.c.b16 %v1890, %v1888
    %v1947 = vpack.c.b16 %v1893, %v1891
    %v1948 = vpack.c.b16 %v1894, %v1892
    %v1949 = vpack.c.b16 %v1897, %v1895
    %v1950 = vpack.c.b16 %v1898, %v1896
    %v1951 = vpack.c.b16 %v1901, %v1899
    %v1952 = vpack.c.b16 %v1902, %v1900
    %v1953 = vpack.c.b16 %v1905, %v1903
    %v1954 = vpack.c.b16 %v1906, %v1904
    %v1955 = vpack.c.b16 %v1909, %v1907
    %v1956 = vpack.c.b16 %v1910, %v1908
    %v1957 = vpack.c.b16 %v1913, %v1911
    %v1958 = vpack.c.b16 %v1914, %v1912
    %v1959 = vpack.c.b16 %v1917, %v1915
    %v1960 = vpack.c.b16 %v1918, %v1916
    %v1961 = vpack.c.b16 %v1921, %v1919
    %v1962 = vpack.c.b16 %v1922, %v1920
    %v1963 = vpack.c.b16 %v1925, %v1923
    %v1964 = vpack.c.b16 %v1926, %v1924
    %v1965 = vpack.c.b16 %v1929, %v1927
    %v1966 = vpack.c.b16 %v1930, %v1928
    %v1967 = vpack.c.b16 %v1933, %v1931
    %v1968 = vpack.c.b16 %v1934, %v1932
    %v1969 = vpack.c.b16 %v1937, %v1935
    %v1970 = vpack.c.b16 %v1938, %v1936
    %v1971 = vpack.c.b16 %v1939, %v1939
    %v1972 = vpack.c.b16 %v1940, %v1940
    %v2004 = vsel %vm846, %v1847, 0
    %v2007 = vsel %vm1009, %v1971, 0
    %v2010 = vsel %vm1009, %v1972, 0
    %2012 = vmatprep.subr.bf16.mxu0 %v1942
    %2013 = vmatpush1.bf16.msra.mxu0 %v1941
    %2014 = vmatprep.subr.bf16.mxu0 %v1944
    %2015 = vmatpush1.bf16.msra.mxu0 %v1943
    %2016 = vmatprep.subr.bf16.mxu0 %v1946
    %2017 = vmatpush1.bf16.msra.mxu0 %v1945
    %2018 = vmatprep.subr.bf16.mxu0 %v1948
    %2019 = vmatpush1.bf16.msra.mxu0 %v1947
    %2020 = vmatprep.subr.bf16.mxu0 %v1950
    %2021 = vmatpush1.bf16.msra.mxu0 %v1949
    %2022 = vmatprep.subr.bf16.mxu0 %v1952
    %2023 = vmatpush1.bf16.msra.mxu0 %v1951
    %2024 = vmatprep.subr.bf16.mxu0 %v1954
    %2025 = vmatpush1.bf16.msra.mxu0 %v1953
    %2026 = vmatprep.subr.bf16.mxu0 %v1956
    %2027 = vmatpush1.bf16.msra.mxu0 %v1955
    %2028 = vmatprep.subr.bf16.mxu0 %v1958
    %2029 = vmatpush1.bf16.msra.mxu0 %v1957
    %2030 = vmatprep.subr.bf16.mxu0 %v1960
    %2031 = vmatpush1.bf16.msra.mxu0 %v1959
    %2032 = vmatprep.subr.bf16.mxu0 %v1962
    %2033 = vmatpush1.bf16.msra.mxu0 %v1961
    %2034 = vmatprep.subr.bf16.mxu0 %v1964
    %2035 = vmatpush1.bf16.msra.mxu0 %v1963
    %2036 = vmatprep.subr.bf16.mxu0 %v1966
    %2037 = vmatpush1.bf16.msra.mxu0 %v1965
    %2038 = vmatprep.subr.bf16.mxu0 %v1968
    %2039 = vmatpush1.bf16.msra.mxu0 %v1967
    %2040 = vmatprep.subr.bf16.mxu0 %v1970
    %2041 = vmatpush1.bf16.msra.mxu0 %v1969
    %2042 = vmatprep.subr.bf16.mxu0 %v2010
    %2043 = vmatpush1.bf16.msra.mxu0 %v2007
    %2044 = vmatprep.mubr.bf16.mxu0 %v2004
    %2045 = vmatmul.mubr.bf16.gmra.mrb[0].mxu0 %v1846
    %v2046 = vpop.f32.mrb[0].mxu0
    %v2047 = vadd.f32 0.0, %v2046
    %v2048 = vpop.f32.mrb[0].mxu0
    %v2049 = vadd.f32 0.0, %v2048
    %v2050 = vpop.f32.mrb[0].mxu0
    %v2051 = vpop.f32.mrb[0].mxu0
    %2052 = vdwg.mxu0
    %v2053 = vld [vmem:[%s29] sm:$0xff]
    %v2054 = vld [vmem:[%s29 + $0x8] sm:$0xff]
    %v2055 = vld [vmem:[%s29 + $0x10] sm:$0xff]
    %v2056 = vld [vmem:[%s29 + $0x18] sm:$0xff]
    %v2057 = vld [vmem:[%s29 + $0x20] sm:$0xff]
    %v2058 = vld [vmem:[%s29 + $0x28] sm:$0xff]
    %v2059 = vld [vmem:[%s29 + $0x30] sm:$0xff]
    %v2060 = vld [vmem:[%s29 + $0x38] sm:$0xff]
    %v2061 = vld [vmem:[%s29 + $0x40] sm:$0xff]
    %v2062 = vld [vmem:[%s29 + $0x48] sm:$0xff]
    %v2063 = vld [vmem:[%s29 + $0x50] sm:$0xff]
    %v2064 = vld [vmem:[%s29 + $0x58] sm:$0xff]
    %v2065 = vld [vmem:[%s29 + $0x60] sm:$0xff]
    %v2066 = vld [vmem:[%s29 + $0x68] sm:$0xff]
    %v2067 = vld [vmem:[%s29 + $0x70] sm:$0xff]
    %v2068 = vld [vmem:[%s29 + $0x78] sm:$0xff]
    %v2069 = vld [vmem:[%s29 + $0x80] sm:$0xff]
    %v2070 = vld [vmem:[%s29 + $0x88] sm:$0xff]
    %v2071 = vld [vmem:[%s29 + $0x90] sm:$0xff]
    %v2072 = vld [vmem:[%s29 + $0x98] sm:$0xff]
    %v2073 = vld [vmem:[%s29 + $0xa0] sm:$0xff]
    %v2074 = vld [vmem:[%s29 + $0xa8] sm:$0xff]
    %v2075 = vld [vmem:[%s29 + $0xb0] sm:$0xff]
    %v2076 = vld [vmem:[%s29 + $0xb8] sm:$0xff]
    %v2077 = vld [vmem:[%s29 + $0xc0] sm:$0xff]
    %v2078 = vld [vmem:[%s29 + $0xc8] sm:$0xff]
    %v2079 = vld [vmem:[%s29 + $0xd0] sm:$0xff]
    %v2080 = vld [vmem:[%s29 + $0xd8] sm:$0xff]
    %v2081 = vld [vmem:[%s29 + $0xe0] sm:$0xff]
    %v2082 = vld [vmem:[%s29 + $0xe8] sm:$0xff]
    %v2083 = vld [vmem:[%s29 + $0xf0] sm:$0xff]
    %v2084 = vld [vmem:[%s29 + $0xf8] sm:$0xff]
    %v2085 = vld [vmem:[#allocation14] sm:$0xff]
    %v2086 = vld [vmem:[#allocation14 + $0x8] sm:$0xff]
    %v2087 = vld [vmem:[#allocation14 + $0x10] sm:$0xff]
    %v2088 = vld [vmem:[#allocation14 + $0x18] sm:$0xff]
    %v2089 = vld [vmem:[%s33] sm:$0x1]
    %v2090 = vld [vmem:[%s35] sm:$0x1]
    %v2091 = vsel %vm814, %v2047, 0.0
    %v2092 = vrot.slane %v2091, 4
    %v2093 = vadd.f32 %v2091, %v2092
    %v2094 = vrot.slane %v2093, 2
    %v2095 = vadd.f32 %v2093, %v2094
    %v2096 = vrot.slane %v2095, 1
    %v2097 = vadd.f32 %v2095, %v2096
    %v2098 = vsel %vm814, %v2049, 0.0
    %v2099 = vrot.slane %v2098, 4
    %v2100 = vadd.f32 %v2098, %v2099
    %v2101 = vrot.slane %v2100, 2
    %v2102 = vadd.f32 %v2100, %v2101
    %v2103 = vrot.slane %v2102, 1
    %v2104 = vadd.f32 %v2102, %v2103
    %v2105 = vmul.f32 %v2047, %v2047
    %v2106 = vmul.f32 %v2049, %v2049
    %v2107 = vsel %vm814, %v2105, 0.0
    %v2108 = vrot.slane %v2107, 4
    %v2109 = vadd.f32 %v2107, %v2108
    %v2110 = vrot.slane %v2109, 2
    %v2111 = vadd.f32 %v2109, %v2110
    %v2112 = vrot.slane %v2111, 1
    %v2113 = vadd.f32 %v2111, %v2112
    %v2114 = vsel %vm814, %v2106, 0.0
    %v2115 = vrot.slane %v2114, 4
    %v2116 = vadd.f32 %v2114, %v2115
    %v2117 = vrot.slane %v2116, 2
    %v2118 = vadd.f32 %v2116, %v2117
    %v2119 = vrot.slane %v2118, 1
    %v2120 = vadd.f32 %v2118, %v2119
    %2121 = vmatprep.subr.mxu0 0.0
    %2122 = vmatpush1.msra.mxu0 %v2053
    %2123 = vmatprep.subr.mxu0 0.0
    %2124 = vmatpush1.msra.mxu0 %v2054
    %2125 = vmatprep.subr.mxu0 0.0
    %2126 = vmatpush1.msra.mxu0 %v2055
    %2127 = vmatprep.subr.mxu0 0.0
    %2128 = vmatpush1.msra.mxu0 %v2056
    %2129 = vmatprep.subr.mxu0 0.0
    %2130 = vmatpush1.msra.mxu0 %v2057
    %2131 = vmatprep.subr.mxu0 0.0
    %2132 = vmatpush1.msra.mxu0 %v2058
    %2133 = vmatprep.subr.mxu0 0.0
    %2134 = vmatpush1.msra.mxu0 %v2059
    %2135 = vmatprep.subr.mxu0 0.0
    %2136 = vmatpush1.msra.mxu0 %v2060
    %2137 = vmatprep.subr.mxu0 0.0
    %2138 = vmatpush1.msra.mxu0 %v2061
    %2139 = vmatprep.subr.mxu0 0.0
    %2140 = vmatpush1.msra.mxu0 %v2062
    %2141 = vmatprep.subr.mxu0 0.0
    %2142 = vmatpush1.msra.mxu0 %v2063
    %2143 = vmatprep.subr.mxu0 0.0
    %2144 = vmatpush1.msra.mxu0 %v2064
    %2145 = vmatprep.subr.mxu0 0.0
    %2146 = vmatpush1.msra.mxu0 %v2065
    %2147 = vmatprep.subr.mxu0 0.0
    %2148 = vmatpush1.msra.mxu0 %v2066
    %2149 = vmatprep.subr.mxu0 0.0
    %2150 = vmatpush1.msra.mxu0 %v2067
    %2151 = vmatprep.subr.mxu0 0.0
    %2152 = vmatpush1.msra.mxu0 %v2068
    %2153 = vmatprep.subr.mxu0 0.0
    %2154 = vmatpush1.msra.mxu0 %v2069
    %2155 = vmatprep.subr.mxu0 0.0
    %2156 = vmatpush1.msra.mxu0 %v2070
    %2157 = vmatprep.subr.mxu0 0.0
    %2158 = vmatpush1.msra.mxu0 %v2071
    %2159 = vmatprep.subr.mxu0 0.0
    %2160 = vmatpush1.msra.mxu0 %v2072
    %2161 = vmatprep.subr.mxu0 0.0
    %2162 = vmatpush1.msra.mxu0 %v2073
    %2163 = vmatprep.subr.mxu0 0.0
    %2164 = vmatpush1.msra.mxu0 %v2074
    %2165 = vmatprep.subr.mxu0 0.0
    %2166 = vmatpush1.msra.mxu0 %v2075
    %2167 = vmatprep.subr.mxu0 0.0
    %2168 = vmatpush1.msra.mxu0 %v2076
    %2169 = vmatprep.subr.mxu0 0.0
    %2170 = vmatpush1.msra.mxu0 %v2077
    %2171 = vmatprep.subr.mxu0 0.0
    %2172 = vmatpush1.msra.mxu0 %v2078
    %2173 = vmatprep.subr.mxu0 0.0
    %2174 = vmatpush1.msra.mxu0 %v2079
    %2175 = vmatprep.subr.mxu0 0.0
    %2176 = vmatpush1.msra.mxu0 %v2080
    %2177 = vmatprep.subr.mxu0 0.0
    %2178 = vmatpush1.msra.mxu0 %v2081
    %2179 = vmatprep.subr.mxu0 0.0
    %2180 = vmatpush1.msra.mxu0 %v2082
    %2181 = vmatprep.subr.mxu0 0.0
    %2182 = vmatpush1.msra.mxu0 %v2083
    %2183 = vmatprep.subr.mxu0 0.0
    %2184 = vmatpush1.msra.mxu0 %v2084
    %2185 = vmatprep.mubr.f32.mxu0 %v2104
    %2186 = vmatmul.mubr.f32.gmra.mrb[0].mxu0 %v2097
    %v2187 = vpop.f32.mrb[0].mxu0
    %v2188 = vadd.f32 0.0, %v2187
    %v2189 = vpop.f32.mrb[0].mxu0
    %2190 = vdwg.mxu0
    %2191 = vmatprep.subr.mxu0 0.0
    %2192 = vmatpush1.msra.mxu0 %v2053
    %2193 = vmatprep.subr.mxu0 0.0
    %2194 = vmatpush1.msra.mxu0 %v2054
    %2195 = vmatprep.subr.mxu0 0.0
    %2196 = vmatpush1.msra.mxu0 %v2055
    %2197 = vmatprep.subr.mxu0 0.0
    %2198 = vmatpush1.msra.mxu0 %v2056
    %2199 = vmatprep.subr.mxu0 0.0
    %2200 = vmatpush1.msra.mxu0 %v2057
    %2201 = vmatprep.subr.mxu0 0.0
    %2202 = vmatpush1.msra.mxu0 %v2058
    %2203 = vmatprep.subr.mxu0 0.0
    %2204 = vmatpush1.msra.mxu0 %v2059
    %2205 = vmatprep.subr.mxu0 0.0
    %2206 = vmatpush1.msra.mxu0 %v2060
    %2207 = vmatprep.subr.mxu0 0.0
    %2208 = vmatpush1.msra.mxu0 %v2061
    %2209 = vmatprep.subr.mxu0 0.0
    %2210 = vmatpush1.msra.mxu0 %v2062
    %2211 = vmatprep.subr.mxu0 0.0
    %2212 = vmatpush1.msra.mxu0 %v2063
    %2213 = vmatprep.subr.mxu0 0.0
    %2214 = vmatpush1.msra.mxu0 %v2064
    %2215 = vmatprep.subr.mxu0 0.0
    %2216 = vmatpush1.msra.mxu0 %v2065
    %2217 = vmatprep.subr.mxu0 0.0
    %2218 = vmatpush1.msra.mxu0 %v2066
    %2219 = vmatprep.subr.mxu0 0.0
    %2220 = vmatpush1.msra.mxu0 %v2067
    %2221 = vmatprep.subr.mxu0 0.0
    %2222 = vmatpush1.msra.mxu0 %v2068
    %2223 = vmatprep.subr.mxu0 0.0
    %2224 = vmatpush1.msra.mxu0 %v2069
    %2225 = vmatprep.subr.mxu0 0.0
    %2226 = vmatpush1.msra.mxu0 %v2070
    %2227 = vmatprep.subr.mxu0 0.0
    %2228 = vmatpush1.msra.mxu0 %v2071
    %2229 = vmatprep.subr.mxu0 0.0
    %2230 = vmatpush1.msra.mxu0 %v2072
    %2231 = vmatprep.subr.mxu0 0.0
    %2232 = vmatpush1.msra.mxu0 %v2073
    %2233 = vmatprep.subr.mxu0 0.0
    %2234 = vmatpush1.msra.mxu0 %v2074
    %2235 = vmatprep.subr.mxu0 0.0
    %2236 = vmatpush1.msra.mxu0 %v2075
    %2237 = vmatprep.subr.mxu0 0.0
    %2238 = vmatpush1.msra.mxu0 %v2076
    %2239 = vmatprep.subr.mxu0 0.0
    %2240 = vmatpush1.msra.mxu0 %v2077
    %2241 = vmatprep.subr.mxu0 0.0
    %2242 = vmatpush1.msra.mxu0 %v2078
    %2243 = vmatprep.subr.mxu0 0.0
    %2244 = vmatpush1.msra.mxu0 %v2079
    %2245 = vmatprep.subr.mxu0 0.0
    %2246 = vmatpush1.msra.mxu0 %v2080
    %2247 = vmatprep.subr.mxu0 0.0
    %2248 = vmatpush1.msra.mxu0 %v2081
    %2249 = vmatprep.subr.mxu0 0.0
    %2250 = vmatpush1.msra.mxu0 %v2082
    %2251 = vmatprep.subr.mxu0 0.0
    %2252 = vmatpush1.msra.mxu0 %v2083
    %2253 = vmatprep.subr.mxu0 0.0
    %2254 = vmatpush1.msra.mxu0 %v2084
    %2255 = vmatprep.mubr.f32.mxu0 %v2120
    %2256 = vmatmul.mubr.f32.gmra.mrb[0].mxu0 %v2113
    %v2257 = vpop.f32.mrb[0].mxu0
    %v2258 = vadd.f32 0.0, %v2257
    %v2259 = vpop.f32.mrb[0].mxu0
    %2260 = vdwg.mxu0
    %v2261 = vmul.f32 %v2188, 0.03125
    %v2262 = vmul.f32 %v2258, 0.03125
    %v2263 = vmul.f32 %v2261, %v2261
    %v2264 = vsub.f32 %v2262, %v2263
    %v2265 = vmax.f32 %v2264, 0.0
    %v2266 = vadd.f32 %v2265, 1e-05
    %v2267 = vrsqrt.pop %v2266
    %v2268 = vmul.f32 %v2089, %v2267
    %v2269 = vmul.f32 %v2261, %v2268
    %v2270 = vsub.f32 %v2090, %v2269
    %vm2271 = vcmask 130048
    %v2273 = vsel %vm2271, %v2268, 0
    %2275 = vmatprep.subr.mxu0 %v2086
    %2276 = vmatpush1.msra.mxu0 %v2085
    %2277 = vmatprep.subr.mxu0 %v2088
    %2278 = vmatpush1.msra.mxu0 %v2087
    %2279 = vmatprep.subr.mxu0 0.0
    %2280 = vmatpush1.msra.mxu0 0.0
    %2281 = vmatprep.subr.mxu0 0.0
    %2282 = vmatpush1.msra.mxu0 0.0
    %2283 = vmatprep.subr.mxu0 0.0
    %2284 = vmatpush1.msra.mxu0 0.0
    %2285 = vmatprep.subr.mxu0 0.0
    %2286 = vmatpush1.msra.mxu0 0.0
    %2287 = vmatprep.subr.mxu0 0.0
    %2288 = vmatpush1.msra.mxu0 0.0
    %2289 = vmatprep.subr.mxu0 0.0
    %2290 = vmatpush1.msra.mxu0 0.0
    %2291 = vmatprep.subr.mxu0 0.0
    %2292 = vmatpush1.msra.mxu0 0.0
    %2293 = vmatprep.subr.mxu0 0.0
    %2294 = vmatpush1.msra.mxu0 0.0
    %2295 = vmatprep.subr.mxu0 0.0
    %2296 = vmatpush1.msra.mxu0 0.0
    %2297 = vmatprep.subr.mxu0 0.0
    %2298 = vmatpush1.msra.mxu0 0.0
    %2299 = vmatprep.subr.mxu0 0.0
    %2300 = vmatpush1.msra.mxu0 0.0
    %2301 = vmatprep.subr.mxu0 0.0
    %2302 = vmatpush1.msra.mxu0 0.0
    %2303 = vmatprep.subr.mxu0 0.0
    %2304 = vmatpush1.msra.mxu0 0.0
    %2305 = vmatprep.subr.mxu0 0.0
    %2306 = vmatpush1.msra.mxu0 0.0
    %2307 = vmatprep.subr.mxu0 0.0
    %2308 = vmatpush1.msra.mxu0 0.0
    %2309 = vmatprep.subr.mxu0 0.0
    %2310 = vmatpush1.msra.mxu0 0.0
    %2311 = vmatprep.subr.mxu0 0.0
    %2312 = vmatpush1.msra.mxu0 0.0
    %2313 = vmatprep.subr.mxu0 0.0
    %2314 = vmatpush1.msra.mxu0 0.0
    %2315 = vmatprep.subr.mxu0 0.0
    %2316 = vmatpush1.msra.mxu0 0.0
    %2317 = vmatprep.subr.mxu0 0.0
    %2318 = vmatpush1.msra.mxu0 0.0
    %2319 = vmatprep.subr.mxu0 0.0
    %2320 = vmatpush1.msra.mxu0 0.0
    %2321 = vmatprep.subr.mxu0 0.0
    %2322 = vmatpush1.msra.mxu0 0.0
    %2323 = vmatprep.subr.mxu0 0.0
    %2324 = vmatpush1.msra.mxu0 0.0
    %2325 = vmatprep.subr.mxu0 0.0
    %2326 = vmatpush1.msra.mxu0 0.0
    %2327 = vmatprep.subr.mxu0 0.0
    %2328 = vmatpush1.msra.mxu0 0.0
    %2329 = vmatprep.subr.mxu0 0.0
    %2330 = vmatpush1.msra.mxu0 0.0
    %2331 = vmatprep.subr.mxu0 0.0
    %2332 = vmatpush1.msra.mxu0 0.0
    %2333 = vmatprep.subr.mxu0 0.0
    %2334 = vmatpush1.msra.mxu0 0.0
    %2335 = vmatprep.subr.mxu0 0.0
    %2336 = vmatpush1.msra.mxu0 0.0
    %2337 = vmatprep.subr.mxu0 0.0
    %2338 = vmatpush1.msra.mxu0 0.0
    %2339 = vmatprep.mubr.f32.mxu0 0.0
    %2340 = vmatmul.mubr.f32.gmra.mrb[0].mxu0 %v2273
    %v2341 = vpop.f32.mrb[0].mxu0
    %v2342 = vadd.f32 0.0, %v2341
    %v2343 = vpop.f32.mrb[0].mxu0
    %v2344 = vadd.f32 0.0, %v2343
    %2345 = vdwg.mxu0
    %v2347 = vsel %vm2271, %v2270, 0
    %2349 = vmatprep.subr.mxu0 %v2086
    %2350 = vmatpush1.msra.mxu0 %v2085
    %2351 = vmatprep.subr.mxu0 %v2088
    %2352 = vmatpush1.msra.mxu0 %v2087
    %2353 = vmatprep.subr.mxu0 0.0
    %2354 = vmatpush1.msra.mxu0 0.0
    %2355 = vmatprep.subr.mxu0 0.0
    %2356 = vmatpush1.msra.mxu0 0.0
    %2357 = vmatprep.subr.mxu0 0.0
    %2358 = vmatpush1.msra.mxu0 0.0
    %2359 = vmatprep.subr.mxu0 0.0
    %2360 = vmatpush1.msra.mxu0 0.0
    %2361 = vmatprep.subr.mxu0 0.0
    %2362 = vmatpush1.msra.mxu0 0.0
    %2363 = vmatprep.subr.mxu0 0.0
    %2364 = vmatpush1.msra.mxu0 0.0
    %2365 = vmatprep.subr.mxu0 0.0
    %2366 = vmatpush1.msra.mxu0 0.0
    %2367 = vmatprep.subr.mxu0 0.0
    %2368 = vmatpush1.msra.mxu0 0.0
    %2369 = vmatprep.subr.mxu0 0.0
    %2370 = vmatpush1.msra.mxu0 0.0
    %2371 = vmatprep.subr.mxu0 0.0
    %2372 = vmatpush1.msra.mxu0 0.0
    %2373 = vmatprep.subr.mxu0 0.0
    %2374 = vmatpush1.msra.mxu0 0.0
    %2375 = vmatprep.subr.mxu0 0.0
    %2376 = vmatpush1.msra.mxu0 0.0
    %2377 = vmatprep.subr.mxu0 0.0
    %2378 = vmatpush1.msra.mxu0 0.0
    %2379 = vmatprep.subr.mxu0 0.0
    %2380 = vmatpush1.msra.mxu0 0.0
    %2381 = vmatprep.subr.mxu0 0.0
    %2382 = vmatpush1.msra.mxu0 0.0
    %2383 = vmatprep.subr.mxu0 0.0
    %2384 = vmatpush1.msra.mxu0 0.0
    %2385 = vmatprep.subr.mxu0 0.0
    %2386 = vmatpush1.msra.mxu0 0.0
    %2387 = vmatprep.subr.mxu0 0.0
    %2388 = vmatpush1.msra.mxu0 0.0
    %2389 = vmatprep.subr.mxu0 0.0
    %2390 = vmatpush1.msra.mxu0 0.0
    %2391 = vmatprep.subr.mxu0 0.0
    %2392 = vmatpush1.msra.mxu0 0.0
    %2393 = vmatprep.subr.mxu0 0.0
    %2394 = vmatpush1.msra.mxu0 0.0
    %2395 = vmatprep.subr.mxu0 0.0
    %2396 = vmatpush1.msra.mxu0 0.0
    %2397 = vmatprep.subr.mxu0 0.0
    %2398 = vmatpush1.msra.mxu0 0.0
    %2399 = vmatprep.subr.mxu0 0.0
    %2400 = vmatpush1.msra.mxu0 0.0
    %2401 = vmatprep.subr.mxu0 0.0
    %2402 = vmatpush1.msra.mxu0 0.0
    %2403 = vmatprep.subr.mxu0 0.0
    %2404 = vmatpush1.msra.mxu0 0.0
    %2405 = vmatprep.subr.mxu0 0.0
    %2406 = vmatpush1.msra.mxu0 0.0
    %2407 = vmatprep.subr.mxu0 0.0
    %2408 = vmatpush1.msra.mxu0 0.0
    %2409 = vmatprep.subr.mxu0 0.0
    %2410 = vmatpush1.msra.mxu0 0.0
    %2411 = vmatprep.subr.mxu0 0.0
    %2412 = vmatpush1.msra.mxu0 0.0
    %2413 = vmatprep.mubr.f32.mxu0 0.0
    %2414 = vmatmul.mubr.f32.gmra.mrb[0].mxu0 %v2347
    %v2415 = vpop.f32.mrb[0].mxu0
    %v2416 = vadd.f32 0.0, %v2415
    %v2417 = vpop.f32.mrb[0].mxu0
    %v2418 = vadd.f32 0.0, %v2417
    %2419 = vdwg.mxu0
    %v2420 = vlaneseq
    %v2421 = vshrl.u32 %v2420, 7
    %v2422 = vsub.s32 0, %v2421
    %v2423 = vrot.slane %v2342, %v2422
    %v2424 = vlaneseq
    %v2425 = vshrl.u32 %v2424, 7
    %v2426 = vsub.s32 0, %v2425
    %v2427 = vrot.slane %v2344, %v2426
    %v2428 = vmul.f32 %v2047, %v2423
    %v2429 = vmul.f32 %v2049, %v2427
    %v2430 = vlaneseq
    %v2431 = vshrl.u32 %v2430, 7
    %v2432 = vsub.s32 0, %v2431
    %v2433 = vrot.slane %v2416, %v2432
    %v2434 = vlaneseq
    %v2435 = vshrl.u32 %v2434, 7
    %v2436 = vsub.s32 0, %v2435
    %v2437 = vrot.slane %v2418, %v2436
    %v2438 = vadd.f32 %v2428, %v2433
    %v2439 = vadd.f32 %v2429, %v2437
    %v2440 = vmul.f32 %v2438, 0.2
    %v2441 = vmul.f32 %v2439, 0.2
    %v2442 = vmax.f32 %v2438, %v2440
    %v2443 = vmax.f32 %v2439, %v2441
    %v2444 = vld [vmem:[%s37] sm:$0xff]
    %v2445 = vld [vmem:[%s37 + $0x8] sm:$0xff]
    %v2446 = vld [vmem:[%s37 + $0x10] sm:$0xff]
    %v2447 = vld [vmem:[%s37 + $0x18] sm:$0xff]
    %v2448 = vld [vmem:[%s37 + $0x20] sm:$0xff]
    %v2449 = vld [vmem:[%s37 + $0x28] sm:$0xff]
    %v2450 = vld [vmem:[%s37 + $0x30] sm:$0xff]
    %v2451 = vld [vmem:[%s37 + $0x38] sm:$0xff]
    %v2452 = vld [vmem:[%s37 + $0x40] sm:$0xff]
    %v2453 = vld [vmem:[%s37 + $0x48] sm:$0xff]
    %v2454 = vld [vmem:[%s37 + $0x50] sm:$0xff]
    %v2455 = vld [vmem:[%s37 + $0x58] sm:$0xff]
    %v2456 = vld [vmem:[%s37 + $0x60] sm:$0xff]
    %v2457 = vld [vmem:[%s37 + $0x68] sm:$0xff]
    %v2458 = vld [vmem:[%s37 + $0x70] sm:$0xff]
    %v2459 = vld [vmem:[%s37 + $0x78] sm:$0xff]
    %v2460 = vld [vmem:[%s37 + $0x80] sm:$0xff]
    %v2461 = vld [vmem:[%s37 + $0x88] sm:$0xff]
    %v2462 = vld [vmem:[%s37 + $0x90] sm:$0xff]
    %v2463 = vld [vmem:[%s37 + $0x98] sm:$0xff]
    %v2464 = vld [vmem:[%s37 + $0xa0] sm:$0xff]
    %v2465 = vld [vmem:[%s37 + $0xa8] sm:$0xff]
    %v2466 = vld [vmem:[%s37 + $0xb0] sm:$0xff]
    %v2467 = vld [vmem:[%s37 + $0xb8] sm:$0xff]
    %v2468 = vld [vmem:[%s37 + $0xc0] sm:$0xff]
    %v2469 = vld [vmem:[%s37 + $0xc8] sm:$0xff]
    %v2470 = vld [vmem:[%s37 + $0xd0] sm:$0xff]
    %v2471 = vld [vmem:[%s37 + $0xd8] sm:$0xff]
    %v2472 = vld [vmem:[%s37 + $0xe0] sm:$0xff]
    %v2473 = vld [vmem:[%s37 + $0xe8] sm:$0xff]
    %v2474 = vld [vmem:[%s37 + $0xf0] sm:$0xff]
    %v2475 = vld [vmem:[%s37 + $0xf8] sm:$0xff]
    %v2476 = vpack.c.bf16 %v2442, %v2442
    %v2477 = vpack.c.bf16 %v2443, %v2443
    %v2510 = vunpack.c.l.b16 %v2444
    %v2511 = vunpack.c.h.b16 %v2444
    %v2512 = vunpack.c.l.b16 %v2445
    %v2513 = vunpack.c.h.b16 %v2445
    %v2514 = vunpack.c.l.b16 %v2446
    %v2515 = vunpack.c.h.b16 %v2446
    %v2516 = vunpack.c.l.b16 %v2447
    %v2517 = vunpack.c.h.b16 %v2447
    %v2518 = vunpack.c.l.b16 %v2448
    %v2519 = vunpack.c.h.b16 %v2448
    %v2520 = vunpack.c.l.b16 %v2449
    %v2521 = vunpack.c.h.b16 %v2449
    %v2522 = vunpack.c.l.b16 %v2450
    %v2523 = vunpack.c.h.b16 %v2450
    %v2524 = vunpack.c.l.b16 %v2451
    %v2525 = vunpack.c.h.b16 %v2451
    %v2526 = vunpack.c.l.b16 %v2452
    %v2527 = vunpack.c.h.b16 %v2452
    %v2528 = vunpack.c.l.b16 %v2453
    %v2529 = vunpack.c.h.b16 %v2453
    %v2530 = vunpack.c.l.b16 %v2454
    %v2531 = vunpack.c.h.b16 %v2454
    %v2532 = vunpack.c.l.b16 %v2455
    %v2533 = vunpack.c.h.b16 %v2455
    %v2534 = vunpack.c.l.b16 %v2456
    %v2535 = vunpack.c.h.b16 %v2456
    %v2536 = vunpack.c.l.b16 %v2457
    %v2537 = vunpack.c.h.b16 %v2457
    %v2538 = vunpack.c.l.b16 %v2458
    %v2539 = vunpack.c.h.b16 %v2458
    %v2540 = vunpack.c.l.b16 %v2459
    %v2541 = vunpack.c.h.b16 %v2459
    %v2542 = vunpack.c.l.b16 %v2460
    %v2543 = vunpack.c.h.b16 %v2460
    %v2544 = vunpack.c.l.b16 %v2461
    %v2545 = vunpack.c.h.b16 %v2461
    %v2546 = vunpack.c.l.b16 %v2462
    %v2547 = vunpack.c.h.b16 %v2462
    %v2548 = vunpack.c.l.b16 %v2463
    %v2549 = vunpack.c.h.b16 %v2463
    %v2550 = vunpack.c.l.b16 %v2464
    %v2551 = vunpack.c.h.b16 %v2464
    %v2552 = vunpack.c.l.b16 %v2465
    %v2553 = vunpack.c.h.b16 %v2465
    %v2554 = vunpack.c.l.b16 %v2466
    %v2555 = vunpack.c.h.b16 %v2466
    %v2556 = vunpack.c.l.b16 %v2467
    %v2557 = vunpack.c.h.b16 %v2467
    %v2558 = vunpack.c.l.b16 %v2468
    %v2559 = vunpack.c.h.b16 %v2468
    %v2560 = vunpack.c.l.b16 %v2469
    %v2561 = vunpack.c.h.b16 %v2469
    %v2562 = vunpack.c.l.b16 %v2470
    %v2563 = vunpack.c.h.b16 %v2470
    %v2564 = vunpack.c.l.b16 %v2471
    %v2565 = vunpack.c.h.b16 %v2471
    %v2566 = vunpack.c.l.b16 %v2472
    %v2567 = vunpack.c.h.b16 %v2472
    %v2568 = vunpack.c.l.b16 %v2473
    %v2569 = vunpack.c.h.b16 %v2473
    %v2570 = vunpack.c.l.b16 %v2474
    %v2571 = vunpack.c.h.b16 %v2474
    %v2572 = vunpack.c.l.b16 %v2475
    %v2573 = vunpack.c.h.b16 %v2475
    %v2574 = vpack.c.b16 %v2512, %v2510
    %v2575 = vpack.c.b16 %v2513, %v2511
    %v2576 = vpack.c.b16 %v2516, %v2514
    %v2577 = vpack.c.b16 %v2517, %v2515
    %v2578 = vpack.c.b16 %v2520, %v2518
    %v2579 = vpack.c.b16 %v2521, %v2519
    %v2580 = vpack.c.b16 %v2524, %v2522
    %v2581 = vpack.c.b16 %v2525, %v2523
    %v2582 = vpack.c.b16 %v2528, %v2526
    %v2583 = vpack.c.b16 %v2529, %v2527
    %v2584 = vpack.c.b16 %v2532, %v2530
    %v2585 = vpack.c.b16 %v2533, %v2531
    %v2586 = vpack.c.b16 %v2536, %v2534
    %v2587 = vpack.c.b16 %v2537, %v2535
    %v2588 = vpack.c.b16 %v2540, %v2538
    %v2589 = vpack.c.b16 %v2541, %v2539
    %v2590 = vpack.c.b16 %v2544, %v2542
    %v2591 = vpack.c.b16 %v2545, %v2543
    %v2592 = vpack.c.b16 %v2548, %v2546
    %v2593 = vpack.c.b16 %v2549, %v2547
    %v2594 = vpack.c.b16 %v2552, %v2550
    %v2595 = vpack.c.b16 %v2553, %v2551
    %v2596 = vpack.c.b16 %v2556, %v2554
    %v2597 = vpack.c.b16 %v2557, %v2555
    %v2598 = vpack.c.b16 %v2560, %v2558
    %v2599 = vpack.c.b16 %v2561, %v2559
    %v2600 = vpack.c.b16 %v2564, %v2562
    %v2601 = vpack.c.b16 %v2565, %v2563
    %v2602 = vpack.c.b16 %v2568, %v2566
    %v2603 = vpack.c.b16 %v2569, %v2567
    %v2604 = vpack.c.b16 %v2572, %v2570
    %v2605 = vpack.c.b16 %v2573, %v2571
    %2638 = vmatprep.subr.bf16.mxu0 %v2575
    %2639 = vmatpush1.bf16.msra.mxu0 %v2574
    %2640 = vmatprep.subr.bf16.mxu0 %v2577
    %2641 = vmatpush1.bf16.msra.mxu0 %v2576
    %2642 = vmatprep.subr.bf16.mxu0 %v2579
    %2643 = vmatpush1.bf16.msra.mxu0 %v2578
    %2644 = vmatprep.subr.bf16.mxu0 %v2581
    %2645 = vmatpush1.bf16.msra.mxu0 %v2580
    %2646 = vmatprep.subr.bf16.mxu0 %v2583
    %2647 = vmatpush1.bf16.msra.mxu0 %v2582
    %2648 = vmatprep.subr.bf16.mxu0 %v2585
    %2649 = vmatpush1.bf16.msra.mxu0 %v2584
    %2650 = vmatprep.subr.bf16.mxu0 %v2587
    %2651 = vmatpush1.bf16.msra.mxu0 %v2586
    %2652 = vmatprep.subr.bf16.mxu0 %v2589
    %2653 = vmatpush1.bf16.msra.mxu0 %v2588
    %2654 = vmatprep.subr.bf16.mxu0 %v2591
    %2655 = vmatpush1.bf16.msra.mxu0 %v2590
    %2656 = vmatprep.subr.bf16.mxu0 %v2593
    %2657 = vmatpush1.bf16.msra.mxu0 %v2592
    %2658 = vmatprep.subr.bf16.mxu0 %v2595
    %2659 = vmatpush1.bf16.msra.mxu0 %v2594
    %2660 = vmatprep.subr.bf16.mxu0 %v2597
    %2661 = vmatpush1.bf16.msra.mxu0 %v2596
    %2662 = vmatprep.subr.bf16.mxu0 %v2599
    %2663 = vmatpush1.bf16.msra.mxu0 %v2598
    %2664 = vmatprep.subr.bf16.mxu0 %v2601
    %2665 = vmatpush1.bf16.msra.mxu0 %v2600
    %2666 = vmatprep.subr.bf16.mxu0 %v2603
    %2667 = vmatpush1.bf16.msra.mxu0 %v2602
    %2668 = vmatprep.subr.bf16.mxu0 %v2605
    %2669 = vmatpush1.bf16.msra.mxu0 %v2604
    %2670 = vmatprep.mubr.bf16.mxu0 %v2477
    %2671 = vmatmul.mubr.bf16.gmra.mrb[0].mxu0 %v2476
    %v2672 = vpop.f32.mrb[0].mxu0
    %v2673 = vadd.f32 0.0, %v2672
    %v2674 = vpop.f32.mrb[0].mxu0
    %v2675 = vadd.f32 0.0, %v2674
    %v2676 = vpop.f32.mrb[0].mxu0
    %v2677 = vpop.f32.mrb[0].mxu0
    %2678 = vdwg.mxu0
    %v2679 = vld [vmem:[%s39] sm:$0xff]
    %v2680 = vld [vmem:[%s39 + $0x8] sm:$0xff]
    %v2681 = vld [vmem:[%s39 + $0x10] sm:$0xff]
    %v2682 = vld [vmem:[%s39 + $0x18] sm:$0xff]
    %v2683 = vld [vmem:[%s39 + $0x20] sm:$0xff]
    %v2684 = vld [vmem:[%s39 + $0x28] sm:$0xff]
    %v2685 = vld [vmem:[%s39 + $0x30] sm:$0xff]
    %v2686 = vld [vmem:[%s39 + $0x38] sm:$0xff]
    %v2687 = vld [vmem:[%s39 + $0x40] sm:$0xff]
    %v2688 = vld [vmem:[%s39 + $0x48] sm:$0xff]
    %v2689 = vld [vmem:[%s39 + $0x50] sm:$0xff]
    %v2690 = vld [vmem:[%s39 + $0x58] sm:$0xff]
    %v2691 = vld [vmem:[%s39 + $0x60] sm:$0xff]
    %v2692 = vld [vmem:[%s39 + $0x68] sm:$0xff]
    %v2693 = vld [vmem:[%s39 + $0x70] sm:$0xff]
    %v2694 = vld [vmem:[%s39 + $0x78] sm:$0xff]
    %v2695 = vld [vmem:[%s39 + $0x80] sm:$0xff]
    %v2696 = vld [vmem:[%s39 + $0x88] sm:$0xff]
    %v2697 = vld [vmem:[%s39 + $0x90] sm:$0xff]
    %v2698 = vld [vmem:[%s39 + $0x98] sm:$0xff]
    %v2699 = vld [vmem:[%s39 + $0xa0] sm:$0xff]
    %v2700 = vld [vmem:[%s39 + $0xa8] sm:$0xff]
    %v2701 = vld [vmem:[%s39 + $0xb0] sm:$0xff]
    %v2702 = vld [vmem:[%s39 + $0xb8] sm:$0xff]
    %v2703 = vld [vmem:[%s39 + $0xc0] sm:$0xff]
    %v2704 = vld [vmem:[%s39 + $0xc8] sm:$0xff]
    %v2705 = vld [vmem:[%s39 + $0xd0] sm:$0xff]
    %v2706 = vld [vmem:[%s39 + $0xd8] sm:$0xff]
    %v2707 = vld [vmem:[%s39 + $0xe0] sm:$0xff]
    %v2708 = vld [vmem:[%s39 + $0xe8] sm:$0xff]
    %v2709 = vld [vmem:[%s39 + $0xf0] sm:$0xff]
    %v2710 = vld [vmem:[%s39 + $0xf8] sm:$0xff]
    %v2711 = vld [vmem:[#allocation16] sm:$0xff]
    %v2712 = vld [vmem:[#allocation16 + $0x8] sm:$0xff]
    %v2713 = vld [vmem:[#allocation16 + $0x10] sm:$0xff]
    %v2714 = vld [vmem:[#allocation16 + $0x18] sm:$0xff]
    %v2715 = vld [vmem:[#allocation16 + $0x20] sm:$0xff]
    %v2716 = vld [vmem:[#allocation16 + $0x28] sm:$0xff]
    %v2717 = vld [vmem:[#allocation16 + $0x30] sm:$0xff]
    %v2718 = vld [vmem:[#allocation16 + $0x38] sm:$0xff]
    %v2719 = vld [vmem:[%s43] sm:$0x1]
    %v2720 = vld [vmem:[%s45] sm:$0x1]
    %v2721 = vsel %vm814, %v2673, 0.0
    %v2722 = vrot.slane %v2721, 4
    %v2723 = vadd.f32 %v2721, %v2722
    %v2724 = vrot.slane %v2723, 2
    %v2725 = vadd.f32 %v2723, %v2724
    %v2726 = vrot.slane %v2725, 1
    %v2727 = vadd.f32 %v2725, %v2726
    %v2728 = vsel %vm814, %v2675, 0.0
    %v2729 = vrot.slane %v2728, 4
    %v2730 = vadd.f32 %v2728, %v2729
    %v2731 = vrot.slane %v2730, 2
    %v2732 = vadd.f32 %v2730, %v2731
    %v2733 = vrot.slane %v2732, 1
    %v2734 = vadd.f32 %v2732, %v2733
    %v2735 = vmul.f32 %v2673, %v2673
    %v2736 = vmul.f32 %v2675, %v2675
    %v2737 = vsel %vm814, %v2735, 0.0
    %v2738 = vrot.slane %v2737, 4
    %v2739 = vadd.f32 %v2737, %v2738
    %v2740 = vrot.slane %v2739, 2
    %v2741 = vadd.f32 %v2739, %v2740
    %v2742 = vrot.slane %v2741, 1
    %v2743 = vadd.f32 %v2741, %v2742
    %v2744 = vsel %vm814, %v2736, 0.0
    %v2745 = vrot.slane %v2744, 4
    %v2746 = vadd.f32 %v2744, %v2745
    %v2747 = vrot.slane %v2746, 2
    %v2748 = vadd.f32 %v2746, %v2747
    %v2749 = vrot.slane %v2748, 1
    %v2750 = vadd.f32 %v2748, %v2749
    %2751 = vmatprep.subr.mxu0 0.0
    %2752 = vmatpush1.msra.mxu0 %v2679
    %2753 = vmatprep.subr.mxu0 0.0
    %2754 = vmatpush1.msra.mxu0 %v2680
    %2755 = vmatprep.subr.mxu0 0.0
    %2756 = vmatpush1.msra.mxu0 %v2681
    %2757 = vmatprep.subr.mxu0 0.0
    %2758 = vmatpush1.msra.mxu0 %v2682
    %2759 = vmatprep.subr.mxu0 0.0
    %2760 = vmatpush1.msra.mxu0 %v2683
    %2761 = vmatprep.subr.mxu0 0.0
    %2762 = vmatpush1.msra.mxu0 %v2684
    %2763 = vmatprep.subr.mxu0 0.0
    %2764 = vmatpush1.msra.mxu0 %v2685
    %2765 = vmatprep.subr.mxu0 0.0
    %2766 = vmatpush1.msra.mxu0 %v2686
    %2767 = vmatprep.subr.mxu0 0.0
    %2768 = vmatpush1.msra.mxu0 %v2687
    %2769 = vmatprep.subr.mxu0 0.0
    %2770 = vmatpush1.msra.mxu0 %v2688
    %2771 = vmatprep.subr.mxu0 0.0
    %2772 = vmatpush1.msra.mxu0 %v2689
    %2773 = vmatprep.subr.mxu0 0.0
    %2774 = vmatpush1.msra.mxu0 %v2690
    %2775 = vmatprep.subr.mxu0 0.0
    %2776 = vmatpush1.msra.mxu0 %v2691
    %2777 = vmatprep.subr.mxu0 0.0
    %2778 = vmatpush1.msra.mxu0 %v2692
    %2779 = vmatprep.subr.mxu0 0.0
    %2780 = vmatpush1.msra.mxu0 %v2693
    %2781 = vmatprep.subr.mxu0 0.0
    %2782 = vmatpush1.msra.mxu0 %v2694
    %2783 = vmatprep.subr.mxu0 0.0
    %2784 = vmatpush1.msra.mxu0 %v2695
    %2785 = vmatprep.subr.mxu0 0.0
    %2786 = vmatpush1.msra.mxu0 %v2696
    %2787 = vmatprep.subr.mxu0 0.0
    %2788 = vmatpush1.msra.mxu0 %v2697
    %2789 = vmatprep.subr.mxu0 0.0
    %2790 = vmatpush1.msra.mxu0 %v2698
    %2791 = vmatprep.subr.mxu0 0.0
    %2792 = vmatpush1.msra.mxu0 %v2699
    %2793 = vmatprep.subr.mxu0 0.0
    %2794 = vmatpush1.msra.mxu0 %v2700
    %2795 = vmatprep.subr.mxu0 0.0
    %2796 = vmatpush1.msra.mxu0 %v2701
    %2797 = vmatprep.subr.mxu0 0.0
    %2798 = vmatpush1.msra.mxu0 %v2702
    %2799 = vmatprep.subr.mxu0 0.0
    %2800 = vmatpush1.msra.mxu0 %v2703
    %2801 = vmatprep.subr.mxu0 0.0
    %2802 = vmatpush1.msra.mxu0 %v2704
    %2803 = vmatprep.subr.mxu0 0.0
    %2804 = vmatpush1.msra.mxu0 %v2705
    %2805 = vmatprep.subr.mxu0 0.0
    %2806 = vmatpush1.msra.mxu0 %v2706
    %2807 = vmatprep.subr.mxu0 0.0
    %2808 = vmatpush1.msra.mxu0 %v2707
    %2809 = vmatprep.subr.mxu0 0.0
    %2810 = vmatpush1.msra.mxu0 %v2708
    %2811 = vmatprep.subr.mxu0 0.0
    %2812 = vmatpush1.msra.mxu0 %v2709
    %2813 = vmatprep.subr.mxu0 0.0
    %2814 = vmatpush1.msra.mxu0 %v2710
    %2815 = vmatprep.mubr.f32.mxu0 %v2734
    %2816 = vmatmul.mubr.f32.gmra.mrb[0].mxu0 %v2727
    %v2817 = vpop.f32.mrb[0].mxu0
    %v2818 = vadd.f32 0.0, %v2817
    %v2819 = vpop.f32.mrb[0].mxu0
    %2820 = vdwg.mxu0
    %2821 = vmatprep.subr.mxu0 0.0
    %2822 = vmatpush1.msra.mxu0 %v2679
    %2823 = vmatprep.subr.mxu0 0.0
    %2824 = vmatpush1.msra.mxu0 %v2680
    %2825 = vmatprep.subr.mxu0 0.0
    %2826 = vmatpush1.msra.mxu0 %v2681
    %2827 = vmatprep.subr.mxu0 0.0
    %2828 = vmatpush1.msra.mxu0 %v2682
    %2829 = vmatprep.subr.mxu0 0.0
    %2830 = vmatpush1.msra.mxu0 %v2683
    %2831 = vmatprep.subr.mxu0 0.0
    %2832 = vmatpush1.msra.mxu0 %v2684
    %2833 = vmatprep.subr.mxu0 0.0
    %2834 = vmatpush1.msra.mxu0 %v2685
    %2835 = vmatprep.subr.mxu0 0.0
    %2836 = vmatpush1.msra.mxu0 %v2686
    %2837 = vmatprep.subr.mxu0 0.0
    %2838 = vmatpush1.msra.mxu0 %v2687
    %2839 = vmatprep.subr.mxu0 0.0
    %2840 = vmatpush1.msra.mxu0 %v2688
    %2841 = vmatprep.subr.mxu0 0.0
    %2842 = vmatpush1.msra.mxu0 %v2689
    %2843 = vmatprep.subr.mxu0 0.0
    %2844 = vmatpush1.msra.mxu0 %v2690
    %2845 = vmatprep.subr.mxu0 0.0
    %2846 = vmatpush1.msra.mxu0 %v2691
    %2847 = vmatprep.subr.mxu0 0.0
    %2848 = vmatpush1.msra.mxu0 %v2692
    %2849 = vmatprep.subr.mxu0 0.0
    %2850 = vmatpush1.msra.mxu0 %v2693
    %2851 = vmatprep.subr.mxu0 0.0
    %2852 = vmatpush1.msra.mxu0 %v2694
    %2853 = vmatprep.subr.mxu0 0.0
    %2854 = vmatpush1.msra.mxu0 %v2695
    %2855 = vmatprep.subr.mxu0 0.0
    %2856 = vmatpush1.msra.mxu0 %v2696
    %2857 = vmatprep.subr.mxu0 0.0
    %2858 = vmatpush1.msra.mxu0 %v2697
    %2859 = vmatprep.subr.mxu0 0.0
    %2860 = vmatpush1.msra.mxu0 %v2698
    %2861 = vmatprep.subr.mxu0 0.0
    %2862 = vmatpush1.msra.mxu0 %v2699
    %2863 = vmatprep.subr.mxu0 0.0
    %2864 = vmatpush1.msra.mxu0 %v2700
    %2865 = vmatprep.subr.mxu0 0.0
    %2866 = vmatpush1.msra.mxu0 %v2701
    %2867 = vmatprep.subr.mxu0 0.0
    %2868 = vmatpush1.msra.mxu0 %v2702
    %2869 = vmatprep.subr.mxu0 0.0
    %2870 = vmatpush1.msra.mxu0 %v2703
    %2871 = vmatprep.subr.mxu0 0.0
    %2872 = vmatpush1.msra.mxu0 %v2704
    %2873 = vmatprep.subr.mxu0 0.0
    %2874 = vmatpush1.msra.mxu0 %v2705
    %2875 = vmatprep.subr.mxu0 0.0
    %2876 = vmatpush1.msra.mxu0 %v2706
    %2877 = vmatprep.subr.mxu0 0.0
    %2878 = vmatpush1.msra.mxu0 %v2707
    %2879 = vmatprep.subr.mxu0 0.0
    %2880 = vmatpush1.msra.mxu0 %v2708
    %2881 = vmatprep.subr.mxu0 0.0
    %2882 = vmatpush1.msra.mxu0 %v2709
    %2883 = vmatprep.subr.mxu0 0.0
    %2884 = vmatpush1.msra.mxu0 %v2710
    %2885 = vmatprep.mubr.f32.mxu0 %v2750
    %2886 = vmatmul.mubr.f32.gmra.mrb[0].mxu0 %v2743
    %v2887 = vpop.f32.mrb[0].mxu0
    %v2888 = vadd.f32 0.0, %v2887
    %v2889 = vpop.f32.mrb[0].mxu0
    %2890 = vdwg.mxu0
    %v2891 = vmul.f32 %v2818, 0.0625
    %v2892 = vmul.f32 %v2888, 0.0625
    %v2893 = vmul.f32 %v2891, %v2891
    %v2894 = vsub.f32 %v2892, %v2893
    %v2895 = vmax.f32 %v2894, 0.0
    %v2896 = vadd.f32 %v2895, 1e-05
    %v2897 = vrsqrt.pop %v2896
    %v2898 = vmul.f32 %v2719, %v2897
    %v2899 = vmul.f32 %v2891, %v2898
    %v2900 = vsub.f32 %v2720, %v2899
    %vm2901 = vcmask 261120
    %v2903 = vsel %vm2901, %v2898, 0
    %2905 = vmatprep.subr.mxu0 %v2712
    %2906 = vmatpush1.msra.mxu0 %v2711
    %2907 = vmatprep.subr.mxu0 %v2714
    %2908 = vmatpush1.msra.mxu0 %v2713
    %2909 = vmatprep.subr.mxu0 %v2716
    %2910 = vmatpush1.msra.mxu0 %v2715
    %2911 = vmatprep.subr.mxu0 %v2718
    %2912 = vmatpush1.msra.mxu0 %v2717
    %2913 = vmatprep.subr.mxu0 0.0
    %2914 = vmatpush1.msra.mxu0 0.0
    %2915 = vmatprep.subr.mxu0 0.0
    %2916 = vmatpush1.msra.mxu0 0.0
    %2917 = vmatprep.subr.mxu0 0.0
    %2918 = vmatpush1.msra.mxu0 0.0
    %2919 = vmatprep.subr.mxu0 0.0
    %2920 = vmatpush1.msra.mxu0 0.0
    %2921 = vmatprep.subr.mxu0 0.0
    %2922 = vmatpush1.msra.mxu0 0.0
    %2923 = vmatprep.subr.mxu0 0.0
    %2924 = vmatpush1.msra.mxu0 0.0
    %2925 = vmatprep.subr.mxu0 0.0
    %2926 = vmatpush1.msra.mxu0 0.0
    %2927 = vmatprep.subr.mxu0 0.0
    %2928 = vmatpush1.msra.mxu0 0.0
    %2929 = vmatprep.subr.mxu0 0.0
    %2930 = vmatpush1.msra.mxu0 0.0
    %2931 = vmatprep.subr.mxu0 0.0
    %2932 = vmatpush1.msra.mxu0 0.0
    %2933 = vmatprep.subr.mxu0 0.0
    %2934 = vmatpush1.msra.mxu0 0.0
    %2935 = vmatprep.subr.mxu0 0.0
    %2936 = vmatpush1.msra.mxu0 0.0
    %2937 = vmatprep.subr.mxu0 0.0
    %2938 = vmatpush1.msra.mxu0 0.0
    %2939 = vmatprep.subr.mxu0 0.0
    %2940 = vmatpush1.msra.mxu0 0.0
    %2941 = vmatprep.subr.mxu0 0.0
    %2942 = vmatpush1.msra.mxu0 0.0
    %2943 = vmatprep.subr.mxu0 0.0
    %2944 = vmatpush1.msra.mxu0 0.0
    %2945 = vmatprep.subr.mxu0 0.0
    %2946 = vmatpush1.msra.mxu0 0.0
    %2947 = vmatprep.subr.mxu0 0.0
    %2948 = vmatpush1.msra.mxu0 0.0
    %2949 = vmatprep.subr.mxu0 0.0
    %2950 = vmatpush1.msra.mxu0 0.0
    %2951 = vmatprep.subr.mxu0 0.0
    %2952 = vmatpush1.msra.mxu0 0.0
    %2953 = vmatprep.subr.mxu0 0.0
    %2954 = vmatpush1.msra.mxu0 0.0
    %2955 = vmatprep.subr.mxu0 0.0
    %2956 = vmatpush1.msra.mxu0 0.0
    %2957 = vmatprep.subr.mxu0 0.0
    %2958 = vmatpush1.msra.mxu0 0.0
    %2959 = vmatprep.subr.mxu0 0.0
    %2960 = vmatpush1.msra.mxu0 0.0
    %2961 = vmatprep.subr.mxu0 0.0
    %2962 = vmatpush1.msra.mxu0 0.0
    %2963 = vmatprep.subr.mxu0 0.0
    %2964 = vmatpush1.msra.mxu0 0.0
    %2965 = vmatprep.subr.mxu0 0.0
    %2966 = vmatpush1.msra.mxu0 0.0
    %2967 = vmatprep.subr.mxu0 0.0
    %2968 = vmatpush1.msra.mxu0 0.0
    %2969 = vmatprep.mubr.f32.mxu0 0.0
    %2970 = vmatmul.mubr.f32.gmra.mrb[0].mxu0 %v2903
    %v2971 = vpop.f32.mrb[0].mxu0
    %v2972 = vadd.f32 0.0, %v2971
    %v2973 = vpop.f32.mrb[0].mxu0
    %v2974 = vadd.f32 0.0, %v2973
    %2975 = vdwg.mxu0
    %v2977 = vsel %vm2901, %v2900, 0
    %2979 = vmatprep.subr.mxu0 %v2712
    %2980 = vmatpush1.msra.mxu0 %v2711
    %2981 = vmatprep.subr.mxu0 %v2714
    %2982 = vmatpush1.msra.mxu0 %v2713
    %2983 = vmatprep.subr.mxu0 %v2716
    %2984 = vmatpush1.msra.mxu0 %v2715
    %2985 = vmatprep.subr.mxu0 %v2718
    %2986 = vmatpush1.msra.mxu0 %v2717
    %2987 = vmatprep.subr.mxu0 0.0
    %2988 = vmatpush1.msra.mxu0 0.0
    %2989 = vmatprep.subr.mxu0 0.0
    %2990 = vmatpush1.msra.mxu0 0.0
    %2991 = vmatprep.subr.mxu0 0.0
    %2992 = vmatpush1.msra.mxu0 0.0
    %2993 = vmatprep.subr.mxu0 0.0
    %2994 = vmatpush1.msra.mxu0 0.0
    %2995 = vmatprep.subr.mxu0 0.0
    %2996 = vmatpush1.msra.mxu0 0.0
    %2997 = vmatprep.subr.mxu0 0.0
    %2998 = vmatpush1.msra.mxu0 0.0
    %2999 = vmatprep.subr.mxu0 0.0
    %3000 = vmatpush1.msra.mxu0 0.0
    %3001 = vmatprep.subr.mxu0 0.0
    %3002 = vmatpush1.msra.mxu0 0.0
    %3003 = vmatprep.subr.mxu0 0.0
    %3004 = vmatpush1.msra.mxu0 0.0
    %3005 = vmatprep.subr.mxu0 0.0
    %3006 = vmatpush1.msra.mxu0 0.0
    %3007 = vmatprep.subr.mxu0 0.0
    %3008 = vmatpush1.msra.mxu0 0.0
    %3009 = vmatprep.subr.mxu0 0.0
    %3010 = vmatpush1.msra.mxu0 0.0
    %3011 = vmatprep.subr.mxu0 0.0
    %3012 = vmatpush1.msra.mxu0 0.0
    %3013 = vmatprep.subr.mxu0 0.0
    %3014 = vmatpush1.msra.mxu0 0.0
    %3015 = vmatprep.subr.mxu0 0.0
    %3016 = vmatpush1.msra.mxu0 0.0
    %3017 = vmatprep.subr.mxu0 0.0
    %3018 = vmatpush1.msra.mxu0 0.0
    %3019 = vmatprep.subr.mxu0 0.0
    %3020 = vmatpush1.msra.mxu0 0.0
    %3021 = vmatprep.subr.mxu0 0.0
    %3022 = vmatpush1.msra.mxu0 0.0
    %3023 = vmatprep.subr.mxu0 0.0
    %3024 = vmatpush1.msra.mxu0 0.0
    %3025 = vmatprep.subr.mxu0 0.0
    %3026 = vmatpush1.msra.mxu0 0.0
    %3027 = vmatprep.subr.mxu0 0.0
    %3028 = vmatpush1.msra.mxu0 0.0
    %3029 = vmatprep.subr.mxu0 0.0
    %3030 = vmatpush1.msra.mxu0 0.0
    %3031 = vmatprep.subr.mxu0 0.0
    %3032 = vmatpush1.msra.mxu0 0.0
    %3033 = vmatprep.subr.mxu0 0.0
    %3034 = vmatpush1.msra.mxu0 0.0
    %3035 = vmatprep.subr.mxu0 0.0
    %3036 = vmatpush1.msra.mxu0 0.0
    %3037 = vmatprep.subr.mxu0 0.0
    %3038 = vmatpush1.msra.mxu0 0.0
    %3039 = vmatprep.subr.mxu0 0.0
    %3040 = vmatpush1.msra.mxu0 0.0
    %3041 = vmatprep.subr.mxu0 0.0
    %3042 = vmatpush1.msra.mxu0 0.0
    %3043 = vmatprep.mubr.f32.mxu0 0.0
    %3044 = vmatmul.mubr.f32.gmra.mrb[0].mxu0 %v2977
    %v3045 = vpop.f32.mrb[0].mxu0
    %v3046 = vadd.f32 0.0, %v3045
    %v3047 = vpop.f32.mrb[0].mxu0
    %v3048 = vadd.f32 0.0, %v3047
    %3049 = vdwg.mxu0
    %v3050 = vlaneseq
    %v3051 = vshrl.u32 %v3050, 7
    %v3052 = vsub.s32 0, %v3051
    %v3053 = vrot.slane %v2972, %v3052
    %v3054 = vlaneseq
    %v3055 = vshrl.u32 %v3054, 7
    %v3056 = vsub.s32 0, %v3055
    %v3057 = vrot.slane %v2974, %v3056
    %v3058 = vmul.f32 %v2673, %v3053
    %v3059 = vmul.f32 %v2675, %v3057
    %v3060 = vlaneseq
    %v3061 = vshrl.u32 %v3060, 7
    %v3062 = vsub.s32 0, %v3061
    %v3063 = vrot.slane %v3046, %v3062
    %v3064 = vlaneseq
    %v3065 = vshrl.u32 %v3064, 7
    %v3066 = vsub.s32 0, %v3065
    %v3067 = vrot.slane %v3048, %v3066
    %v3068 = vadd.f32 %v3058, %v3063
    %v3069 = vadd.f32 %v3059, %v3067
    %v3070 = vmul.f32 %v3068, 0.2
    %v3071 = vmul.f32 %v3069, 0.2
    %v3072 = vmax.f32 %v3068, %v3070
    %v3073 = vmax.f32 %v3069, %v3071
    %v3074 = vld [vmem:[%s47] sm:$0xff]
    %v3075 = vld [vmem:[%s47 + $0x8] sm:$0xff]
    %v3076 = vld [vmem:[%s47 + $0x10] sm:$0xff]
    %v3077 = vld [vmem:[%s47 + $0x18] sm:$0xff]
    %v3078 = vld [vmem:[%s47 + $0x20] sm:$0xff]
    %v3079 = vld [vmem:[%s47 + $0x28] sm:$0xff]
    %v3080 = vld [vmem:[%s47 + $0x30] sm:$0xff]
    %v3081 = vld [vmem:[%s47 + $0x38] sm:$0xff]
    %v3082 = vld [vmem:[%s47 + $0x40] sm:$0xff]
    %v3083 = vld [vmem:[%s47 + $0x48] sm:$0xff]
    %v3084 = vld [vmem:[%s47 + $0x50] sm:$0xff]
    %v3085 = vld [vmem:[%s47 + $0x58] sm:$0xff]
    %v3086 = vld [vmem:[%s47 + $0x60] sm:$0xff]
    %v3087 = vld [vmem:[%s47 + $0x68] sm:$0xff]
    %v3088 = vld [vmem:[%s47 + $0x70] sm:$0xff]
    %v3089 = vld [vmem:[%s47 + $0x78] sm:$0xff]
    %v3090 = vld [vmem:[%s47 + $0x80] sm:$0xff]
    %v3091 = vld [vmem:[%s47 + $0x88] sm:$0xff]
    %v3092 = vld [vmem:[%s47 + $0x90] sm:$0xff]
    %v3093 = vld [vmem:[%s47 + $0x98] sm:$0xff]
    %v3094 = vld [vmem:[%s47 + $0xa0] sm:$0xff]
    %v3095 = vld [vmem:[%s47 + $0xa8] sm:$0xff]
    %v3096 = vld [vmem:[%s47 + $0xb0] sm:$0xff]
    %v3097 = vld [vmem:[%s47 + $0xb8] sm:$0xff]
    %v3098 = vld [vmem:[%s47 + $0xc0] sm:$0xff]
    %v3099 = vld [vmem:[%s47 + $0xc8] sm:$0xff]
    %v3100 = vld [vmem:[%s47 + $0xd0] sm:$0xff]
    %v3101 = vld [vmem:[%s47 + $0xd8] sm:$0xff]
    %v3102 = vld [vmem:[%s47 + $0xe0] sm:$0xff]
    %v3103 = vld [vmem:[%s47 + $0xe8] sm:$0xff]
    %v3104 = vld [vmem:[%s47 + $0xf0] sm:$0xff]
    %v3105 = vld [vmem:[%s47 + $0xf8] sm:$0xff]
    %v3106 = vpack.c.bf16 %v3072, %v3072
    %v3107 = vpack.c.bf16 %v3073, %v3073
    %v3140 = vunpack.c.l.b16 %v3074
    %v3141 = vunpack.c.h.b16 %v3074
    %v3142 = vunpack.c.l.b16 %v3075
    %v3143 = vunpack.c.h.b16 %v3075
    %v3144 = vunpack.c.l.b16 %v3076
    %v3145 = vunpack.c.h.b16 %v3076
    %v3146 = vunpack.c.l.b16 %v3077
    %v3147 = vunpack.c.h.b16 %v3077
    %v3148 = vunpack.c.l.b16 %v3078
    %v3149 = vunpack.c.h.b16 %v3078
    %v3150 = vunpack.c.l.b16 %v3079
    %v3151 = vunpack.c.h.b16 %v3079
    %v3152 = vunpack.c.l.b16 %v3080
    %v3153 = vunpack.c.h.b16 %v3080
    %v3154 = vunpack.c.l.b16 %v3081
    %v3155 = vunpack.c.h.b16 %v3081
    %v3156 = vunpack.c.l.b16 %v3082
    %v3157 = vunpack.c.h.b16 %v3082
    %v3158 = vunpack.c.l.b16 %v3083
    %v3159 = vunpack.c.h.b16 %v3083
    %v3160 = vunpack.c.l.b16 %v3084
    %v3161 = vunpack.c.h.b16 %v3084
    %v3162 = vunpack.c.l.b16 %v3085
    %v3163 = vunpack.c.h.b16 %v3085
    %v3164 = vunpack.c.l.b16 %v3086
    %v3165 = vunpack.c.h.b16 %v3086
    %v3166 = vunpack.c.l.b16 %v3087
    %v3167 = vunpack.c.h.b16 %v3087
    %v3168 = vunpack.c.l.b16 %v3088
    %v3169 = vunpack.c.h.b16 %v3088
    %v3170 = vunpack.c.l.b16 %v3089
    %v3171 = vunpack.c.h.b16 %v3089
    %v3172 = vunpack.c.l.b16 %v3090
    %v3173 = vunpack.c.h.b16 %v3090
    %v3174 = vunpack.c.l.b16 %v3091
    %v3175 = vunpack.c.h.b16 %v3091
    %v3176 = vunpack.c.l.b16 %v3092
    %v3177 = vunpack.c.h.b16 %v3092
    %v3178 = vunpack.c.l.b16 %v3093
    %v3179 = vunpack.c.h.b16 %v3093
    %v3180 = vunpack.c.l.b16 %v3094
    %v3181 = vunpack.c.h.b16 %v3094
    %v3182 = vunpack.c.l.b16 %v3095
    %v3183 = vunpack.c.h.b16 %v3095
    %v3184 = vunpack.c.l.b16 %v3096
    %v3185 = vunpack.c.h.b16 %v3096
    %v3186 = vunpack.c.l.b16 %v3097
    %v3187 = vunpack.c.h.b16 %v3097
    %v3188 = vunpack.c.l.b16 %v3098
    %v3189 = vunpack.c.h.b16 %v3098
    %v3190 = vunpack.c.l.b16 %v3099
    %v3191 = vunpack.c.h.b16 %v3099
    %v3192 = vunpack.c.l.b16 %v3100
    %v3193 = vunpack.c.h.b16 %v3100
    %v3194 = vunpack.c.l.b16 %v3101
    %v3195 = vunpack.c.h.b16 %v3101
    %v3196 = vunpack.c.l.b16 %v3102
    %v3197 = vunpack.c.h.b16 %v3102
    %v3198 = vunpack.c.l.b16 %v3103
    %v3199 = vunpack.c.h.b16 %v3103
    %v3200 = vunpack.c.l.b16 %v3104
    %v3201 = vunpack.c.h.b16 %v3104
    %v3202 = vunpack.c.l.b16 %v3105
    %v3203 = vunpack.c.h.b16 %v3105
    %v3204 = vpack.c.b16 %v3142, %v3140
    %v3205 = vpack.c.b16 %v3143, %v3141
    %v3206 = vpack.c.b16 %v3146, %v3144
    %v3207 = vpack.c.b16 %v3147, %v3145
    %v3208 = vpack.c.b16 %v3150, %v3148
    %v3209 = vpack.c.b16 %v3151, %v3149
    %v3210 = vpack.c.b16 %v3154, %v3152
    %v3211 = vpack.c.b16 %v3155, %v3153
    %v3212 = vpack.c.b16 %v3158, %v3156
    %v3213 = vpack.c.b16 %v3159, %v3157
    %v3214 = vpack.c.b16 %v3162, %v3160
    %v3215 = vpack.c.b16 %v3163, %v3161
    %v3216 = vpack.c.b16 %v3166, %v3164
    %v3217 = vpack.c.b16 %v3167, %v3165
    %v3218 = vpack.c.b16 %v3170, %v3168
    %v3219 = vpack.c.b16 %v3171, %v3169
    %v3220 = vpack.c.b16 %v3174, %v3172
    %v3221 = vpack.c.b16 %v3175, %v3173
    %v3222 = vpack.c.b16 %v3178, %v3176
    %v3223 = vpack.c.b16 %v3179, %v3177
    %v3224 = vpack.c.b16 %v3182, %v3180
    %v3225 = vpack.c.b16 %v3183, %v3181
    %v3226 = vpack.c.b16 %v3186, %v3184
    %v3227 = vpack.c.b16 %v3187, %v3185
    %v3228 = vpack.c.b16 %v3190, %v3188
    %v3229 = vpack.c.b16 %v3191, %v3189
    %v3230 = vpack.c.b16 %v3194, %v3192
    %v3231 = vpack.c.b16 %v3195, %v3193
    %v3232 = vpack.c.b16 %v3198, %v3196
    %v3233 = vpack.c.b16 %v3199, %v3197
    %v3234 = vpack.c.b16 %v3202, %v3200
    %v3235 = vpack.c.b16 %v3203, %v3201
    %3268 = vmatprep.subr.bf16.mxu0 %v3205
    %3269 = vmatpush1.bf16.msra.mxu0 %v3204
    %3270 = vmatprep.subr.bf16.mxu0 %v3207
    %3271 = vmatpush1.bf16.msra.mxu0 %v3206
    %3272 = vmatprep.subr.bf16.mxu0 %v3209
    %3273 = vmatpush1.bf16.msra.mxu0 %v3208
    %3274 = vmatprep.subr.bf16.mxu0 %v3211
    %3275 = vmatpush1.bf16.msra.mxu0 %v3210
    %3276 = vmatprep.subr.bf16.mxu0 %v3213
    %3277 = vmatpush1.bf16.msra.mxu0 %v3212
    %3278 = vmatprep.subr.bf16.mxu0 %v3215
    %3279 = vmatpush1.bf16.msra.mxu0 %v3214
    %3280 = vmatprep.subr.bf16.mxu0 %v3217
    %3281 = vmatpush1.bf16.msra.mxu0 %v3216
    %3282 = vmatprep.subr.bf16.mxu0 %v3219
    %3283 = vmatpush1.bf16.msra.mxu0 %v3218
    %3284 = vmatprep.subr.bf16.mxu0 %v3221
    %3285 = vmatpush1.bf16.msra.mxu0 %v3220
    %3286 = vmatprep.subr.bf16.mxu0 %v3223
    %3287 = vmatpush1.bf16.msra.mxu0 %v3222
    %3288 = vmatprep.subr.bf16.mxu0 %v3225
    %3289 = vmatpush1.bf16.msra.mxu0 %v3224
    %3290 = vmatprep.subr.bf16.mxu0 %v3227
    %3291 = vmatpush1.bf16.msra.mxu0 %v3226
    %3292 = vmatprep.subr.bf16.mxu0 %v3229
    %3293 = vmatpush1.bf16.msra.mxu0 %v3228
    %3294 = vmatprep.subr.bf16.mxu0 %v3231
    %3295 = vmatpush1.bf16.msra.mxu0 %v3230
    %3296 = vmatprep.subr.bf16.mxu0 %v3233
    %3297 = vmatpush1.bf16.msra.mxu0 %v3232
    %3298 = vmatprep.subr.bf16.mxu0 %v3235
    %3299 = vmatpush1.bf16.msra.mxu0 %v3234
    %3300 = vmatprep.mubr.bf16.mxu0 %v3107
    %3301 = vmatmul.mubr.bf16.gmra.mrb[0].mxu0 %v3106
    %v3302 = vpop.f32.mrb[0].mxu0
    %v3303 = vadd.f32 0.0, %v3302
    %v3304 = vpop.f32.mrb[0].mxu0
    %v3305 = vadd.f32 0.0, %v3304
    %v3306 = vpop.f32.mrb[0].mxu0
    %v3307 = vpop.f32.mrb[0].mxu0
    %3308 = vdwg.mxu0
    %v3309 = vld [vmem:[%s49] sm:$0xff]
    %v3310 = vld [vmem:[%s49 + $0x8] sm:$0xff]
    %v3311 = vld [vmem:[%s49 + $0x10] sm:$0xff]
    %v3312 = vld [vmem:[%s49 + $0x18] sm:$0xff]
    %v3313 = vld [vmem:[%s49 + $0x20] sm:$0xff]
    %v3314 = vld [vmem:[%s49 + $0x28] sm:$0xff]
    %v3315 = vld [vmem:[%s49 + $0x30] sm:$0xff]
    %v3316 = vld [vmem:[%s49 + $0x38] sm:$0xff]
    %v3317 = vld [vmem:[%s49 + $0x40] sm:$0xff]
    %v3318 = vld [vmem:[%s49 + $0x48] sm:$0xff]
    %v3319 = vld [vmem:[%s49 + $0x50] sm:$0xff]
    %v3320 = vld [vmem:[%s49 + $0x58] sm:$0xff]
    %v3321 = vld [vmem:[%s49 + $0x60] sm:$0xff]
    %v3322 = vld [vmem:[%s49 + $0x68] sm:$0xff]
    %v3323 = vld [vmem:[%s49 + $0x70] sm:$0xff]
    %v3324 = vld [vmem:[%s49 + $0x78] sm:$0xff]
    %v3325 = vld [vmem:[%s49 + $0x80] sm:$0xff]
    %v3326 = vld [vmem:[%s49 + $0x88] sm:$0xff]
    %v3327 = vld [vmem:[%s49 + $0x90] sm:$0xff]
    %v3328 = vld [vmem:[%s49 + $0x98] sm:$0xff]
    %v3329 = vld [vmem:[%s49 + $0xa0] sm:$0xff]
    %v3330 = vld [vmem:[%s49 + $0xa8] sm:$0xff]
    %v3331 = vld [vmem:[%s49 + $0xb0] sm:$0xff]
    %v3332 = vld [vmem:[%s49 + $0xb8] sm:$0xff]
    %v3333 = vld [vmem:[%s49 + $0xc0] sm:$0xff]
    %v3334 = vld [vmem:[%s49 + $0xc8] sm:$0xff]
    %v3335 = vld [vmem:[%s49 + $0xd0] sm:$0xff]
    %v3336 = vld [vmem:[%s49 + $0xd8] sm:$0xff]
    %v3337 = vld [vmem:[%s49 + $0xe0] sm:$0xff]
    %v3338 = vld [vmem:[%s49 + $0xe8] sm:$0xff]
    %v3339 = vld [vmem:[%s49 + $0xf0] sm:$0xff]
    %v3340 = vld [vmem:[%s49 + $0xf8] sm:$0xff]
    %v3341 = vld [vmem:[#allocation17] sm:$0xff]
    %v3342 = vld [vmem:[#allocation17 + $0x8] sm:$0xff]
    %v3343 = vld [vmem:[#allocation17 + $0x10] sm:$0xff]
    %v3344 = vld [vmem:[#allocation17 + $0x18] sm:$0xff]
    %v3345 = vld [vmem:[#allocation17 + $0x20] sm:$0xff]
    %v3346 = vld [vmem:[#allocation17 + $0x28] sm:$0xff]
    %v3347 = vld [vmem:[#allocation17 + $0x30] sm:$0xff]
    %v3348 = vld [vmem:[#allocation17 + $0x38] sm:$0xff]
    %v3349 = vld [vmem:[#allocation17 + $0x40] sm:$0xff]
    %v3350 = vld [vmem:[#allocation17 + $0x48] sm:$0xff]
    %v3351 = vld [vmem:[#allocation17 + $0x50] sm:$0xff]
    %v3352 = vld [vmem:[#allocation17 + $0x58] sm:$0xff]
    %v3353 = vld [vmem:[#allocation17 + $0x60] sm:$0xff]
    %v3354 = vld [vmem:[#allocation17 + $0x68] sm:$0xff]
    %v3355 = vld [vmem:[#allocation17 + $0x70] sm:$0xff]
    %v3356 = vld [vmem:[#allocation17 + $0x78] sm:$0xff]
    %v3357 = vld [vmem:[%s53] sm:$0x1]
    %v3358 = vld [vmem:[%s55] sm:$0x1]
    %v3359 = vsel %vm814, %v3303, 0.0
    %v3360 = vrot.slane %v3359, 4
    %v3361 = vadd.f32 %v3359, %v3360
    %v3362 = vrot.slane %v3361, 2
    %v3363 = vadd.f32 %v3361, %v3362
    %v3364 = vrot.slane %v3363, 1
    %v3365 = vadd.f32 %v3363, %v3364
    %v3366 = vsel %vm814, %v3305, 0.0
    %v3367 = vrot.slane %v3366, 4
    %v3368 = vadd.f32 %v3366, %v3367
    %v3369 = vrot.slane %v3368, 2
    %v3370 = vadd.f32 %v3368, %v3369
    %v3371 = vrot.slane %v3370, 1
    %v3372 = vadd.f32 %v3370, %v3371
    %v3373 = vmul.f32 %v3303, %v3303
    %v3374 = vmul.f32 %v3305, %v3305
    %v3375 = vsel %vm814, %v3373, 0.0
    %v3376 = vrot.slane %v3375, 4
    %v3377 = vadd.f32 %v3375, %v3376
    %v3378 = vrot.slane %v3377, 2
    %v3379 = vadd.f32 %v3377, %v3378
    %v3380 = vrot.slane %v3379, 1
    %v3381 = vadd.f32 %v3379, %v3380
    %v3382 = vsel %vm814, %v3374, 0.0
    %v3383 = vrot.slane %v3382, 4
    %v3384 = vadd.f32 %v3382, %v3383
    %v3385 = vrot.slane %v3384, 2
    %v3386 = vadd.f32 %v3384, %v3385
    %v3387 = vrot.slane %v3386, 1
    %v3388 = vadd.f32 %v3386, %v3387
    %3389 = vmatprep.subr.mxu0 0.0
    %3390 = vmatpush1.msra.mxu0 %v3309
    %3391 = vmatprep.subr.mxu0 0.0
    %3392 = vmatpush1.msra.mxu0 %v3310
    %3393 = vmatprep.subr.mxu0 0.0
    %3394 = vmatpush1.msra.mxu0 %v3311
    %3395 = vmatprep.subr.mxu0 0.0
    %3396 = vmatpush1.msra.mxu0 %v3312
    %3397 = vmatprep.subr.mxu0 0.0
    %3398 = vmatpush1.msra.mxu0 %v3313
    %3399 = vmatprep.subr.mxu0 0.0
    %3400 = vmatpush1.msra.mxu0 %v3314
    %3401 = vmatprep.subr.mxu0 0.0
    %3402 = vmatpush1.msra.mxu0 %v3315
    %3403 = vmatprep.subr.mxu0 0.0
    %3404 = vmatpush1.msra.mxu0 %v3316
    %3405 = vmatprep.subr.mxu0 0.0
    %3406 = vmatpush1.msra.mxu0 %v3317
    %3407 = vmatprep.subr.mxu0 0.0
    %3408 = vmatpush1.msra.mxu0 %v3318
    %3409 = vmatprep.subr.mxu0 0.0
    %3410 = vmatpush1.msra.mxu0 %v3319
    %3411 = vmatprep.subr.mxu0 0.0
    %3412 = vmatpush1.msra.mxu0 %v3320
    %3413 = vmatprep.subr.mxu0 0.0
    %3414 = vmatpush1.msra.mxu0 %v3321
    %3415 = vmatprep.subr.mxu0 0.0
    %3416 = vmatpush1.msra.mxu0 %v3322
    %3417 = vmatprep.subr.mxu0 0.0
    %3418 = vmatpush1.msra.mxu0 %v3323
    %3419 = vmatprep.subr.mxu0 0.0
    %3420 = vmatpush1.msra.mxu0 %v3324
    %3421 = vmatprep.subr.mxu0 0.0
    %3422 = vmatpush1.msra.mxu0 %v3325
    %3423 = vmatprep.subr.mxu0 0.0
    %3424 = vmatpush1.msra.mxu0 %v3326
    %3425 = vmatprep.subr.mxu0 0.0
    %3426 = vmatpush1.msra.mxu0 %v3327
    %3427 = vmatprep.subr.mxu0 0.0
    %3428 = vmatpush1.msra.mxu0 %v3328
    %3429 = vmatprep.subr.mxu0 0.0
    %3430 = vmatpush1.msra.mxu0 %v3329
    %3431 = vmatprep.subr.mxu0 0.0
    %3432 = vmatpush1.msra.mxu0 %v3330
    %3433 = vmatprep.subr.mxu0 0.0
    %3434 = vmatpush1.msra.mxu0 %v3331
    %3435 = vmatprep.subr.mxu0 0.0
    %3436 = vmatpush1.msra.mxu0 %v3332
    %3437 = vmatprep.subr.mxu0 0.0
    %3438 = vmatpush1.msra.mxu0 %v3333
    %3439 = vmatprep.subr.mxu0 0.0
    %3440 = vmatpush1.msra.mxu0 %v3334
    %3441 = vmatprep.subr.mxu0 0.0
    %3442 = vmatpush1.msra.mxu0 %v3335
    %3443 = vmatprep.subr.mxu0 0.0
    %3444 = vmatpush1.msra.mxu0 %v3336
    %3445 = vmatprep.subr.mxu0 0.0
    %3446 = vmatpush1.msra.mxu0 %v3337
    %3447 = vmatprep.subr.mxu0 0.0
    %3448 = vmatpush1.msra.mxu0 %v3338
    %3449 = vmatprep.subr.mxu0 0.0
    %3450 = vmatpush1.msra.mxu0 %v3339
    %3451 = vmatprep.subr.mxu0 0.0
    %3452 = vmatpush1.msra.mxu0 %v3340
    %3453 = vmatprep.mubr.f32.mxu0 %v3372
    %3454 = vmatmul.mubr.f32.gmra.mrb[0].mxu0 %v3365
    %v3455 = vpop.f32.mrb[0].mxu0
    %v3456 = vadd.f32 0.0, %v3455
    %v3457 = vpop.f32.mrb[0].mxu0
    %3458 = vdwg.mxu0
    %3459 = vmatprep.subr.mxu0 0.0
    %3460 = vmatpush1.msra.mxu0 %v3309
    %3461 = vmatprep.subr.mxu0 0.0
    %3462 = vmatpush1.msra.mxu0 %v3310
    %3463 = vmatprep.subr.mxu0 0.0
    %3464 = vmatpush1.msra.mxu0 %v3311
    %3465 = vmatprep.subr.mxu0 0.0
    %3466 = vmatpush1.msra.mxu0 %v3312
    %3467 = vmatprep.subr.mxu0 0.0
    %3468 = vmatpush1.msra.mxu0 %v3313
    %3469 = vmatprep.subr.mxu0 0.0
    %3470 = vmatpush1.msra.mxu0 %v3314
    %3471 = vmatprep.subr.mxu0 0.0
    %3472 = vmatpush1.msra.mxu0 %v3315
    %3473 = vmatprep.subr.mxu0 0.0
    %3474 = vmatpush1.msra.mxu0 %v3316
    %3475 = vmatprep.subr.mxu0 0.0
    %3476 = vmatpush1.msra.mxu0 %v3317
    %3477 = vmatprep.subr.mxu0 0.0
    %3478 = vmatpush1.msra.mxu0 %v3318
    %3479 = vmatprep.subr.mxu0 0.0
    %3480 = vmatpush1.msra.mxu0 %v3319
    %3481 = vmatprep.subr.mxu0 0.0
    %3482 = vmatpush1.msra.mxu0 %v3320
    %3483 = vmatprep.subr.mxu0 0.0
    %3484 = vmatpush1.msra.mxu0 %v3321
    %3485 = vmatprep.subr.mxu0 0.0
    %3486 = vmatpush1.msra.mxu0 %v3322
    %3487 = vmatprep.subr.mxu0 0.0
    %3488 = vmatpush1.msra.mxu0 %v3323
    %3489 = vmatprep.subr.mxu0 0.0
    %3490 = vmatpush1.msra.mxu0 %v3324
    %3491 = vmatprep.subr.mxu0 0.0
    %3492 = vmatpush1.msra.mxu0 %v3325
    %3493 = vmatprep.subr.mxu0 0.0
    %3494 = vmatpush1.msra.mxu0 %v3326
    %3495 = vmatprep.subr.mxu0 0.0
    %3496 = vmatpush1.msra.mxu0 %v3327
    %3497 = vmatprep.subr.mxu0 0.0
    %3498 = vmatpush1.msra.mxu0 %v3328
    %3499 = vmatprep.subr.mxu0 0.0
    %3500 = vmatpush1.msra.mxu0 %v3329
    %3501 = vmatprep.subr.mxu0 0.0
    %3502 = vmatpush1.msra.mxu0 %v3330
    %3503 = vmatprep.subr.mxu0 0.0
    %3504 = vmatpush1.msra.mxu0 %v3331
    %3505 = vmatprep.subr.mxu0 0.0
    %3506 = vmatpush1.msra.mxu0 %v3332
    %3507 = vmatprep.subr.mxu0 0.0
    %3508 = vmatpush1.msra.mxu0 %v3333
    %3509 = vmatprep.subr.mxu0 0.0
    %3510 = vmatpush1.msra.mxu0 %v3334
    %3511 = vmatprep.subr.mxu0 0.0
    %3512 = vmatpush1.msra.mxu0 %v3335
    %3513 = vmatprep.subr.mxu0 0.0
    %3514 = vmatpush1.msra.mxu0 %v3336
    %3515 = vmatprep.subr.mxu0 0.0
    %3516 = vmatpush1.msra.mxu0 %v3337
    %3517 = vmatprep.subr.mxu0 0.0
    %3518 = vmatpush1.msra.mxu0 %v3338
    %3519 = vmatprep.subr.mxu0 0.0
    %3520 = vmatpush1.msra.mxu0 %v3339
    %3521 = vmatprep.subr.mxu0 0.0
    %3522 = vmatpush1.msra.mxu0 %v3340
    %3523 = vmatprep.mubr.f32.mxu0 %v3388
    %3524 = vmatmul.mubr.f32.gmra.mrb[0].mxu0 %v3381
    %v3525 = vpop.f32.mrb[0].mxu0
    %v3526 = vadd.f32 0.0, %v3525
    %v3527 = vpop.f32.mrb[0].mxu0
    %3528 = vdwg.mxu0
    %v3529 = vmul.f32 %v3456, 0.125
    %v3530 = vmul.f32 %v3526, 0.125
    %v3531 = vmul.f32 %v3529, %v3529
    %v3532 = vsub.f32 %v3530, %v3531
    %v3533 = vmax.f32 %v3532, 0.0
    %v3534 = vadd.f32 %v3533, 1e-05
    %v3535 = vrsqrt.pop %v3534
    %v3536 = vmul.f32 %v3357, %v3535
    %v3537 = vmul.f32 %v3529, %v3536
    %v3538 = vsub.f32 %v3358, %v3537
    %vm3539 = vcmask 523264
    %v3541 = vsel %vm3539, %v3536, 0
    %3543 = vmatprep.subr.mxu0 %v3342
    %3544 = vmatpush1.msra.mxu0 %v3341
    %3545 = vmatprep.subr.mxu0 %v3344
    %3546 = vmatpush1.msra.mxu0 %v3343
    %3547 = vmatprep.subr.mxu0 %v3346
    %3548 = vmatpush1.msra.mxu0 %v3345
    %3549 = vmatprep.subr.mxu0 %v3348
    %3550 = vmatpush1.msra.mxu0 %v3347
    %3551 = vmatprep.subr.mxu0 %v3350
    %3552 = vmatpush1.msra.mxu0 %v3349
    %3553 = vmatprep.subr.mxu0 %v3352
    %3554 = vmatpush1.msra.mxu0 %v3351
    %3555 = vmatprep.subr.mxu0 %v3354
    %3556 = vmatpush1.msra.mxu0 %v3353
    %3557 = vmatprep.subr.mxu0 %v3356
    %3558 = vmatpush1.msra.mxu0 %v3355
    %3559 = vmatprep.subr.mxu0 0.0
    %3560 = vmatpush1.msra.mxu0 0.0
    %3561 = vmatprep.subr.mxu0 0.0
    %3562 = vmatpush1.msra.mxu0 0.0
    %3563 = vmatprep.subr.mxu0 0.0
    %3564 = vmatpush1.msra.mxu0 0.0
    %3565 = vmatprep.subr.mxu0 0.0
    %3566 = vmatpush1.msra.mxu0 0.0
    %3567 = vmatprep.subr.mxu0 0.0
    %3568 = vmatpush1.msra.mxu0 0.0
    %3569 = vmatprep.subr.mxu0 0.0
    %3570 = vmatpush1.msra.mxu0 0.0
    %3571 = vmatprep.subr.mxu0 0.0
    %3572 = vmatpush1.msra.mxu0 0.0
    %3573 = vmatprep.subr.mxu0 0.0
    %3574 = vmatpush1.msra.mxu0 0.0
    %3575 = vmatprep.subr.mxu0 0.0
    %3576 = vmatpush1.msra.mxu0 0.0
    %3577 = vmatprep.subr.mxu0 0.0
    %3578 = vmatpush1.msra.mxu0 0.0
    %3579 = vmatprep.subr.mxu0 0.0
    %3580 = vmatpush1.msra.mxu0 0.0
    %3581 = vmatprep.subr.mxu0 0.0
    %3582 = vmatpush1.msra.mxu0 0.0
    %3583 = vmatprep.subr.mxu0 0.0
    %3584 = vmatpush1.msra.mxu0 0.0
    %3585 = vmatprep.subr.mxu0 0.0
    %3586 = vmatpush1.msra.mxu0 0.0
    %3587 = vmatprep.subr.mxu0 0.0
    %3588 = vmatpush1.msra.mxu0 0.0
    %3589 = vmatprep.subr.mxu0 0.0
    %3590 = vmatpush1.msra.mxu0 0.0
    %3591 = vmatprep.subr.mxu0 0.0
    %3592 = vmatpush1.msra.mxu0 0.0
    %3593 = vmatprep.subr.mxu0 0.0
    %3594 = vmatpush1.msra.mxu0 0.0
    %3595 = vmatprep.subr.mxu0 0.0
    %3596 = vmatpush1.msra.mxu0 0.0
    %3597 = vmatprep.subr.mxu0 0.0
    %3598 = vmatpush1.msra.mxu0 0.0
    %3599 = vmatprep.subr.mxu0 0.0
    %3600 = vmatpush1.msra.mxu0 0.0
    %3601 = vmatprep.subr.mxu0 0.0
    %3602 = vmatpush1.msra.mxu0 0.0
    %3603 = vmatprep.subr.mxu0 0.0
    %3604 = vmatpush1.msra.mxu0 0.0
    %3605 = vmatprep.subr.mxu0 0.0
    %3606 = vmatpush1.msra.mxu0 0.0
    %3607 = vmatprep.mubr.f32.mxu0 0.0
    %3608 = vmatmul.mubr.f32.gmra.mrb[0].mxu0 %v3541
    %v3609 = vpop.f32.mrb[0].mxu0
    %v3610 = vadd.f32 0.0, %v3609
    %v3611 = vpop.f32.mrb[0].mxu0
    %v3612 = vadd.f32 0.0, %v3611
    %3613 = vdwg.mxu0
    %v3615 = vsel %vm3539, %v3538, 0
    %3617 = vmatprep.subr.mxu0 %v3342
    %3618 = vmatpush1.msra.mxu0 %v3341
    %3619 = vmatprep.subr.mxu0 %v3344
    %3620 = vmatpush1.msra.mxu0 %v3343
    %3621 = vmatprep.subr.mxu0 %v3346
    %3622 = vmatpush1.msra.mxu0 %v3345
    %3623 = vmatprep.subr.mxu0 %v3348
    %3624 = vmatpush1.msra.mxu0 %v3347
    %3625 = vmatprep.subr.mxu0 %v3350
    %3626 = vmatpush1.msra.mxu0 %v3349
    %3627 = vmatprep.subr.mxu0 %v3352
    %3628 = vmatpush1.msra.mxu0 %v3351
    %3629 = vmatprep.subr.mxu0 %v3354
    %3630 = vmatpush1.msra.mxu0 %v3353
    %3631 = vmatprep.subr.mxu0 %v3356
    %3632 = vmatpush1.msra.mxu0 %v3355
    %3633 = vmatprep.subr.mxu0 0.0
    %3634 = vmatpush1.msra.mxu0 0.0
    %3635 = vmatprep.subr.mxu0 0.0
    %3636 = vmatpush1.msra.mxu0 0.0
    %3637 = vmatprep.subr.mxu0 0.0
    %3638 = vmatpush1.msra.mxu0 0.0
    %3639 = vmatprep.subr.mxu0 0.0
    %3640 = vmatpush1.msra.mxu0 0.0
    %3641 = vmatprep.subr.mxu0 0.0
    %3642 = vmatpush1.msra.mxu0 0.0
    %3643 = vmatprep.subr.mxu0 0.0
    %3644 = vmatpush1.msra.mxu0 0.0
    %3645 = vmatprep.subr.mxu0 0.0
    %3646 = vmatpush1.msra.mxu0 0.0
    %3647 = vmatprep.subr.mxu0 0.0
    %3648 = vmatpush1.msra.mxu0 0.0
    %3649 = vmatprep.subr.mxu0 0.0
    %3650 = vmatpush1.msra.mxu0 0.0
    %3651 = vmatprep.subr.mxu0 0.0
    %3652 = vmatpush1.msra.mxu0 0.0
    %3653 = vmatprep.subr.mxu0 0.0
    %3654 = vmatpush1.msra.mxu0 0.0
    %3655 = vmatprep.subr.mxu0 0.0
    %3656 = vmatpush1.msra.mxu0 0.0
    %3657 = vmatprep.subr.mxu0 0.0
    %3658 = vmatpush1.msra.mxu0 0.0
    %3659 = vmatprep.subr.mxu0 0.0
    %3660 = vmatpush1.msra.mxu0 0.0
    %3661 = vmatprep.subr.mxu0 0.0
    %3662 = vmatpush1.msra.mxu0 0.0
    %3663 = vmatprep.subr.mxu0 0.0
    %3664 = vmatpush1.msra.mxu0 0.0
    %3665 = vmatprep.subr.mxu0 0.0
    %3666 = vmatpush1.msra.mxu0 0.0
    %3667 = vmatprep.subr.mxu0 0.0
    %3668 = vmatpush1.msra.mxu0 0.0
    %3669 = vmatprep.subr.mxu0 0.0
    %3670 = vmatpush1.msra.mxu0 0.0
    %3671 = vmatprep.subr.mxu0 0.0
    %3672 = vmatpush1.msra.mxu0 0.0
    %3673 = vmatprep.subr.mxu0 0.0
    %3674 = vmatpush1.msra.mxu0 0.0
    %3675 = vmatprep.subr.mxu0 0.0
    %3676 = vmatpush1.msra.mxu0 0.0
    %3677 = vmatprep.subr.mxu0 0.0
    %3678 = vmatpush1.msra.mxu0 0.0
    %3679 = vmatprep.subr.mxu0 0.0
    %3680 = vmatpush1.msra.mxu0 0.0
    %3681 = vmatprep.mubr.f32.mxu0 0.0
    %3682 = vmatmul.mubr.f32.gmra.mrb[0].mxu0 %v3615
    %v3683 = vpop.f32.mrb[0].mxu0
    %v3684 = vadd.f32 0.0, %v3683
    %v3685 = vpop.f32.mrb[0].mxu0
    %v3686 = vadd.f32 0.0, %v3685
    %3687 = vdwg.mxu0
    %v3688 = vlaneseq
    %v3689 = vshrl.u32 %v3688, 7
    %v3690 = vsub.s32 0, %v3689
    %v3691 = vrot.slane %v3610, %v3690
    %v3692 = vlaneseq
    %v3693 = vshrl.u32 %v3692, 7
    %v3694 = vsub.s32 0, %v3693
    %v3695 = vrot.slane %v3612, %v3694
    %v3696 = vmul.f32 %v3303, %v3691
    %v3697 = vmul.f32 %v3305, %v3695
    %v3698 = vlaneseq
    %v3699 = vshrl.u32 %v3698, 7
    %v3700 = vsub.s32 0, %v3699
    %v3701 = vrot.slane %v3684, %v3700
    %v3702 = vlaneseq
    %v3703 = vshrl.u32 %v3702, 7
    %v3704 = vsub.s32 0, %v3703
    %v3705 = vrot.slane %v3686, %v3704
    %v3706 = vadd.f32 %v3696, %v3701
    %v3707 = vadd.f32 %v3697, %v3705
    %v3708 = vmul.f32 %v3706, 0.2
    %v3709 = vmul.f32 %v3707, 0.2
    %v3710 = vmax.f32 %v3706, %v3708
    %v3711 = vmax.f32 %v3707, %v3709
    %v3712 = vld [vmem:[%s57] sm:$0xff]
    %v3713 = vld [vmem:[%s57 + $0x8] sm:$0xff]
    %v3714 = vld [vmem:[%s57 + $0x10] sm:$0xff]
    %v3715 = vld [vmem:[%s57 + $0x18] sm:$0xff]
    %v3716 = vld [vmem:[%s57 + $0x20] sm:$0xff]
    %v3717 = vld [vmem:[%s57 + $0x28] sm:$0xff]
    %v3718 = vld [vmem:[%s57 + $0x30] sm:$0xff]
    %v3719 = vld [vmem:[%s57 + $0x38] sm:$0xff]
    %v3720 = vld [vmem:[%s57 + $0x40] sm:$0xff]
    %v3721 = vld [vmem:[%s57 + $0x48] sm:$0xff]
    %v3722 = vld [vmem:[%s57 + $0x50] sm:$0xff]
    %v3723 = vld [vmem:[%s57 + $0x58] sm:$0xff]
    %v3724 = vld [vmem:[%s57 + $0x60] sm:$0xff]
    %v3725 = vld [vmem:[%s57 + $0x68] sm:$0xff]
    %v3726 = vld [vmem:[%s57 + $0x70] sm:$0xff]
    %v3727 = vld [vmem:[%s57 + $0x78] sm:$0xff]
    %v3728 = vld [vmem:[%s57 + $0x80] sm:$0xff]
    %v3729 = vld [vmem:[%s57 + $0x88] sm:$0xff]
    %v3730 = vld [vmem:[%s57 + $0x90] sm:$0xff]
    %v3731 = vld [vmem:[%s57 + $0x98] sm:$0xff]
    %v3732 = vld [vmem:[%s57 + $0xa0] sm:$0xff]
    %v3733 = vld [vmem:[%s57 + $0xa8] sm:$0xff]
    %v3734 = vld [vmem:[%s57 + $0xb0] sm:$0xff]
    %v3735 = vld [vmem:[%s57 + $0xb8] sm:$0xff]
    %v3736 = vld [vmem:[%s57 + $0xc0] sm:$0xff]
    %v3737 = vld [vmem:[%s57 + $0xc8] sm:$0xff]
    %v3738 = vld [vmem:[%s57 + $0xd0] sm:$0xff]
    %v3739 = vld [vmem:[%s57 + $0xd8] sm:$0xff]
    %v3740 = vld [vmem:[%s57 + $0xe0] sm:$0xff]
    %v3741 = vld [vmem:[%s57 + $0xe8] sm:$0xff]
    %v3742 = vld [vmem:[%s57 + $0xf0] sm:$0xff]
    %v3743 = vld [vmem:[%s57 + $0xf8] sm:$0xff]
    %v3744 = vpack.c.bf16 %v3710, %v3710
    %v3745 = vpack.c.bf16 %v3711, %v3711
    %v3778 = vunpack.c.l.b16 %v3712
    %v3779 = vunpack.c.h.b16 %v3712
    %v3780 = vunpack.c.l.b16 %v3713
    %v3781 = vunpack.c.h.b16 %v3713
    %v3782 = vunpack.c.l.b16 %v3714
    %v3783 = vunpack.c.h.b16 %v3714
    %v3784 = vunpack.c.l.b16 %v3715
    %v3785 = vunpack.c.h.b16 %v3715
    %v3786 = vunpack.c.l.b16 %v3716
    %v3787 = vunpack.c.h.b16 %v3716
    %v3788 = vunpack.c.l.b16 %v3717
    %v3789 = vunpack.c.h.b16 %v3717
    %v3790 = vunpack.c.l.b16 %v3718
    %v3791 = vunpack.c.h.b16 %v3718
    %v3792 = vunpack.c.l.b16 %v3719
    %v3793 = vunpack.c.h.b16 %v3719
    %v3794 = vunpack.c.l.b16 %v3720
    %v3795 = vunpack.c.h.b16 %v3720
    %v3796 = vunpack.c.l.b16 %v3721
    %v3797 = vunpack.c.h.b16 %v3721
    %v3798 = vunpack.c.l.b16 %v3722
    %v3799 = vunpack.c.h.b16 %v3722
    %v3800 = vunpack.c.l.b16 %v3723
    %v3801 = vunpack.c.h.b16 %v3723
    %v3802 = vunpack.c.l.b16 %v3724
    %v3803 = vunpack.c.h.b16 %v3724
    %v3804 = vunpack.c.l.b16 %v3725
    %v3805 = vunpack.c.h.b16 %v3725
    %v3806 = vunpack.c.l.b16 %v3726
    %v3807 = vunpack.c.h.b16 %v3726
    %v3808 = vunpack.c.l.b16 %v3727
    %v3809 = vunpack.c.h.b16 %v3727
    %v3810 = vunpack.c.l.b16 %v3728
    %v3811 = vunpack.c.h.b16 %v3728
    %v3812 = vunpack.c.l.b16 %v3729
    %v3813 = vunpack.c.h.b16 %v3729
    %v3814 = vunpack.c.l.b16 %v3730
    %v3815 = vunpack.c.h.b16 %v3730
    %v3816 = vunpack.c.l.b16 %v3731
    %v3817 = vunpack.c.h.b16 %v3731
    %v3818 = vunpack.c.l.b16 %v3732
    %v3819 = vunpack.c.h.b16 %v3732
    %v3820 = vunpack.c.l.b16 %v3733
    %v3821 = vunpack.c.h.b16 %v3733
    %v3822 = vunpack.c.l.b16 %v3734
    %v3823 = vunpack.c.h.b16 %v3734
    %v3824 = vunpack.c.l.b16 %v3735
    %v3825 = vunpack.c.h.b16 %v3735
    %v3826 = vunpack.c.l.b16 %v3736
    %v3827 = vunpack.c.h.b16 %v3736
    %v3828 = vunpack.c.l.b16 %v3737
    %v3829 = vunpack.c.h.b16 %v3737
    %v3830 = vunpack.c.l.b16 %v3738
    %v3831 = vunpack.c.h.b16 %v3738
    %v3832 = vunpack.c.l.b16 %v3739
    %v3833 = vunpack.c.h.b16 %v3739
    %v3834 = vunpack.c.l.b16 %v3740
    %v3835 = vunpack.c.h.b16 %v3740
    %v3836 = vunpack.c.l.b16 %v3741
    %v3837 = vunpack.c.h.b16 %v3741
    %v3838 = vunpack.c.l.b16 %v3742
    %v3839 = vunpack.c.h.b16 %v3742
    %v3840 = vunpack.c.l.b16 %v3743
    %v3841 = vunpack.c.h.b16 %v3743
    %v3842 = vpack.c.b16 %v3780, %v3778
    %v3843 = vpack.c.b16 %v3781, %v3779
    %v3844 = vpack.c.b16 %v3784, %v3782
    %v3845 = vpack.c.b16 %v3785, %v3783
    %v3846 = vpack.c.b16 %v3788, %v3786
    %v3847 = vpack.c.b16 %v3789, %v3787
    %v3848 = vpack.c.b16 %v3792, %v3790
    %v3849 = vpack.c.b16 %v3793, %v3791
    %v3850 = vpack.c.b16 %v3796, %v3794
    %v3851 = vpack.c.b16 %v3797, %v3795
    %v3852 = vpack.c.b16 %v3800, %v3798
    %v3853 = vpack.c.b16 %v3801, %v3799
    %v3854 = vpack.c.b16 %v3804, %v3802
    %v3855 = vpack.c.b16 %v3805, %v3803
    %v3856 = vpack.c.b16 %v3808, %v3806
    %v3857 = vpack.c.b16 %v3809, %v3807
    %v3858 = vpack.c.b16 %v3812, %v3810
    %v3859 = vpack.c.b16 %v3813, %v3811
    %v3860 = vpack.c.b16 %v3816, %v3814
    %v3861 = vpack.c.b16 %v3817, %v3815
    %v3862 = vpack.c.b16 %v3820, %v3818
    %v3863 = vpack.c.b16 %v3821, %v3819
    %v3864 = vpack.c.b16 %v3824, %v3822
    %v3865 = vpack.c.b16 %v3825, %v3823
    %v3866 = vpack.c.b16 %v3828, %v3826
    %v3867 = vpack.c.b16 %v3829, %v3827
    %v3868 = vpack.c.b16 %v3832, %v3830
    %v3869 = vpack.c.b16 %v3833, %v3831
    %v3870 = vpack.c.b16 %v3836, %v3834
    %v3871 = vpack.c.b16 %v3837, %v3835
    %v3872 = vpack.c.b16 %v3840, %v3838
    %v3873 = vpack.c.b16 %v3841, %v3839
    %3906 = vmatprep.subr.bf16.mxu0 %v3843
    %3907 = vmatpush1.bf16.msra.mxu0 %v3842
    %3908 = vmatprep.subr.bf16.mxu0 %v3845
    %3909 = vmatpush1.bf16.msra.mxu0 %v3844
    %3910 = vmatprep.subr.bf16.mxu0 %v3847
    %3911 = vmatpush1.bf16.msra.mxu0 %v3846
    %3912 = vmatprep.subr.bf16.mxu0 %v3849
    %3913 = vmatpush1.bf16.msra.mxu0 %v3848
    %3914 = vmatprep.subr.bf16.mxu0 %v3851
    %3915 = vmatpush1.bf16.msra.mxu0 %v3850
    %3916 = vmatprep.subr.bf16.mxu0 %v3853
    %3917 = vmatpush1.bf16.msra.mxu0 %v3852
    %3918 = vmatprep.subr.bf16.mxu0 %v3855
    %3919 = vmatpush1.bf16.msra.mxu0 %v3854
    %3920 = vmatprep.subr.bf16.mxu0 %v3857
    %3921 = vmatpush1.bf16.msra.mxu0 %v3856
    %3922 = vmatprep.subr.bf16.mxu0 %v3859
    %3923 = vmatpush1.bf16.msra.mxu0 %v3858
    %3924 = vmatprep.subr.bf16.mxu0 %v3861
    %3925 = vmatpush1.bf16.msra.mxu0 %v3860
    %3926 = vmatprep.subr.bf16.mxu0 %v3863
    %3927 = vmatpush1.bf16.msra.mxu0 %v3862
    %3928 = vmatprep.subr.bf16.mxu0 %v3865
    %3929 = vmatpush1.bf16.msra.mxu0 %v3864
    %3930 = vmatprep.subr.bf16.mxu0 %v3867
    %3931 = vmatpush1.bf16.msra.mxu0 %v3866
    %3932 = vmatprep.subr.bf16.mxu0 %v3869
    %3933 = vmatpush1.bf16.msra.mxu0 %v3868
    %3934 = vmatprep.subr.bf16.mxu0 %v3871
    %3935 = vmatpush1.bf16.msra.mxu0 %v3870
    %3936 = vmatprep.subr.bf16.mxu0 %v3873
    %3937 = vmatpush1.bf16.msra.mxu0 %v3872
    %3938 = vmatprep.mubr.bf16.mxu0 %v3745
    %3939 = vmatmul.mubr.bf16.gmra.mrb[0].mxu0 %v3744
    %v3940 = vpop.f32.mrb[0].mxu0
    %v3941 = vadd.f32 0.0, %v3940
    %v3942 = vpop.f32.mrb[0].mxu0
    %v3943 = vadd.f32 0.0, %v3942
    %v3944 = vpop.f32.mrb[0].mxu0
    %v3945 = vpop.f32.mrb[0].mxu0
    %3946 = vdwg.mxu0
    %v3947 = vld [vmem:[%s59] sm:$0xff]
    %v3948 = vld [vmem:[%s59 + $0x8] sm:$0xff]
    %v3949 = vld [vmem:[%s59 + $0x10] sm:$0xff]
    %v3950 = vld [vmem:[%s59 + $0x18] sm:$0xff]
    %v3951 = vld [vmem:[%s59 + $0x20] sm:$0xff]
    %v3952 = vld [vmem:[%s59 + $0x28] sm:$0xff]
    %v3953 = vld [vmem:[%s59 + $0x30] sm:$0xff]
    %v3954 = vld [vmem:[%s59 + $0x38] sm:$0xff]
    %v3955 = vld [vmem:[%s59 + $0x40] sm:$0xff]
    %v3956 = vld [vmem:[%s59 + $0x48] sm:$0xff]
    %v3957 = vld [vmem:[%s59 + $0x50] sm:$0xff]
    %v3958 = vld [vmem:[%s59 + $0x58] sm:$0xff]
    %v3959 = vld [vmem:[%s59 + $0x60] sm:$0xff]
    %v3960 = vld [vmem:[%s59 + $0x68] sm:$0xff]
    %v3961 = vld [vmem:[%s59 + $0x70] sm:$0xff]
    %v3962 = vld [vmem:[%s59 + $0x78] sm:$0xff]
    %v3963 = vld [vmem:[%s59 + $0x80] sm:$0xff]
    %v3964 = vld [vmem:[%s59 + $0x88] sm:$0xff]
    %v3965 = vld [vmem:[%s59 + $0x90] sm:$0xff]
    %v3966 = vld [vmem:[%s59 + $0x98] sm:$0xff]
    %v3967 = vld [vmem:[%s59 + $0xa0] sm:$0xff]
    %v3968 = vld [vmem:[%s59 + $0xa8] sm:$0xff]
    %v3969 = vld [vmem:[%s59 + $0xb0] sm:$0xff]
    %v3970 = vld [vmem:[%s59 + $0xb8] sm:$0xff]
    %v3971 = vld [vmem:[%s59 + $0xc0] sm:$0xff]
    %v3972 = vld [vmem:[%s59 + $0xc8] sm:$0xff]
    %v3973 = vld [vmem:[%s59 + $0xd0] sm:$0xff]
    %v3974 = vld [vmem:[%s59 + $0xd8] sm:$0xff]
    %v3975 = vld [vmem:[%s59 + $0xe0] sm:$0xff]
    %v3976 = vld [vmem:[%s59 + $0xe8] sm:$0xff]
    %v3977 = vld [vmem:[%s59 + $0xf0] sm:$0xff]
    %v3978 = vld [vmem:[%s59 + $0xf8] sm:$0xff]
    %v3979 = vld [vmem:[%s61] sm:$0xff]
    %v3980 = vld [vmem:[%s61 + $0x8] sm:$0xff]
    %v3981 = vld [vmem:[%s61 + $0x10] sm:$0xff]
    %v3982 = vld [vmem:[%s61 + $0x18] sm:$0xff]
    %v3983 = vld [vmem:[%s61 + $0x20] sm:$0xff]
    %v3984 = vld [vmem:[%s61 + $0x28] sm:$0xff]
    %v3985 = vld [vmem:[%s61 + $0x30] sm:$0xff]
    %v3986 = vld [vmem:[%s61 + $0x38] sm:$0xff]
    %v3987 = vld [vmem:[%s61 + $0x40] sm:$0xff]
    %v3988 = vld [vmem:[%s61 + $0x48] sm:$0xff]
    %v3989 = vld [vmem:[%s61 + $0x50] sm:$0xff]
    %v3990 = vld [vmem:[%s61 + $0x58] sm:$0xff]
    %v3991 = vld [vmem:[%s61 + $0x60] sm:$0xff]
    %v3992 = vld [vmem:[%s61 + $0x68] sm:$0xff]
    %v3993 = vld [vmem:[%s61 + $0x70] sm:$0xff]
    %v3994 = vld [vmem:[%s61 + $0x78] sm:$0xff]
    %v3995 = vld [vmem:[%s61 + $0x80] sm:$0xff]
    %v3996 = vld [vmem:[%s61 + $0x88] sm:$0xff]
    %v3997 = vld [vmem:[%s61 + $0x90] sm:$0xff]
    %v3998 = vld [vmem:[%s61 + $0x98] sm:$0xff]
    %v3999 = vld [vmem:[%s61 + $0xa0] sm:$0xff]
    %v4000 = vld [vmem:[%s61 + $0xa8] sm:$0xff]
    %v4001 = vld [vmem:[%s61 + $0xb0] sm:$0xff]
    %v4002 = vld [vmem:[%s61 + $0xb8] sm:$0xff]
    %v4003 = vld [vmem:[%s61 + $0xc0] sm:$0xff]
    %v4004 = vld [vmem:[%s61 + $0xc8] sm:$0xff]
    %v4005 = vld [vmem:[%s61 + $0xd0] sm:$0xff]
    %v4006 = vld [vmem:[%s61 + $0xd8] sm:$0xff]
    %v4007 = vld [vmem:[%s61 + $0xe0] sm:$0xff]
    %v4008 = vld [vmem:[%s61 + $0xe8] sm:$0xff]
    %v4009 = vld [vmem:[%s61 + $0xf0] sm:$0xff]
    %v4010 = vld [vmem:[%s61 + $0xf8] sm:$0xff]
    %v4011 = vld [vmem:[%s63] sm:$0x1]
    %v4012 = vld [vmem:[%s65] sm:$0x1]
    %v4013 = vsel %vm814, %v3941, 0.0
    %v4014 = vrot.slane %v4013, 4
    %v4015 = vadd.f32 %v4013, %v4014
    %v4016 = vrot.slane %v4015, 2
    %v4017 = vadd.f32 %v4015, %v4016
    %v4018 = vrot.slane %v4017, 1
    %v4019 = vadd.f32 %v4017, %v4018
    %v4020 = vsel %vm814, %v3943, 0.0
    %v4021 = vrot.slane %v4020, 4
    %v4022 = vadd.f32 %v4020, %v4021
    %v4023 = vrot.slane %v4022, 2
    %v4024 = vadd.f32 %v4022, %v4023
    %v4025 = vrot.slane %v4024, 1
    %v4026 = vadd.f32 %v4024, %v4025
    %v4027 = vmul.f32 %v3941, %v3941
    %v4028 = vmul.f32 %v3943, %v3943
    %v4029 = vsel %vm814, %v4027, 0.0
    %v4030 = vrot.slane %v4029, 4
    %v4031 = vadd.f32 %v4029, %v4030
    %v4032 = vrot.slane %v4031, 2
    %v4033 = vadd.f32 %v4031, %v4032
    %v4034 = vrot.slane %v4033, 1
    %v4035 = vadd.f32 %v4033, %v4034
    %v4036 = vsel %vm814, %v4028, 0.0
    %v4037 = vrot.slane %v4036, 4
    %v4038 = vadd.f32 %v4036, %v4037
    %v4039 = vrot.slane %v4038, 2
    %v4040 = vadd.f32 %v4038, %v4039
    %v4041 = vrot.slane %v4040, 1
    %v4042 = vadd.f32 %v4040, %v4041
    %4043 = vmatprep.subr.mxu0 0.0
    %4044 = vmatpush1.msra.mxu0 %v3947
    %4045 = vmatprep.subr.mxu0 0.0
    %4046 = vmatpush1.msra.mxu0 %v3948
    %4047 = vmatprep.subr.mxu0 0.0
    %4048 = vmatpush1.msra.mxu0 %v3949
    %4049 = vmatprep.subr.mxu0 0.0
    %4050 = vmatpush1.msra.mxu0 %v3950
    %4051 = vmatprep.subr.mxu0 0.0
    %4052 = vmatpush1.msra.mxu0 %v3951
    %4053 = vmatprep.subr.mxu0 0.0
    %4054 = vmatpush1.msra.mxu0 %v3952
    %4055 = vmatprep.subr.mxu0 0.0
    %4056 = vmatpush1.msra.mxu0 %v3953
    %4057 = vmatprep.subr.mxu0 0.0
    %4058 = vmatpush1.msra.mxu0 %v3954
    %4059 = vmatprep.subr.mxu0 0.0
    %4060 = vmatpush1.msra.mxu0 %v3955
    %4061 = vmatprep.subr.mxu0 0.0
    %4062 = vmatpush1.msra.mxu0 %v3956
    %4063 = vmatprep.subr.mxu0 0.0
    %4064 = vmatpush1.msra.mxu0 %v3957
    %4065 = vmatprep.subr.mxu0 0.0
    %4066 = vmatpush1.msra.mxu0 %v3958
    %4067 = vmatprep.subr.mxu0 0.0
    %4068 = vmatpush1.msra.mxu0 %v3959
    %4069 = vmatprep.subr.mxu0 0.0
    %4070 = vmatpush1.msra.mxu0 %v3960
    %4071 = vmatprep.subr.mxu0 0.0
    %4072 = vmatpush1.msra.mxu0 %v3961
    %4073 = vmatprep.subr.mxu0 0.0
    %4074 = vmatpush1.msra.mxu0 %v3962
    %4075 = vmatprep.subr.mxu0 0.0
    %4076 = vmatpush1.msra.mxu0 %v3963
    %4077 = vmatprep.subr.mxu0 0.0
    %4078 = vmatpush1.msra.mxu0 %v3964
    %4079 = vmatprep.subr.mxu0 0.0
    %4080 = vmatpush1.msra.mxu0 %v3965
    %4081 = vmatprep.subr.mxu0 0.0
    %4082 = vmatpush1.msra.mxu0 %v3966
    %4083 = vmatprep.subr.mxu0 0.0
    %4084 = vmatpush1.msra.mxu0 %v3967
    %4085 = vmatprep.subr.mxu0 0.0
    %4086 = vmatpush1.msra.mxu0 %v3968
    %4087 = vmatprep.subr.mxu0 0.0
    %4088 = vmatpush1.msra.mxu0 %v3969
    %4089 = vmatprep.subr.mxu0 0.0
    %4090 = vmatpush1.msra.mxu0 %v3970
    %4091 = vmatprep.subr.mxu0 0.0
    %4092 = vmatpush1.msra.mxu0 %v3971
    %4093 = vmatprep.subr.mxu0 0.0
    %4094 = vmatpush1.msra.mxu0 %v3972
    %4095 = vmatprep.subr.mxu0 0.0
    %4096 = vmatpush1.msra.mxu0 %v3973
    %4097 = vmatprep.subr.mxu0 0.0
    %4098 = vmatpush1.msra.mxu0 %v3974
    %4099 = vmatprep.subr.mxu0 0.0
    %4100 = vmatpush1.msra.mxu0 %v3975
    %4101 = vmatprep.subr.mxu0 0.0
    %4102 = vmatpush1.msra.mxu0 %v3976
    %4103 = vmatprep.subr.mxu0 0.0
    %4104 = vmatpush1.msra.mxu0 %v3977
    %4105 = vmatprep.subr.mxu0 0.0
    %4106 = vmatpush1.msra.mxu0 %v3978
    %4107 = vmatprep.mubr.f32.mxu0 %v4026
    %4108 = vmatmul.mubr.f32.gmra.mrb[0].mxu0 %v4019
    %v4109 = vpop.f32.mrb[0].mxu0
    %v4110 = vadd.f32 0.0, %v4109
    %v4111 = vpop.f32.mrb[0].mxu0
    %4112 = vdwg.mxu0
    %4113 = vmatprep.subr.mxu0 0.0
    %4114 = vmatpush1.msra.mxu0 %v3947
    %4115 = vmatprep.subr.mxu0 0.0
    %4116 = vmatpush1.msra.mxu0 %v3948
    %4117 = vmatprep.subr.mxu0 0.0
    %4118 = vmatpush1.msra.mxu0 %v3949
    %4119 = vmatprep.subr.mxu0 0.0
    %4120 = vmatpush1.msra.mxu0 %v3950
    %4121 = vmatprep.subr.mxu0 0.0
    %4122 = vmatpush1.msra.mxu0 %v3951
    %4123 = vmatprep.subr.mxu0 0.0
    %4124 = vmatpush1.msra.mxu0 %v3952
    %4125 = vmatprep.subr.mxu0 0.0
    %4126 = vmatpush1.msra.mxu0 %v3953
    %4127 = vmatprep.subr.mxu0 0.0
    %4128 = vmatpush1.msra.mxu0 %v3954
    %4129 = vmatprep.subr.mxu0 0.0
    %4130 = vmatpush1.msra.mxu0 %v3955
    %4131 = vmatprep.subr.mxu0 0.0
    %4132 = vmatpush1.msra.mxu0 %v3956
    %4133 = vmatprep.subr.mxu0 0.0
    %4134 = vmatpush1.msra.mxu0 %v3957
    %4135 = vmatprep.subr.mxu0 0.0
    %4136 = vmatpush1.msra.mxu0 %v3958
    %4137 = vmatprep.subr.mxu0 0.0
    %4138 = vmatpush1.msra.mxu0 %v3959
    %4139 = vmatprep.subr.mxu0 0.0
    %4140 = vmatpush1.msra.mxu0 %v3960
    %4141 = vmatprep.subr.mxu0 0.0
    %4142 = vmatpush1.msra.mxu0 %v3961
    %4143 = vmatprep.subr.mxu0 0.0
    %4144 = vmatpush1.msra.mxu0 %v3962
    %4145 = vmatprep.subr.mxu0 0.0
    %4146 = vmatpush1.msra.mxu0 %v3963
    %4147 = vmatprep.subr.mxu0 0.0
    %4148 = vmatpush1.msra.mxu0 %v3964
    %4149 = vmatprep.subr.mxu0 0.0
    %4150 = vmatpush1.msra.mxu0 %v3965
    %4151 = vmatprep.subr.mxu0 0.0
    %4152 = vmatpush1.msra.mxu0 %v3966
    %4153 = vmatprep.subr.mxu0 0.0
    %4154 = vmatpush1.msra.mxu0 %v3967
    %4155 = vmatprep.subr.mxu0 0.0
    %4156 = vmatpush1.msra.mxu0 %v3968
    %4157 = vmatprep.subr.mxu0 0.0
    %4158 = vmatpush1.msra.mxu0 %v3969
    %4159 = vmatprep.subr.mxu0 0.0
    %4160 = vmatpush1.msra.mxu0 %v3970
    %4161 = vmatprep.subr.mxu0 0.0
    %4162 = vmatpush1.msra.mxu0 %v3971
    %4163 = vmatprep.subr.mxu0 0.0
    %4164 = vmatpush1.msra.mxu0 %v3972
    %4165 = vmatprep.subr.mxu0 0.0
    %4166 = vmatpush1.msra.mxu0 %v3973
    %4167 = vmatprep.subr.mxu0 0.0
    %4168 = vmatpush1.msra.mxu0 %v3974
    %4169 = vmatprep.subr.mxu0 0.0
    %4170 = vmatpush1.msra.mxu0 %v3975
    %4171 = vmatprep.subr.mxu0 0.0
    %4172 = vmatpush1.msra.mxu0 %v3976
    %4173 = vmatprep.subr.mxu0 0.0
    %4174 = vmatpush1.msra.mxu0 %v3977
    %4175 = vmatprep.subr.mxu0 0.0
    %4176 = vmatpush1.msra.mxu0 %v3978
    %4177 = vmatprep.mubr.f32.mxu0 %v4042
    %4178 = vmatmul.mubr.f32.gmra.mrb[0].mxu0 %v4035
    %v4179 = vpop.f32.mrb[0].mxu0
    %v4180 = vadd.f32 0.0, %v4179
    %v4181 = vpop.f32.mrb[0].mxu0
    %4182 = vdwg.mxu0
    %v4183 = vmul.f32 %v4110, 0.25
    %v4184 = vmul.f32 %v4180, 0.25
    %v4185 = vmul.f32 %v4183, %v4183
    %v4186 = vsub.f32 %v4184, %v4185
    %v4187 = vmax.f32 %v4186, 0.0
    %v4188 = vadd.f32 %v4187, 1e-05
    %v4189 = vrsqrt.pop %v4188
    %v4190 = vmul.f32 %v4011, %v4189
    %v4191 = vmul.f32 %v4183, %v4190
    %v4192 = vsub.f32 %v4012, %v4191
    %4193 = vmatprep.subr.mxu0 %v3980
    %4194 = vmatpush1.msra.mxu0 %v3979
    %4195 = vmatprep.subr.mxu0 %v3982
    %4196 = vmatpush1.msra.mxu0 %v3981
    %4197 = vmatprep.subr.mxu0 %v3984
    %4198 = vmatpush1.msra.mxu0 %v3983
    %4199 = vmatprep.subr.mxu0 %v3986
    %4200 = vmatpush1.msra.mxu0 %v3985
    %4201 = vmatprep.subr.mxu0 %v3988
    %4202 = vmatpush1.msra.mxu0 %v3987
    %4203 = vmatprep.subr.mxu0 %v3990
    %4204 = vmatpush1.msra.mxu0 %v3989
    %4205 = vmatprep.subr.mxu0 %v3992
    %4206 = vmatpush1.msra.mxu0 %v3991
    %4207 = vmatprep.subr.mxu0 %v3994
    %4208 = vmatpush1.msra.mxu0 %v3993
    %4209 = vmatprep.subr.mxu0 %v3996
    %4210 = vmatpush1.msra.mxu0 %v3995
    %4211 = vmatprep.subr.mxu0 %v3998
    %4212 = vmatpush1.msra.mxu0 %v3997
    %4213 = vmatprep.subr.mxu0 %v4000
    %4214 = vmatpush1.msra.mxu0 %v3999
    %4215 = vmatprep.subr.mxu0 %v4002
    %4216 = vmatpush1.msra.mxu0 %v4001
    %4217 = vmatprep.subr.mxu0 %v4004
    %4218 = vmatpush1.msra.mxu0 %v4003
    %4219 = vmatprep.subr.mxu0 %v4006
    %4220 = vmatpush1.msra.mxu0 %v4005
    %4221 = vmatprep.subr.mxu0 %v4008
    %4222 = vmatpush1.msra.mxu0 %v4007
    %4223 = vmatprep.subr.mxu0 %v4010
    %4224 = vmatpush1.msra.mxu0 %v4009
    %4225 = vmatprep.subr.mxu0 0.0
    %4226 = vmatpush1.msra.mxu0 0.0
    %4227 = vmatprep.subr.mxu0 0.0
    %4228 = vmatpush1.msra.mxu0 0.0
    %4229 = vmatprep.subr.mxu0 0.0
    %4230 = vmatpush1.msra.mxu0 0.0
    %4231 = vmatprep.subr.mxu0 0.0
    %4232 = vmatpush1.msra.mxu0 0.0
    %4233 = vmatprep.subr.mxu0 0.0
    %4234 = vmatpush1.msra.mxu0 0.0
    %4235 = vmatprep.subr.mxu0 0.0
    %4236 = vmatpush1.msra.mxu0 0.0
    %4237 = vmatprep.subr.mxu0 0.0
    %4238 = vmatpush1.msra.mxu0 0.0
    %4239 = vmatprep.subr.mxu0 0.0
    %4240 = vmatpush1.msra.mxu0 0.0
    %4241 = vmatprep.subr.mxu0 0.0
    %4242 = vmatpush1.msra.mxu0 0.0
    %4243 = vmatprep.subr.mxu0 0.0
    %4244 = vmatpush1.msra.mxu0 0.0
    %4245 = vmatprep.subr.mxu0 0.0
    %4246 = vmatpush1.msra.mxu0 0.0
    %4247 = vmatprep.subr.mxu0 0.0
    %4248 = vmatpush1.msra.mxu0 0.0
    %4249 = vmatprep.subr.mxu0 0.0
    %4250 = vmatpush1.msra.mxu0 0.0
    %4251 = vmatprep.subr.mxu0 0.0
    %4252 = vmatpush1.msra.mxu0 0.0
    %4253 = vmatprep.subr.mxu0 0.0
    %4254 = vmatpush1.msra.mxu0 0.0
    %4255 = vmatprep.subr.mxu0 0.0
    %4256 = vmatpush1.msra.mxu0 0.0
    %4257 = vmatprep.mubr.f32.mxu0 0.0
    %4258 = vmatmul.mubr.f32.gmra.mrb[0].mxu0 %v4190
    %v4259 = vpop.f32.mrb[0].mxu0
    %v4260 = vadd.f32 0.0, %v4259
    %v4261 = vpop.f32.mrb[0].mxu0
    %v4262 = vadd.f32 0.0, %v4261
    %4263 = vdwg.mxu0
    %4264 = vmatprep.subr.mxu0 %v3980
    %4265 = vmatpush1.msra.mxu0 %v3979
    %4266 = vmatprep.subr.mxu0 %v3982
    %4267 = vmatpush1.msra.mxu0 %v3981
    %4268 = vmatprep.subr.mxu0 %v3984
    %4269 = vmatpush1.msra.mxu0 %v3983
    %4270 = vmatprep.subr.mxu0 %v3986
    %4271 = vmatpush1.msra.mxu0 %v3985
    %4272 = vmatprep.subr.mxu0 %v3988
    %4273 = vmatpush1.msra.mxu0 %v3987
    %4274 = vmatprep.subr.mxu0 %v3990
    %4275 = vmatpush1.msra.mxu0 %v3989
    %4276 = vmatprep.subr.mxu0 %v3992
    %4277 = vmatpush1.msra.mxu0 %v3991
    %4278 = vmatprep.subr.mxu0 %v3994
    %4279 = vmatpush1.msra.mxu0 %v3993
    %4280 = vmatprep.subr.mxu0 %v3996
    %4281 = vmatpush1.msra.mxu0 %v3995
    %4282 = vmatprep.subr.mxu0 %v3998
    %4283 = vmatpush1.msra.mxu0 %v3997
    %4284 = vmatprep.subr.mxu0 %v4000
    %4285 = vmatpush1.msra.mxu0 %v3999
    %4286 = vmatprep.subr.mxu0 %v4002
    %4287 = vmatpush1.msra.mxu0 %v4001
    %4288 = vmatprep.subr.mxu0 %v4004
    %4289 = vmatpush1.msra.mxu0 %v4003
    %4290 = vmatprep.subr.mxu0 %v4006
    %4291 = vmatpush1.msra.mxu0 %v4005
    %4292 = vmatprep.subr.mxu0 %v4008
    %4293 = vmatpush1.msra.mxu0 %v4007
    %4294 = vmatprep.subr.mxu0 %v4010
    %4295 = vmatpush1.msra.mxu0 %v4009
    %4296 = vmatprep.subr.mxu0 0.0
    %4297 = vmatpush1.msra.mxu0 0.0
    %4298 = vmatprep.subr.mxu0 0.0
    %4299 = vmatpush1.msra.mxu0 0.0
    %4300 = vmatprep.subr.mxu0 0.0
    %4301 = vmatpush1.msra.mxu0 0.0
    %4302 = vmatprep.subr.mxu0 0.0
    %4303 = vmatpush1.msra.mxu0 0.0
    %4304 = vmatprep.subr.mxu0 0.0
    %4305 = vmatpush1.msra.mxu0 0.0
    %4306 = vmatprep.subr.mxu0 0.0
    %4307 = vmatpush1.msra.mxu0 0.0
    %4308 = vmatprep.subr.mxu0 0.0
    %4309 = vmatpush1.msra.mxu0 0.0
    %4310 = vmatprep.subr.mxu0 0.0
    %4311 = vmatpush1.msra.mxu0 0.0
    %4312 = vmatprep.subr.mxu0 0.0
    %4313 = vmatpush1.msra.mxu0 0.0
    %4314 = vmatprep.subr.mxu0 0.0
    %4315 = vmatpush1.msra.mxu0 0.0
    %4316 = vmatprep.subr.mxu0 0.0
    %4317 = vmatpush1.msra.mxu0 0.0
    %4318 = vmatprep.subr.mxu0 0.0
    %4319 = vmatpush1.msra.mxu0 0.0
    %4320 = vmatprep.subr.mxu0 0.0
    %4321 = vmatpush1.msra.mxu0 0.0
    %4322 = vmatprep.subr.mxu0 0.0
    %4323 = vmatpush1.msra.mxu0 0.0
    %4324 = vmatprep.subr.mxu0 0.0
    %4325 = vmatpush1.msra.mxu0 0.0
    %4326 = vmatprep.subr.mxu0 0.0
    %4327 = vmatpush1.msra.mxu0 0.0
    %4328 = vmatprep.mubr.f32.mxu0 0.0
    %4329 = vmatmul.mubr.f32.gmra.mrb[0].mxu0 %v4192
    %v4330 = vpop.f32.mrb[0].mxu0
    %v4331 = vadd.f32 0.0, %v4330
    %v4332 = vpop.f32.mrb[0].mxu0
    %v4333 = vadd.f32 0.0, %v4332
    %4334 = vdwg.mxu0
    %v4335 = vlaneseq
    %v4336 = vshrl.u32 %v4335, 7
    %v4337 = vsub.s32 0, %v4336
    %v4338 = vrot.slane %v4260, %v4337
    %v4339 = vlaneseq
    %v4340 = vshrl.u32 %v4339, 7
    %v4341 = vsub.s32 0, %v4340
    %v4342 = vrot.slane %v4262, %v4341
    %v4343 = vmul.f32 %v3941, %v4338
    %v4344 = vmul.f32 %v3943, %v4342
    %v4345 = vlaneseq
    %v4346 = vshrl.u32 %v4345, 7
    %v4347 = vsub.s32 0, %v4346
    %v4348 = vrot.slane %v4331, %v4347
    %v4349 = vlaneseq
    %v4350 = vshrl.u32 %v4349, 7
    %v4351 = vsub.s32 0, %v4350
    %v4352 = vrot.slane %v4333, %v4351
    %v4353 = vadd.f32 %v4343, %v4348
    %v4354 = vadd.f32 %v4344, %v4352
    %v4355 = vmul.f32 %v4353, 0.2
    %v4356 = vmul.f32 %v4354, 0.2
    %v4357 = vmax.f32 %v4353, %v4355
    %v4358 = vmax.f32 %v4354, %v4356
    %v4359 = vld [vmem:[%s67] sm:$0xf]
    %v4360 = vld [vmem:[%s67 + $0x4] sm:$0xf]
    %v4361 = vld [vmem:[%s67 + $0x8] sm:$0xf]
    %v4362 = vld [vmem:[%s67 + $0xc] sm:$0xf]
    %v4363 = vld [vmem:[%s67 + $0x10] sm:$0xf]
    %v4364 = vld [vmem:[%s67 + $0x14] sm:$0xf]
    %v4365 = vld [vmem:[%s67 + $0x18] sm:$0xf]
    %v4366 = vld [vmem:[%s67 + $0x1c] sm:$0xf]
    %v4367 = vld [vmem:[%s67 + $0x20] sm:$0xf]
    %v4368 = vld [vmem:[%s67 + $0x24] sm:$0xf]
    %v4369 = vld [vmem:[%s67 + $0x28] sm:$0xf]
    %v4370 = vld [vmem:[%s67 + $0x2c] sm:$0xf]
    %v4371 = vld [vmem:[%s67 + $0x30] sm:$0xf]
    %v4372 = vld [vmem:[%s67 + $0x34] sm:$0xf]
    %v4373 = vld [vmem:[%s67 + $0x38] sm:$0xf]
    %v4374 = vld [vmem:[%s67 + $0x3c] sm:$0xf]
    %v4375 = vld [vmem:[%s67 + $0x40] sm:$0xf]
    %v4376 = vld [vmem:[%s67 + $0x44] sm:$0xf]
    %v4377 = vld [vmem:[%s67 + $0x48] sm:$0xf]
    %v4378 = vld [vmem:[%s67 + $0x4c] sm:$0xf]
    %v4379 = vld [vmem:[%s67 + $0x50] sm:$0xf]
    %v4380 = vld [vmem:[%s67 + $0x54] sm:$0xf]
    %v4381 = vld [vmem:[%s67 + $0x58] sm:$0xf]
    %v4382 = vld [vmem:[%s67 + $0x5c] sm:$0xf]
    %v4383 = vld [vmem:[%s67 + $0x60] sm:$0xf]
    %v4384 = vld [vmem:[%s67 + $0x64] sm:$0xf]
    %v4385 = vld [vmem:[%s67 + $0x68] sm:$0xf]
    %v4386 = vld [vmem:[%s67 + $0x6c] sm:$0xf]
    %v4387 = vld [vmem:[%s67 + $0x70] sm:$0xf]
    %v4388 = vld [vmem:[%s67 + $0x74] sm:$0xf]
    %v4389 = vld [vmem:[%s67 + $0x78] sm:$0xf]
    %v4390 = vld [vmem:[%s67 + $0x7c] sm:$0xf]
    %v4391 = vpack.c.bf16 %v4357, %v4357
    %v4392 = vpack.c.bf16 %v4358, %v4358
    %v4393 = vld [vmem:[#allocation2] sm:$0x1]
    %v4395 = vlaneseq
    %v4396 = vshrl.u32 %v4395, 7
    %v4397 = vsub.s32 0, %v4396
    %v4398 = vrot.slane %v4393, %v4397
    %v4432 = vunpack.c.l.b16 %v4359
    %v4433 = vunpack.c.l.b16 %v4360
    %v4434 = vunpack.c.l.b16 %v4361
    %v4435 = vunpack.c.l.b16 %v4362
    %v4436 = vunpack.c.l.b16 %v4363
    %v4437 = vunpack.c.l.b16 %v4364
    %v4438 = vunpack.c.l.b16 %v4365
    %v4439 = vunpack.c.l.b16 %v4366
    %v4440 = vunpack.c.l.b16 %v4367
    %v4441 = vunpack.c.l.b16 %v4368
    %v4442 = vunpack.c.l.b16 %v4369
    %v4443 = vunpack.c.l.b16 %v4370
    %v4444 = vunpack.c.l.b16 %v4371
    %v4445 = vunpack.c.l.b16 %v4372
    %v4446 = vunpack.c.l.b16 %v4373
    %v4447 = vunpack.c.l.b16 %v4374
    %v4448 = vunpack.c.l.b16 %v4375
    %v4449 = vunpack.c.l.b16 %v4376
    %v4450 = vunpack.c.l.b16 %v4377
    %v4451 = vunpack.c.l.b16 %v4378
    %v4452 = vunpack.c.l.b16 %v4379
    %v4453 = vunpack.c.l.b16 %v4380
    %v4454 = vunpack.c.l.b16 %v4381
    %v4455 = vunpack.c.l.b16 %v4382
    %v4456 = vunpack.c.l.b16 %v4383
    %v4457 = vunpack.c.l.b16 %v4384
    %v4458 = vunpack.c.l.b16 %v4385
    %v4459 = vunpack.c.l.b16 %v4386
    %v4460 = vunpack.c.l.b16 %v4387
    %v4461 = vunpack.c.l.b16 %v4388
    %v4462 = vunpack.c.l.b16 %v4389
    %v4463 = vunpack.c.l.b16 %v4390
    %v4464 = vpack.c.b16 %v4433, %v4432
    %v4465 = vpack.c.b16 %v4435, %v4434
    %v4466 = vpack.c.b16 %v4437, %v4436
    %v4467 = vpack.c.b16 %v4439, %v4438
    %v4468 = vpack.c.b16 %v4441, %v4440
    %v4469 = vpack.c.b16 %v4443, %v4442
    %v4470 = vpack.c.b16 %v4445, %v4444
    %v4471 = vpack.c.b16 %v4447, %v4446
    %v4472 = vpack.c.b16 %v4449, %v4448
    %v4473 = vpack.c.b16 %v4451, %v4450
    %v4474 = vpack.c.b16 %v4453, %v4452
    %v4475 = vpack.c.b16 %v4455, %v4454
    %v4476 = vpack.c.b16 %v4457, %v4456
    %v4477 = vpack.c.b16 %v4459, %v4458
    %v4478 = vpack.c.b16 %v4461, %v4460
    %v4479 = vpack.c.b16 %v4463, %v4462
    %4496 = vmatprep.subr.bf16.mxu0 0
    %4497 = vmatpush1.bf16.msra.mxu0 %v4464
    %4498 = vmatprep.subr.bf16.mxu0 0
    %4499 = vmatpush1.bf16.msra.mxu0 %v4465
    %4500 = vmatprep.subr.bf16.mxu0 0
    %4501 = vmatpush1.bf16.msra.mxu0 %v4466
    %4502 = vmatprep.subr.bf16.mxu0 0
    %4503 = vmatpush1.bf16.msra.mxu0 %v4467
    %4504 = vmatprep.subr.bf16.mxu0 0
    %4505 = vmatpush1.bf16.msra.mxu0 %v4468
    %4506 = vmatprep.subr.bf16.mxu0 0
    %4507 = vmatpush1.bf16.msra.mxu0 %v4469
    %4508 = vmatprep.subr.bf16.mxu0 0
    %4509 = vmatpush1.bf16.msra.mxu0 %v4470
    %4510 = vmatprep.subr.bf16.mxu0 0
    %4511 = vmatpush1.bf16.msra.mxu0 %v4471
    %4512 = vmatprep.subr.bf16.mxu0 0
    %4513 = vmatpush1.bf16.msra.mxu0 %v4472
    %4514 = vmatprep.subr.bf16.mxu0 0
    %4515 = vmatpush1.bf16.msra.mxu0 %v4473
    %4516 = vmatprep.subr.bf16.mxu0 0
    %4517 = vmatpush1.bf16.msra.mxu0 %v4474
    %4518 = vmatprep.subr.bf16.mxu0 0
    %4519 = vmatpush1.bf16.msra.mxu0 %v4475
    %4520 = vmatprep.subr.bf16.mxu0 0
    %4521 = vmatpush1.bf16.msra.mxu0 %v4476
    %4522 = vmatprep.subr.bf16.mxu0 0
    %4523 = vmatpush1.bf16.msra.mxu0 %v4477
    %4524 = vmatprep.subr.bf16.mxu0 0
    %4525 = vmatpush1.bf16.msra.mxu0 %v4478
    %4526 = vmatprep.subr.bf16.mxu0 0
    %4527 = vmatpush1.bf16.msra.mxu0 %v4479
    %4528 = vmatprep.mubr.bf16.mxu0 %v4392
    %4529 = vmatmul.mubr.bf16.gmra.mrb[0].mxu0 %v4391
    %v4530 = vpop.f32.mrb[0].mxu0
    %v4531 = vadd.f32 %v4398, %v4530
    %v4532 = vpop.f32.mrb[0].mxu0
    %v4533 = vpop.f32.mrb[0].mxu0
    %v4534 = vpop.f32.mrb[0].mxu0
    %4535 = vdwg.mxu0
    %v4536 = vxor.u32 %v4531, 2147483648
    %v4537 = vmul.f32 %v4536, 1.442695
    %v4538 = vpow.pop %v4537
    %v4539 = vadd.f32 %v4538, 1.0
    %v4540 = vrcp.pop %v4539
    %v4541 = vmul.f32 1.0, %v4540
    %vm4542 = vcmask 1024
    %4543 = vst.msk [vmem:[%s71] sm:$0x3] %vm4542, %v4541
    // Predicated region
    $region182: #{tpu_custom_call.1} parent=1 // pred_check
      _
    $region183: #{tpu_custom_call.1} parent=1 // pred_check_branch
      %4545 = sbr.rel (0) target = $region185
    $region184: #{tpu_custom_call.1} parent=1 // pred_region
      _
    $region185: #{tpu_custom_call.1} parent=1 // pred_fallthru
      _
    // Predicated region
    $region186: #{tpu_custom_call.1} parent=1 // pred_check
      _
    $region187: #{tpu_custom_call.1} parent=1 // pred_check_branch
      %4547 = sbr.rel (0) target = $region189
    $region188: #{tpu_custom_call.1} parent=1 // pred_region
      _
    $region189: #{tpu_custom_call.1} parent=1 // pred_fallthru
      _
    %4548 = vsyncpa [#allocation4], 1
    %4549 = vsyncpa [#allocation6], 1
    %4550 = vsyncpa [#allocation9], 1
    %4551 = vsyncpa [#allocation12], 1
    %4552 = vsyncpa [#allocation15], 1
    %4553 = vsyncpa [#allocation18], 1

</llo_original>
